<compile_context>
chip_gen: v7x
topology: tpu7x:2x2x1
jax: 0.10.0
libtpu: 0.0.40
codegen_flags: <defaults>
</compile_context>

<pallas_src>
import functools

import jax
import jax.numpy as jnp
from jax.experimental import pallas as pl
from jax.experimental.pallas import tpu as pltpu


# ----------------------------------------------------------------------------
# In-kernel helpers
# ----------------------------------------------------------------------------
def _layer_norm(x, gamma, beta, eps=1e-5):
    # PyTorch LayerNorm: biased variance, eps inside rsqrt, all in f32.
    mu = jnp.mean(x, axis=-1, keepdims=True)
    var = jnp.mean((x - mu) ** 2, axis=-1, keepdims=True)
    return (x - mu) * jax.lax.rsqrt(var + eps) * gamma + beta


def _mm(a, w_bf16):
    # bf16 MXU inputs, f32 accumulation (astype is a no-op if `a` is already bf16).
    return jnp.dot(a.astype(jnp.bfloat16), w_bf16,
                   preferred_element_type=jnp.float32)


# ----------------------------------------------------------------------------
# Fused kernel.  grid = (B // Bb, L):
#   axis 0 ("parallel")  : block of Bb batch elements
#   axis 1 ("arbitrary") : encoder layer (weights streamed, residual carried in VMEM scratch)
# ----------------------------------------------------------------------------
def _fused_kernel(n_heads, n_layers,
                  x_ref,
                  wc_ref, wp_ref, bp_ref, pwp_ref, bc_ref,
                  wq_ref, bq_ref, wk_ref, bk_ref, wv_ref, bv_ref, wo_ref, bo_ref,
                  g1_ref, be1_ref,
                  f1w1_ref, f1b1_ref, f1w2_ref, f1b2_ref,
                  g2_ref, be2_ref,
                  f2w1_ref, f2b1_ref, f2w2_ref, f2b2_ref,
                  g3_ref, be3_ref,
                  hw1_ref, hb1_ref, hw2_ref, hb2_ref,
                  o_ref, h_ref):
    Bb, S, In = x_ref.shape
    D = h_ref.shape[-1]
    H = n_heads
    hd = D // H
    R = Bb * S
    N = Bb * H
    scale = 1.0 / float(hd) ** 0.5
    l = pl.program_id(1)

    # --- layer step 0: Time2Vec + projection (v0 branch pre-folded into wc/bc) ---
    @pl.when(l == 0)
    def _():
        xb = x_ref[...].reshape(R, In).astype(jnp.bfloat16)
        vp = jnp.sin(_mm(xb, wp_ref[...]) + bp_ref[...])               # (R, k-1) f32
        h_ref[...] = _mm(xb, wc_ref[...]) + _mm(vp, pwp_ref[...]) + bc_ref[...]

    h = h_ref[...]                                                     # (R, D) f32 residual
    hb = h.astype(jnp.bfloat16)                                        # single bf16 pack

    # --- encoder layer `l` (this layer's weights streamed into VMEM) -------------
    # multi-head self-attention, scale folded into q (includes bias, as in PyTorch)
    q = (_mm(hb, wq_ref[0]) + bq_ref[0]) * scale                       # (R, D)
    k = _mm(hb, wk_ref[0]) + bk_ref[0]
    v = _mm(hb, wv_ref[0]) + bv_ref[0]

    def heads(t):                                                      # (R,D) -> (Bb*H, S, hd)
        t = t.astype(jnp.bfloat16).reshape(Bb, S, H, hd)
        return jnp.transpose(t, (0, 2, 1, 3)).reshape(N, S, hd)

    qh, kh, vh = heads(q), heads(k), heads(v)
    s = jnp.einsum('nqd,nkd->nqk', qh, kh,
                   preferred_element_type=jnp.float32)                 # (N, S, S) f32
    s = s - jnp.max(s, axis=-1, keepdims=True)
    p = jnp.exp(s)
    p = p * pl.reciprocal(jnp.sum(p, axis=-1, keepdims=True), approx=True)

    ctx = jnp.einsum('nqk,nkd->nqd', p.astype(jnp.bfloat16), vh,
                     preferred_element_type=jnp.float32)               # (N, S, hd)
    ctx = jnp.transpose(ctx.reshape(Bb, H, S, hd), (0, 2, 1, 3)).reshape(R, D)
    attn = _mm(ctx, wo_ref[0]) + bo_ref[0]                             # (R, D)
    h = _layer_norm(h + attn, g1_ref[0], be1_ref[0])

    # feed-forward 1
    hb = h.astype(jnp.bfloat16)
    h1 = jnp.maximum(_mm(hb, f1w1_ref[0]) + f1b1_ref[0], 0.0)          # (R, d_ff)
    h = _layer_norm(h + _mm(h1, f1w2_ref[0]) + f1b2_ref[0],
                    g2_ref[0], be2_ref[0])

    # feed-forward 2
    hb = h.astype(jnp.bfloat16)
    h2 = jnp.maximum(_mm(hb, f2w1_ref[0]) + f2b1_ref[0], 0.0)          # (R, d_ff)
    h = _layer_norm(h + _mm(h2, f2w2_ref[0]) + f2b2_ref[0],
                    g3_ref[0], be3_ref[0])

    h_ref[...] = h                                                     # carry to next layer step

    # --- last layer step: global average pool over sequence + prediction head ----
    @pl.when(l == n_layers - 1)
    def _():
        pooled = jnp.mean(h.reshape(Bb, S, D), axis=1)                 # (Bb, D)
        hh = jnp.maximum(_mm(pooled, hw1_ref[...]) + hb1_ref[...], 0.0)
        out = _mm(hh, hw2_ref[...]) + hb2_ref[...]                     # (Bb, F)
        o_ref[...] = out.reshape(o_ref.shape).astype(o_ref.dtype)


# ----------------------------------------------------------------------------
# Wrapper
# ----------------------------------------------------------------------------
_LAYER_KEYS = ('wq_t', 'bq', 'wk_t', 'bk', 'wv_t', 'bv', 'wo_t', 'bo',
               'ln1_g', 'ln1_b',
               'f1w1_t', 'f1b1', 'f1w2_t', 'f1b2',
               'ln2_g', 'ln2_b',
               'f2w1_t', 'f2b1', 'f2w2_t', 'f2b2',
               'ln3_g', 'ln3_b')


def _nbytes(a):
    return int(a.size) * jnp.dtype(a.dtype).itemsize


def _pick_block_batch(B, S, target_rows=512):
    """Largest divisor of B with Bb*S <= target_rows (block-batch heuristic)."""
    best = 1
    for bb in range(1, B + 1):
        if B % bb == 0 and bb * S <= max(target_rows, S):
            best = bb
    return best


def swt_transformer_core_forward(x, params, *, n_heads, forecast_steps,
                                 block_batch=None):
    B, S, In = x.shape
    L = params['L_wq_t'].shape[0]
    D = params['t2v_b_comb'].shape[-1]
    d_ff = params['L_f1b1'].shape[-1]
    F = forecast_steps

    Bb = block_batch if block_batch is not None else _pick_block_batch(B, S)
    assert B % Bb == 0
    nb = B // Bb

    const_weights = [params['t2v_w_comb'], params['t2v_wp_t'], params['t2v_bp'],
                     params['t2v_pwp_t'], params['t2v_b_comb']]
    layer_weights = [params['L_' + k] for k in _LAYER_KEYS]
    head_weights = [params['hw1_t'], params['hb1'], params['hw2_t'], params['hb2']]

    def const_map(ndim):
        zeros = (0,) * ndim
        return lambda b, l: zeros

    def layer_map(ndim):
        zeros = (0,) * (ndim - 1)
        return lambda b, l: (l,) + zeros

    in_specs = ([pl.BlockSpec((Bb, S, In), lambda b, l: (b, 0, 0))]
                + [pl.BlockSpec(w.shape, const_map(w.ndim)) for w in const_weights]
                + [pl.BlockSpec((1,) + w.shape[1:], layer_map(w.ndim))
                   for w in layer_weights]
                + [pl.BlockSpec(w.shape, const_map(w.ndim)) for w in head_weights])
    out_spec = pl.BlockSpec((1, Bb, F), lambda b, l: (b, 0, 0))

    # [perf] explicit scoped-VMEM budget: 2x (double-buffered) streamed layer weights
    # + constant weights + x/out blocks + residual scratch + activation estimate.
    per_layer_bytes = sum(_nbytes(w) for w in layer_weights) // L
    const_bytes = sum(_nbytes(w) for w in const_weights + head_weights)
    rows = Bb * S
    act_bytes = 4 * rows * (8 * D + 2 * d_ff) + 4 * Bb * n_heads * S * S * 3
    need = (2 * per_layer_bytes + 2 * const_bytes
            + 2 * Bb * S * In * 4 + 2 * Bb * F * 4
            + rows * D * 4 + act_bytes + (4 << 20))
    vmem_limit = int(min(max(need, 32 << 20), 128 << 20))

    kernel = functools.partial(_fused_kernel, n_heads, L)
    out = pl.pallas_call(
        kernel,
        out_shape=jax.ShapeDtypeStruct((nb, Bb, F), jnp.float32),
        grid=(nb, L),
        in_specs=in_specs,
        out_specs=out_spec,
        scratch_shapes=[pltpu.VMEM((rows, D), jnp.float32)],
        compiler_params=pltpu.CompilerParams(
            dimension_semantics=("parallel", "arbitrary"),
            vmem_limit_bytes=vmem_limit),
    )(x, *const_weights, *layer_weights, *head_weights)
    return out.reshape(B, F).reshape(B, F, 1)


# ----------------------------------------------------------------------------
# Deterministic parameter init (synthetic; mirrors the shapes in __init__).
# Linear weights are stored pre-transposed (in_features, out_features); matmul
# weights are pre-cast to bf16; biases / LN params stay f32.  Per-layer weights
# are stacked along a leading layer axis for streaming.
# ----------------------------------------------------------------------------
def init_params(key, *, input_size, time2vec_k, d_model, n_heads, d_ff,
                n_enc_layers, forecast_steps):
    assert d_model % n_heads == 0
    keys = iter(jax.random.split(key, 1024))

    def lin(out_f, in_f):
        w = jax.random.normal(next(keys), (out_f, in_f), jnp.float32) / (in_f ** 0.5)
        b = jax.random.normal(next(keys), (1, out_f), jnp.float32) * 0.01
        return w, b

    p = {}

    # --- Time2Vec + proj, with the K=1 (linear) branch folded into a combined weight
    w0, b0 = lin(1, input_size)                   # (1, In), (1, 1)
    wp, bp = lin(time2vec_k - 1, input_size)      # (k-1, In), (1, k-1)
    proj_w, proj_b = lin(d_model, time2vec_k)     # (D, k), (1, D)
    pw0 = proj_w[:, :1]                           # column hit by v0
    pwp = proj_w[:, 1:]                           # columns hit by sin part
    p['t2v_w_comb'] = (w0.T @ pw0.T).astype(jnp.bfloat16)   # (In, D)
    p['t2v_b_comb'] = proj_b + b0 @ pw0.T                   # (1, D)  f32
    p['t2v_wp_t'] = wp.T.astype(jnp.bfloat16)                # (In, k-1)
    p['t2v_bp'] = bp                                         # (1, k-1) f32
    p['t2v_pwp_t'] = pwp.T.astype(jnp.bfloat16)              # (k-1, D)

    # --- Encoder layers: build per-layer, then stack along a leading layer axis --
    def ln_pair():
        return (jnp.ones((1, d_model), jnp.float32),
                jnp.zeros((1, d_model), jnp.float32))

    layer_list = []
    for _ in range(n_enc_layers):
        lp = {}
        w, lp['bq'] = lin(d_model, d_model); lp['wq_t'] = w.T
        w, lp['bk'] = lin(d_model, d_model); lp['wk_t'] = w.T
        w, lp['bv'] = lin(d_model, d_model); lp['wv_t'] = w.T
        w, lp['bo'] = lin(d_model, d_model); lp['wo_t'] = w.T
        lp['ln1_g'], lp['ln1_b'] = ln_pair()
        w, lp['f1b1'] = lin(d_ff, d_model); lp['f1w1_t'] = w.T
        w, lp['f1b2'] = lin(d_model, d_ff); lp['f1w2_t'] = w.T
        lp['ln2_g'], lp['ln2_b'] = ln_pair()
        w, lp['f2b1'] = lin(d_ff, d_model); lp['f2w1_t'] = w.T
        w, lp['f2b2'] = lin(d_model, d_ff); lp['f2w2_t'] = w.T
        lp['ln3_g'], lp['ln3_b'] = ln_pair()
        layer_list.append(lp)

    matmul_keys = {'wq_t', 'wk_t', 'wv_t', 'wo_t',
                   'f1w1_t', 'f1w2_t', 'f2w1_t', 'f2w2_t'}
    for k_ in _LAYER_KEYS:
        stacked = jnp.stack([lp[k_] for lp in layer_list], axis=0)
        if k_ in matmul_keys:
            stacked = stacked.astype(jnp.bfloat16)
        p['L_' + k_] = stacked

    # --- head ---------------------------------------------------------------------
    w, p['hb1'] = lin(d_model, d_model)
    p['hw1_t'] = w.T.astype(jnp.bfloat16)
    w, p['hb2'] = lin(forecast_steps, d_model)
    p['hw2_t'] = w.T.astype(jnp.bfloat16)
    return p


# ----------------------------------------------------------------------------
if __name__ == "__main__":
    # Small config consistent with the module's constructor signature.
    B, S = 2, 8
    input_size = 4
    time2vec_k = 8
    d_model = 32
    n_heads = 4
    d_ff = 64
    n_enc_layers = 2
    n_dec_layers = 1          # unused by forward()
    forecast_steps = 4
    output_bands = 1          # unused by forward()

    key = jax.random.PRNGKey(0)
    kx, kp = jax.random.split(key)
    x = jax.random.normal(kx, (B, S, input_size), jnp.float32)
    params = init_params(kp, input_size=input_size, time2vec_k=time2vec_k,
                         d_model=d_model, n_heads=n_heads, d_ff=d_ff,
                         n_enc_layers=n_enc_layers, forecast_steps=forecast_steps)

    out = swt_transformer_core_forward(x, params, n_heads=n_heads,
                                       forecast_steps=forecast_steps)
    out = jax.block_until_ready(out)

    assert out.shape == (B, forecast_steps, 1), out.shape
    assert bool(jnp.all(jnp.isfinite(out)))
    print("KERNEL_OK")
</pallas_src>

<mosaic_0001>
module attributes {stable_mosaic.version = 11 : i64} {
  func.func @_fused_kernel(%arg0: i32, %arg1: i32, %arg2: memref<2x8x4xf32, #tpu.memory_space<vmem>>, %arg3: memref<4x32xbf16, #tpu.memory_space<vmem>>, %arg4: memref<4x7xbf16, #tpu.memory_space<vmem>>, %arg5: memref<1x7xf32, #tpu.memory_space<vmem>>, %arg6: memref<7x32xbf16, #tpu.memory_space<vmem>>, %arg7: memref<1x32xf32, #tpu.memory_space<vmem>>, %arg8: memref<1x32x32xbf16, #tpu.memory_space<vmem>>, %arg9: memref<1x1x32xf32, #tpu.memory_space<vmem>>, %arg10: memref<1x32x32xbf16, #tpu.memory_space<vmem>>, %arg11: memref<1x1x32xf32, #tpu.memory_space<vmem>>, %arg12: memref<1x32x32xbf16, #tpu.memory_space<vmem>>, %arg13: memref<1x1x32xf32, #tpu.memory_space<vmem>>, %arg14: memref<1x32x32xbf16, #tpu.memory_space<vmem>>, %arg15: memref<1x1x32xf32, #tpu.memory_space<vmem>>, %arg16: memref<1x1x32xf32, #tpu.memory_space<vmem>>, %arg17: memref<1x1x32xf32, #tpu.memory_space<vmem>>, %arg18: memref<1x32x64xbf16, #tpu.memory_space<vmem>>, %arg19: memref<1x1x64xf32, #tpu.memory_space<vmem>>, %arg20: memref<1x64x32xbf16, #tpu.memory_space<vmem>>, %arg21: memref<1x1x32xf32, #tpu.memory_space<vmem>>, %arg22: memref<1x1x32xf32, #tpu.memory_space<vmem>>, %arg23: memref<1x1x32xf32, #tpu.memory_space<vmem>>, %arg24: memref<1x32x64xbf16, #tpu.memory_space<vmem>>, %arg25: memref<1x1x64xf32, #tpu.memory_space<vmem>>, %arg26: memref<1x64x32xbf16, #tpu.memory_space<vmem>>, %arg27: memref<1x1x32xf32, #tpu.memory_space<vmem>>, %arg28: memref<1x1x32xf32, #tpu.memory_space<vmem>>, %arg29: memref<1x1x32xf32, #tpu.memory_space<vmem>>, %arg30: memref<32x32xbf16, #tpu.memory_space<vmem>>, %arg31: memref<1x32xf32, #tpu.memory_space<vmem>>, %arg32: memref<32x4xbf16, #tpu.memory_space<vmem>>, %arg33: memref<1x4xf32, #tpu.memory_space<vmem>>, %arg34: memref<1x2x4xf32, #tpu.memory_space<vmem>>, %arg35: memref<16x32xf32, #tpu.memory_space<vmem>>) attributes {dimension_semantics = [#tpu.dimension_semantics<parallel>, #tpu.dimension_semantics<arbitrary>], iteration_bounds = array<i64: 1, 2>, scalar_prefetch = 0 : i64, scratch_operands = 1 : i64, tpu.core_type = #tpu.core_type<tc>, window_params = [{transform_indices = @transform_0, window_bounds = array<i64: 2, 8, 4>}, {pipeline_mode = #tpu.pipeline_mode<synchronous>, transform_indices = @transform_1, window_bounds = array<i64: 4, 32>}, {pipeline_mode = #tpu.pipeline_mode<synchronous>, transform_indices = @transform_2, window_bounds = array<i64: 4, 7>}, {pipeline_mode = #tpu.pipeline_mode<synchronous>, transform_indices = @transform_3, window_bounds = array<i64: 1, 7>}, {pipeline_mode = #tpu.pipeline_mode<synchronous>, transform_indices = @transform_4, window_bounds = array<i64: 7, 32>}, {pipeline_mode = #tpu.pipeline_mode<synchronous>, transform_indices = @transform_5, window_bounds = array<i64: 1, 32>}, {transform_indices = @transform_6, window_bounds = array<i64: 1, 32, 32>}, {transform_indices = @transform_7, window_bounds = array<i64: 1, 1, 32>}, {transform_indices = @transform_8, window_bounds = array<i64: 1, 32, 32>}, {transform_indices = @transform_9, window_bounds = array<i64: 1, 1, 32>}, {transform_indices = @transform_10, window_bounds = array<i64: 1, 32, 32>}, {transform_indices = @transform_11, window_bounds = array<i64: 1, 1, 32>}, {transform_indices = @transform_12, window_bounds = array<i64: 1, 32, 32>}, {transform_indices = @transform_13, window_bounds = array<i64: 1, 1, 32>}, {transform_indices = @transform_14, window_bounds = array<i64: 1, 1, 32>}, {transform_indices = @transform_15, window_bounds = array<i64: 1, 1, 32>}, {transform_indices = @transform_16, window_bounds = array<i64: 1, 32, 64>}, {transform_indices = @transform_17, window_bounds = array<i64: 1, 1, 64>}, {transform_indices = @transform_18, window_bounds = array<i64: 1, 64, 32>}, {transform_indices = @transform_19, window_bounds = array<i64: 1, 1, 32>}, {transform_indices = @transform_20, window_bounds = array<i64: 1, 1, 32>}, {transform_indices = @transform_21, window_bounds = array<i64: 1, 1, 32>}, {transform_indices = @transform_22, window_bounds = array<i64: 1, 32, 64>}, {transform_indices = @transform_23, window_bounds = array<i64: 1, 1, 64>}, {transform_indices = @transform_24, window_bounds = array<i64: 1, 64, 32>}, {transform_indices = @transform_25, window_bounds = array<i64: 1, 1, 32>}, {transform_indices = @transform_26, window_bounds = array<i64: 1, 1, 32>}, {transform_indices = @transform_27, window_bounds = array<i64: 1, 1, 32>}, {pipeline_mode = #tpu.pipeline_mode<synchronous>, transform_indices = @transform_28, window_bounds = array<i64: 32, 32>}, {pipeline_mode = #tpu.pipeline_mode<synchronous>, transform_indices = @transform_29, window_bounds = array<i64: 1, 32>}, {pipeline_mode = #tpu.pipeline_mode<synchronous>, transform_indices = @transform_30, window_bounds = array<i64: 32, 4>}, {pipeline_mode = #tpu.pipeline_mode<synchronous>, transform_indices = @transform_31, window_bounds = array<i64: 1, 4>}, {transform_indices = @transform_32, window_bounds = array<i64: 1, 2, 4>}]} {
    %c0_i32 = arith.constant 0 : i32
    %0 = arith.cmpi eq, %arg1, %c0_i32 : i32
    %1 = arith.extui %0 : i1 to i32
    %c0_i32_0 = arith.constant 0 : i32
    %2 = arith.cmpi ne, %1, %c0_i32_0 : i32
    scf.if %2 {
      %c0_100 = arith.constant 0 : index
      %c0_101 = arith.constant 0 : index
      %c0_102 = arith.constant 0 : index
      %185 = vector.load %arg2[%c0_100, %c0_101, %c0_102] : memref<2x8x4xf32, #tpu.memory_space<vmem>>, vector<2x8x4xf32>
      %186 = vector.shape_cast %185 : vector<2x8x4xf32> to vector<16x4xf32>
      %187 = arith.truncf %186 : vector<16x4xf32> to vector<16x4xbf16>
      %c0_103 = arith.constant 0 : index
      %c0_104 = arith.constant 0 : index
      %188 = vector.load %arg4[%c0_103, %c0_104] : memref<4x7xbf16, #tpu.memory_space<vmem>>, vector<4x7xbf16>
      %cst_105 = arith.constant dense<0.000000e+00> : vector<16x7xf32>
      %189 = tpu.matmul %187, %188, %cst_105 {dimension_numbers = #tpu.dot_dimension_numbers<[1], [0], [0], [1], [0, 0, 1, 1], [], []>} : vector<16x4xbf16>, vector<4x7xbf16>, vector<16x7xf32> -> vector<16x7xf32>
      %c0_106 = arith.constant 0 : index
      %c0_107 = arith.constant 0 : index
      %190 = vector.load %arg5[%c0_106, %c0_107] : memref<1x7xf32, #tpu.memory_space<vmem>>, vector<1x7xf32>
      %191 = vector.broadcast %190 : vector<1x7xf32> to vector<16x7xf32>
      %192 = arith.addf %189, %191 : vector<16x7xf32>
      %193 = math.sin %192 : vector<16x7xf32>
      %c0_108 = arith.constant 0 : index
      %c0_109 = arith.constant 0 : index
      %194 = vector.load %arg3[%c0_108, %c0_109] : memref<4x32xbf16, #tpu.memory_space<vmem>>, vector<4x32xbf16>
      %cst_110 = arith.constant dense<0.000000e+00> : vector<16x32xf32>
      %195 = tpu.matmul %187, %194, %cst_110 {dimension_numbers = #tpu.dot_dimension_numbers<[1], [0], [0], [1], [0, 0, 1, 1], [], []>} : vector<16x4xbf16>, vector<4x32xbf16>, vector<16x32xf32> -> vector<16x32xf32>
      %c0_111 = arith.constant 0 : index
      %c0_112 = arith.constant 0 : index
      %196 = vector.load %arg6[%c0_111, %c0_112] : memref<7x32xbf16, #tpu.memory_space<vmem>>, vector<7x32xbf16>
      %197 = arith.truncf %193 : vector<16x7xf32> to vector<16x7xbf16>
      %cst_113 = arith.constant dense<0.000000e+00> : vector<16x32xf32>
      %198 = tpu.matmul %197, %196, %cst_113 {dimension_numbers = #tpu.dot_dimension_numbers<[1], [0], [0], [1], [0, 0, 1, 1], [], []>} : vector<16x7xbf16>, vector<7x32xbf16>, vector<16x32xf32> -> vector<16x32xf32>
      %199 = arith.addf %195, %198 : vector<16x32xf32>
      %c0_114 = arith.constant 0 : index
      %c0_115 = arith.constant 0 : index
      %200 = vector.load %arg7[%c0_114, %c0_115] : memref<1x32xf32, #tpu.memory_space<vmem>>, vector<1x32xf32>
      %201 = vector.broadcast %200 : vector<1x32xf32> to vector<16x32xf32>
      %202 = arith.addf %199, %201 : vector<16x32xf32>
      %c0_116 = arith.constant 0 : index
      %c0_117 = arith.constant 0 : index
      %203 = vector.load %arg35[%c0_116, %c0_117] : memref<16x32xf32, #tpu.memory_space<vmem>>, vector<16x32xf32>
      tpu.vector_store %arg35[%c0_116, %c0_117], %202 {strides = array<i32>} : memref<16x32xf32, #tpu.memory_space<vmem>>, vector<16x32xf32>,
    } else {
    }
    %c0 = arith.constant 0 : index
    %c0_1 = arith.constant 0 : index
    %3 = vector.load %arg35[%c0, %c0_1] : memref<16x32xf32, #tpu.memory_space<vmem>>, vector<16x32xf32>
    %4 = arith.truncf %3 : vector<16x32xf32> to vector<16x32xbf16>
    %c0_2 = arith.constant 0 : index
    %c0_3 = arith.constant 0 : index
    %c0_4 = arith.constant 0 : index
    %5 = vector.load %arg8[%c0_2, %c0_3, %c0_4] : memref<1x32x32xbf16, #tpu.memory_space<vmem>>, vector<1x32x32xbf16>
    %6 = vector.shape_cast %5 : vector<1x32x32xbf16> to vector<32x32xbf16>
    %cst = arith.constant dense<0.000000e+00> : vector<16x32xf32>
    %7 = tpu.matmul %4, %6, %cst {dimension_numbers = #tpu.dot_dimension_numbers<[1], [0], [0], [1], [0, 0, 1, 1], [], []>} : vector<16x32xbf16>, vector<32x32xbf16>, vector<16x32xf32> -> vector<16x32xf32>
    %c0_5 = arith.constant 0 : index
    %c0_6 = arith.constant 0 : index
    %c0_7 = arith.constant 0 : index
    %8 = vector.load %arg9[%c0_5, %c0_6, %c0_7] : memref<1x1x32xf32, #tpu.memory_space<vmem>>, vector<1x1x32xf32>
    %9 = vector.shape_cast %8 : vector<1x1x32xf32> to vector<1x32xf32>
    %10 = vector.broadcast %9 : vector<1x32xf32> to vector<16x32xf32>
    %11 = arith.addf %7, %10 : vector<16x32xf32>
    %cst_8 = arith.constant 0.353553385 : f32
    %12 = vector.broadcast %cst_8 : f32 to vector<16x32xf32>
    %13 = arith.mulf %11, %12 : vector<16x32xf32>
    %c0_9 = arith.constant 0 : index
    %c0_10 = arith.constant 0 : index
    %c0_11 = arith.constant 0 : index
    %14 = vector.load %arg10[%c0_9, %c0_10, %c0_11] : memref<1x32x32xbf16, #tpu.memory_space<vmem>>, vector<1x32x32xbf16>
    %15 = vector.shape_cast %14 : vector<1x32x32xbf16> to vector<32x32xbf16>
    %cst_12 = arith.constant dense<0.000000e+00> : vector<16x32xf32>
    %16 = tpu.matmul %4, %15, %cst_12 {dimension_numbers = #tpu.dot_dimension_numbers<[1], [0], [0], [1], [0, 0, 1, 1], [], []>} : vector<16x32xbf16>, vector<32x32xbf16>, vector<16x32xf32> -> vector<16x32xf32>
    %c0_13 = arith.constant 0 : index
    %c0_14 = arith.constant 0 : index
    %c0_15 = arith.constant 0 : index
    %17 = vector.load %arg11[%c0_13, %c0_14, %c0_15] : memref<1x1x32xf32, #tpu.memory_space<vmem>>, vector<1x1x32xf32>
    %18 = vector.shape_cast %17 : vector<1x1x32xf32> to vector<1x32xf32>
    %19 = vector.broadcast %18 : vector<1x32xf32> to vector<16x32xf32>
    %20 = arith.addf %16, %19 : vector<16x32xf32>
    %c0_16 = arith.constant 0 : index
    %c0_17 = arith.constant 0 : index
    %c0_18 = arith.constant 0 : index
    %21 = vector.load %arg12[%c0_16, %c0_17, %c0_18] : memref<1x32x32xbf16, #tpu.memory_space<vmem>>, vector<1x32x32xbf16>
    %22 = vector.shape_cast %21 : vector<1x32x32xbf16> to vector<32x32xbf16>
    %cst_19 = arith.constant dense<0.000000e+00> : vector<16x32xf32>
    %23 = tpu.matmul %4, %22, %cst_19 {dimension_numbers = #tpu.dot_dimension_numbers<[1], [0], [0], [1], [0, 0, 1, 1], [], []>} : vector<16x32xbf16>, vector<32x32xbf16>, vector<16x32xf32> -> vector<16x32xf32>
    %c0_20 = arith.constant 0 : index
    %c0_21 = arith.constant 0 : index
    %c0_22 = arith.constant 0 : index
    %24 = vector.load %arg13[%c0_20, %c0_21, %c0_22] : memref<1x1x32xf32, #tpu.memory_space<vmem>>, vector<1x1x32xf32>
    %25 = vector.shape_cast %24 : vector<1x1x32xf32> to vector<1x32xf32>
    %26 = vector.broadcast %25 : vector<1x32xf32> to vector<16x32xf32>
    %27 = arith.addf %23, %26 : vector<16x32xf32>
    %28 = arith.truncf %13 : vector<16x32xf32> to vector<16x32xbf16>
    %29 = vector.shape_cast %28 : vector<16x32xbf16> to vector<2x8x4x8xbf16>
    %30 = tpu.transpose %29, [0, 2, 1, 3] : vector<2x8x4x8xbf16> -> vector<2x4x8x8xbf16>
    %31 = vector.shape_cast %30 : vector<2x4x8x8xbf16> to vector<8x8x8xbf16>
    %32 = arith.truncf %20 : vector<16x32xf32> to vector<16x32xbf16>
    %33 = vector.shape_cast %32 : vector<16x32xbf16> to vector<2x8x4x8xbf16>
    %34 = tpu.transpose %33, [0, 2, 1, 3] : vector<2x8x4x8xbf16> -> vector<2x4x8x8xbf16>
    %35 = vector.shape_cast %34 : vector<2x4x8x8xbf16> to vector<8x8x8xbf16>
    %36 = arith.truncf %27 : vector<16x32xf32> to vector<16x32xbf16>
    %37 = vector.shape_cast %36 : vector<16x32xbf16> to vector<2x8x4x8xbf16>
    %38 = tpu.transpose %37, [0, 2, 1, 3] : vector<2x8x4x8xbf16> -> vector<2x4x8x8xbf16>
    %39 = vector.shape_cast %38 : vector<2x4x8x8xbf16> to vector<8x8x8xbf16>
    "tpu.trace_start"() <{level = 10 : i32, message = "nqd,nkd->nqk"}> : () -> ()
    %cst_23 = arith.constant dense<0.000000e+00> : vector<8x8x8xf32>
    %40 = tpu.matmul %31, %35, %cst_23 {dimension_numbers = #tpu.dot_dimension_numbers<[2], [2], [1], [1], [0, 0, 0, 1, 1, 1], [0], [0]>} : vector<8x8x8xbf16>, vector<8x8x8xbf16>, vector<8x8x8xf32> -> vector<8x8x8xf32>
    "tpu.trace_stop"() : () -> ()
    %cst_24 = arith.constant dense<0xFF800000> : vector<8x8xf32>
    %41 = vector.multi_reduction <maximumf>, %40, %cst_24 [2] : vector<8x8x8xf32> to vector<8x8xf32>
    %42 = vector.shape_cast %41 : vector<8x8xf32> to vector<8x8x1xf32>
    %43 = vector.broadcast %42 : vector<8x8x1xf32> to vector<8x8x8xf32>
    %44 = arith.subf %40, %43 : vector<8x8x8xf32>
    %45 = math.exp %44 : vector<8x8x8xf32>
    %cst_25 = arith.constant dense<0.000000e+00> : vector<8x8xf32>
    %46 = vector.multi_reduction <add>, %45, %cst_25 [2] : vector<8x8x8xf32> to vector<8x8xf32>
    %47 = vector.shape_cast %46 : vector<8x8xf32> to vector<8x8x1xf32>
    %48 = tpu.reciprocal %47 {approx = true} : vector<8x8x1xf32> -> vector<8x8x1xf32>
    %49 = vector.broadcast %48 : vector<8x8x1xf32> to vector<8x8x8xf32>
    %50 = arith.mulf %45, %49 : vector<8x8x8xf32>
    %51 = arith.truncf %50 : vector<8x8x8xf32> to vector<8x8x8xbf16>
    "tpu.trace_start"() <{level = 10 : i32, message = "nqk,nkd->nqd"}> : () -> ()
    %cst_26 = arith.constant dense<0.000000e+00> : vector<8x8x8xf32>
    %52 = tpu.matmul %51, %39, %cst_26 {dimension_numbers = #tpu.dot_dimension_numbers<[2], [1], [1], [2], [0, 0, 0, 1, 1, 2], [0], [0]>} : vector<8x8x8xbf16>, vector<8x8x8xbf16>, vector<8x8x8xf32> -> vector<8x8x8xf32>
    "tpu.trace_stop"() : () -> ()
    %53 = vector.shape_cast %52 : vector<8x8x8xf32> to vector<2x4x8x8xf32>
    %54 = tpu.transpose %53, [0, 2, 1, 3] : vector<2x4x8x8xf32> -> vector<2x8x4x8xf32>
    %55 = vector.shape_cast %54 : vector<2x8x4x8xf32> to vector<16x32xf32>
    %c0_27 = arith.constant 0 : index
    %c0_28 = arith.constant 0 : index
    %c0_29 = arith.constant 0 : index
    %56 = vector.load %arg14[%c0_27, %c0_28, %c0_29] : memref<1x32x32xbf16, #tpu.memory_space<vmem>>, vector<1x32x32xbf16>
    %57 = vector.shape_cast %56 : vector<1x32x32xbf16> to vector<32x32xbf16>
    %58 = arith.truncf %55 : vector<16x32xf32> to vector<16x32xbf16>
    %cst_30 = arith.constant dense<0.000000e+00> : vector<16x32xf32>
    %59 = tpu.matmul %58, %57, %cst_30 {dimension_numbers = #tpu.dot_dimension_numbers<[1], [0], [0], [1], [0, 0, 1, 1], [], []>} : vector<16x32xbf16>, vector<32x32xbf16>, vector<16x32xf32> -> vector<16x32xf32>
    %c0_31 = arith.constant 0 : index
    %c0_32 = arith.constant 0 : index
    %c0_33 = arith.constant 0 : index
    %60 = vector.load %arg15[%c0_31, %c0_32, %c0_33] : memref<1x1x32xf32, #tpu.memory_space<vmem>>, vector<1x1x32xf32>
    %61 = vector.shape_cast %60 : vector<1x1x32xf32> to vector<1x32xf32>
    %62 = vector.broadcast %61 : vector<1x32xf32> to vector<16x32xf32>
    %63 = arith.addf %59, %62 : vector<16x32xf32>
    %64 = arith.addf %3, %63 : vector<16x32xf32>
    %c0_34 = arith.constant 0 : index
    %c0_35 = arith.constant 0 : index
    %c0_36 = arith.constant 0 : index
    %65 = vector.load %arg16[%c0_34, %c0_35, %c0_36] : memref<1x1x32xf32, #tpu.memory_space<vmem>>, vector<1x1x32xf32>
    %66 = vector.shape_cast %65 : vector<1x1x32xf32> to vector<1x32xf32>
    %c0_37 = arith.constant 0 : index
    %c0_38 = arith.constant 0 : index
    %c0_39 = arith.constant 0 : index
    %67 = vector.load %arg17[%c0_37, %c0_38, %c0_39] : memref<1x1x32xf32, #tpu.memory_space<vmem>>, vector<1x1x32xf32>
    %68 = vector.shape_cast %67 : vector<1x1x32xf32> to vector<1x32xf32>
    %cst_40 = arith.constant dense<0.000000e+00> : vector<16xf32>
    %69 = vector.multi_reduction <add>, %64, %cst_40 [1] : vector<16x32xf32> to vector<16xf32>
    %70 = vector.shape_cast %69 : vector<16xf32> to vector<16x1xf32>
    %cst_41 = arith.constant 3.200000e+01 : f32
    %71 = vector.broadcast %cst_41 : f32 to vector<16x1xf32>
    %72 = arith.divf %70, %71 : vector<16x1xf32>
    %73 = vector.broadcast %72 : vector<16x1xf32> to vector<16x32xf32>
    %74 = arith.subf %64, %73 : vector<16x32xf32>
    %75 = arith.mulf %74, %74 : vector<16x32xf32>
    %cst_42 = arith.constant dense<0.000000e+00> : vector<16xf32>
    %76 = vector.multi_reduction <add>, %75, %cst_42 [1] : vector<16x32xf32> to vector<16xf32>
    %77 = vector.shape_cast %76 : vector<16xf32> to vector<16x1xf32>
    %cst_43 = arith.constant 3.200000e+01 : f32
    %78 = vector.broadcast %cst_43 : f32 to vector<16x1xf32>
    %79 = arith.divf %77, %78 : vector<16x1xf32>
    %80 = vector.broadcast %72 : vector<16x1xf32> to vector<16x32xf32>
    %81 = arith.subf %64, %80 : vector<16x32xf32>
    %cst_44 = arith.constant 9.99999974E-6 : f32
    %82 = vector.broadcast %cst_44 : f32 to vector<16x1xf32>
    %83 = arith.addf %79, %82 : vector<16x1xf32>
    %84 = math.rsqrt %83 : vector<16x1xf32>
    %85 = vector.broadcast %84 : vector<16x1xf32> to vector<16x32xf32>
    %86 = arith.mulf %81, %85 : vector<16x32xf32>
    %87 = vector.broadcast %66 : vector<1x32xf32> to vector<16x32xf32>
    %88 = arith.mulf %86, %87 : vector<16x32xf32>
    %89 = vector.broadcast %68 : vector<1x32xf32> to vector<16x32xf32>
    %90 = arith.addf %88, %89 : vector<16x32xf32>
    %91 = arith.truncf %90 : vector<16x32xf32> to vector<16x32xbf16>
    %c0_45 = arith.constant 0 : index
    %c0_46 = arith.constant 0 : index
    %c0_47 = arith.constant 0 : index
    %92 = vector.load %arg18[%c0_45, %c0_46, %c0_47] : memref<1x32x64xbf16, #tpu.memory_space<vmem>>, vector<1x32x64xbf16>
    %93 = vector.shape_cast %92 : vector<1x32x64xbf16> to vector<32x64xbf16>
    %cst_48 = arith.constant dense<0.000000e+00> : vector<16x64xf32>
    %94 = tpu.matmul %91, %93, %cst_48 {dimension_numbers = #tpu.dot_dimension_numbers<[1], [0], [0], [1], [0, 0, 1, 1], [], []>} : vector<16x32xbf16>, vector<32x64xbf16>, vector<16x64xf32> -> vector<16x64xf32>
    %c0_49 = arith.constant 0 : index
    %c0_50 = arith.constant 0 : index
    %c0_51 = arith.constant 0 : index
    %95 = vector.load %arg19[%c0_49, %c0_50, %c0_51] : memref<1x1x64xf32, #tpu.memory_space<vmem>>, vector<1x1x64xf32>
    %96 = vector.shape_cast %95 : vector<1x1x64xf32> to vector<1x64xf32>
    %97 = vector.broadcast %96 : vector<1x64xf32> to vector<16x64xf32>
    %98 = arith.addf %94, %97 : vector<16x64xf32>
    %cst_52 = arith.constant 0.000000e+00 : f32
    %99 = vector.broadcast %cst_52 : f32 to vector<16x64xf32>
    %100 = arith.maximumf %98, %99 : vector<16x64xf32>
    %c0_53 = arith.constant 0 : index
    %c0_54 = arith.constant 0 : index
    %c0_55 = arith.constant 0 : index
    %101 = vector.load %arg20[%c0_53, %c0_54, %c0_55] : memref<1x64x32xbf16, #tpu.memory_space<vmem>>, vector<1x64x32xbf16>
    %102 = vector.shape_cast %101 : vector<1x64x32xbf16> to vector<64x32xbf16>
    %103 = arith.truncf %100 : vector<16x64xf32> to vector<16x64xbf16>
    %cst_56 = arith.constant dense<0.000000e+00> : vector<16x32xf32>
    %104 = tpu.matmul %103, %102, %cst_56 {dimension_numbers = #tpu.dot_dimension_numbers<[1], [0], [0], [1], [0, 0, 1, 1], [], []>} : vector<16x64xbf16>, vector<64x32xbf16>, vector<16x32xf32> -> vector<16x32xf32>
    %105 = arith.addf %90, %104 : vector<16x32xf32>
    %c0_57 = arith.constant 0 : index
    %c0_58 = arith.constant 0 : index
    %c0_59 = arith.constant 0 : index
    %106 = vector.load %arg21[%c0_57, %c0_58, %c0_59] : memref<1x1x32xf32, #tpu.memory_space<vmem>>, vector<1x1x32xf32>
    %107 = vector.shape_cast %106 : vector<1x1x32xf32> to vector<1x32xf32>
    %108 = vector.broadcast %107 : vector<1x32xf32> to vector<16x32xf32>
    %109 = arith.addf %105, %108 : vector<16x32xf32>
    %c0_60 = arith.constant 0 : index
    %c0_61 = arith.constant 0 : index
    %c0_62 = arith.constant 0 : index
    %110 = vector.load %arg22[%c0_60, %c0_61, %c0_62] : memref<1x1x32xf32, #tpu.memory_space<vmem>>, vector<1x1x32xf32>
    %111 = vector.shape_cast %110 : vector<1x1x32xf32> to vector<1x32xf32>
    %c0_63 = arith.constant 0 : index
    %c0_64 = arith.constant 0 : index
    %c0_65 = arith.constant 0 : index
    %112 = vector.load %arg23[%c0_63, %c0_64, %c0_65] : memref<1x1x32xf32, #tpu.memory_space<vmem>>, vector<1x1x32xf32>
    %113 = vector.shape_cast %112 : vector<1x1x32xf32> to vector<1x32xf32>
    %cst_66 = arith.constant dense<0.000000e+00> : vector<16xf32>
    %114 = vector.multi_reduction <add>, %109, %cst_66 [1] : vector<16x32xf32> to vector<16xf32>
    %115 = vector.shape_cast %114 : vector<16xf32> to vector<16x1xf32>
    %cst_67 = arith.constant 3.200000e+01 : f32
    %116 = vector.broadcast %cst_67 : f32 to vector<16x1xf32>
    %117 = arith.divf %115, %116 : vector<16x1xf32>
    %118 = vector.broadcast %117 : vector<16x1xf32> to vector<16x32xf32>
    %119 = arith.subf %109, %118 : vector<16x32xf32>
    %120 = arith.mulf %119, %119 : vector<16x32xf32>
    %cst_68 = arith.constant dense<0.000000e+00> : vector<16xf32>
    %121 = vector.multi_reduction <add>, %120, %cst_68 [1] : vector<16x32xf32> to vector<16xf32>
    %122 = vector.shape_cast %121 : vector<16xf32> to vector<16x1xf32>
    %cst_69 = arith.constant 3.200000e+01 : f32
    %123 = vector.broadcast %cst_69 : f32 to vector<16x1xf32>
    %124 = arith.divf %122, %123 : vector<16x1xf32>
    %125 = vector.broadcast %117 : vector<16x1xf32> to vector<16x32xf32>
    %126 = arith.subf %109, %125 : vector<16x32xf32>
    %cst_70 = arith.constant 9.99999974E-6 : f32
    %127 = vector.broadcast %cst_70 : f32 to vector<16x1xf32>
    %128 = arith.addf %124, %127 : vector<16x1xf32>
    %129 = math.rsqrt %128 : vector<16x1xf32>
    %130 = vector.broadcast %129 : vector<16x1xf32> to vector<16x32xf32>
    %131 = arith.mulf %126, %130 : vector<16x32xf32>
    %132 = vector.broadcast %111 : vector<1x32xf32> to vector<16x32xf32>
    %133 = arith.mulf %131, %132 : vector<16x32xf32>
    %134 = vector.broadcast %113 : vector<1x32xf32> to vector<16x32xf32>
    %135 = arith.addf %133, %134 : vector<16x32xf32>
    %136 = arith.truncf %135 : vector<16x32xf32> to vector<16x32xbf16>
    %c0_71 = arith.constant 0 : index
    %c0_72 = arith.constant 0 : index
    %c0_73 = arith.constant 0 : index
    %137 = vector.load %arg24[%c0_71, %c0_72, %c0_73] : memref<1x32x64xbf16, #tpu.memory_space<vmem>>, vector<1x32x64xbf16>
    %138 = vector.shape_cast %137 : vector<1x32x64xbf16> to vector<32x64xbf16>
    %cst_74 = arith.constant dense<0.000000e+00> : vector<16x64xf32>
    %139 = tpu.matmul %136, %138, %cst_74 {dimension_numbers = #tpu.dot_dimension_numbers<[1], [0], [0], [1], [0, 0, 1, 1], [], []>} : vector<16x32xbf16>, vector<32x64xbf16>, vector<16x64xf32> -> vector<16x64xf32>
    %c0_75 = arith.constant 0 : index
    %c0_76 = arith.constant 0 : index
    %c0_77 = arith.constant 0 : index
    %140 = vector.load %arg25[%c0_75, %c0_76, %c0_77] : memref<1x1x64xf32, #tpu.memory_space<vmem>>, vector<1x1x64xf32>
    %141 = vector.shape_cast %140 : vector<1x1x64xf32> to vector<1x64xf32>
    %142 = vector.broadcast %141 : vector<1x64xf32> to vector<16x64xf32>
    %143 = arith.addf %139, %142 : vector<16x64xf32>
    %cst_78 = arith.constant 0.000000e+00 : f32
    %144 = vector.broadcast %cst_78 : f32 to vector<16x64xf32>
    %145 = arith.maximumf %143, %144 : vector<16x64xf32>
    %c0_79 = arith.constant 0 : index
    %c0_80 = arith.constant 0 : index
    %c0_81 = arith.constant 0 : index
    %146 = vector.load %arg26[%c0_79, %c0_80, %c0_81] : memref<1x64x32xbf16, #tpu.memory_space<vmem>>, vector<1x64x32xbf16>
    %147 = vector.shape_cast %146 : vector<1x64x32xbf16> to vector<64x32xbf16>
    %148 = arith.truncf %145 : vector<16x64xf32> to vector<16x64xbf16>
    %cst_82 = arith.constant dense<0.000000e+00> : vector<16x32xf32>
    %149 = tpu.matmul %148, %147, %cst_82 {dimension_numbers = #tpu.dot_dimension_numbers<[1], [0], [0], [1], [0, 0, 1, 1], [], []>} : vector<16x64xbf16>, vector<64x32xbf16>, vector<16x32xf32> -> vector<16x32xf32>
    %150 = arith.addf %135, %149 : vector<16x32xf32>
    %c0_83 = arith.constant 0 : index
    %c0_84 = arith.constant 0 : index
    %c0_85 = arith.constant 0 : index
    %151 = vector.load %arg27[%c0_83, %c0_84, %c0_85] : memref<1x1x32xf32, #tpu.memory_space<vmem>>, vector<1x1x32xf32>
    %152 = vector.shape_cast %151 : vector<1x1x32xf32> to vector<1x32xf32>
    %153 = vector.broadcast %152 : vector<1x32xf32> to vector<16x32xf32>
    %154 = arith.addf %150, %153 : vector<16x32xf32>
    %c0_86 = arith.constant 0 : index
    %c0_87 = arith.constant 0 : index
    %c0_88 = arith.constant 0 : index
    %155 = vector.load %arg28[%c0_86, %c0_87, %c0_88] : memref<1x1x32xf32, #tpu.memory_space<vmem>>, vector<1x1x32xf32>
    %156 = vector.shape_cast %155 : vector<1x1x32xf32> to vector<1x32xf32>
    %c0_89 = arith.constant 0 : index
    %c0_90 = arith.constant 0 : index
    %c0_91 = arith.constant 0 : index
    %157 = vector.load %arg29[%c0_89, %c0_90, %c0_91] : memref<1x1x32xf32, #tpu.memory_space<vmem>>, vector<1x1x32xf32>
    %158 = vector.shape_cast %157 : vector<1x1x32xf32> to vector<1x32xf32>
    %cst_92 = arith.constant dense<0.000000e+00> : vector<16xf32>
    %159 = vector.multi_reduction <add>, %154, %cst_92 [1] : vector<16x32xf32> to vector<16xf32>
    %160 = vector.shape_cast %159 : vector<16xf32> to vector<16x1xf32>
    %cst_93 = arith.constant 3.200000e+01 : f32
    %161 = vector.broadcast %cst_93 : f32 to vector<16x1xf32>
    %162 = arith.divf %160, %161 : vector<16x1xf32>
    %163 = vector.broadcast %162 : vector<16x1xf32> to vector<16x32xf32>
    %164 = arith.subf %154, %163 : vector<16x32xf32>
    %165 = arith.mulf %164, %164 : vector<16x32xf32>
    %cst_94 = arith.constant dense<0.000000e+00> : vector<16xf32>
    %166 = vector.multi_reduction <add>, %165, %cst_94 [1] : vector<16x32xf32> to vector<16xf32>
    %167 = vector.shape_cast %166 : vector<16xf32> to vector<16x1xf32>
    %cst_95 = arith.constant 3.200000e+01 : f32
    %168 = vector.broadcast %cst_95 : f32 to vector<16x1xf32>
    %169 = arith.divf %167, %168 : vector<16x1xf32>
    %170 = vector.broadcast %162 : vector<16x1xf32> to vector<16x32xf32>
    %171 = arith.subf %154, %170 : vector<16x32xf32>
    %cst_96 = arith.constant 9.99999974E-6 : f32
    %172 = vector.broadcast %cst_96 : f32 to vector<16x1xf32>
    %173 = arith.addf %169, %172 : vector<16x1xf32>
    %174 = math.rsqrt %173 : vector<16x1xf32>
    %175 = vector.broadcast %174 : vector<16x1xf32> to vector<16x32xf32>
    %176 = arith.mulf %171, %175 : vector<16x32xf32>
    %177 = vector.broadcast %156 : vector<1x32xf32> to vector<16x32xf32>
    %178 = arith.mulf %176, %177 : vector<16x32xf32>
    %179 = vector.broadcast %158 : vector<1x32xf32> to vector<16x32xf32>
    %180 = arith.addf %178, %179 : vector<16x32xf32>
    %c0_97 = arith.constant 0 : index
    %c0_98 = arith.constant 0 : index
    %181 = vector.load %arg35[%c0_97, %c0_98] : memref<16x32xf32, #tpu.memory_space<vmem>>, vector<16x32xf32>
    tpu.vector_store %arg35[%c0_97, %c0_98], %180 {strides = array<i32>} : memref<16x32xf32, #tpu.memory_space<vmem>>, vector<16x32xf32>,
    %c1_i32 = arith.constant 1 : i32
    %182 = arith.cmpi eq, %arg1, %c1_i32 : i32
    %183 = arith.extui %182 : i1 to i32
    %c0_i32_99 = arith.constant 0 : i32
    %184 = arith.cmpi ne, %183, %c0_i32_99 : i32
    scf.if %184 {
      %185 = vector.shape_cast %180 : vector<16x32xf32> to vector<2x8x32xf32>
      %cst_100 = arith.constant dense<0.000000e+00> : vector<2x32xf32>
      %186 = vector.multi_reduction <add>, %185, %cst_100 [1] : vector<2x8x32xf32> to vector<2x32xf32>
      %cst_101 = arith.constant 8.000000e+00 : f32
      %187 = vector.broadcast %cst_101 : f32 to vector<2x32xf32>
      %188 = arith.divf %186, %187 : vector<2x32xf32>
      %c0_102 = arith.constant 0 : index
      %c0_103 = arith.constant 0 : index
      %189 = vector.load %arg30[%c0_102, %c0_103] : memref<32x32xbf16, #tpu.memory_space<vmem>>, vector<32x32xbf16>
      %190 = arith.truncf %188 : vector<2x32xf32> to vector<2x32xbf16>
      %cst_104 = arith.constant dense<0.000000e+00> : vector<2x32xf32>
      %191 = tpu.matmul %190, %189, %cst_104 {dimension_numbers = #tpu.dot_dimension_numbers<[1], [0], [0], [1], [0, 0, 1, 1], [], []>} : vector<2x32xbf16>, vector<32x32xbf16>, vector<2x32xf32> -> vector<2x32xf32>
      %c0_105 = arith.constant 0 : index
      %c0_106 = arith.constant 0 : index
      %192 = vector.load %arg31[%c0_105, %c0_106] : memref<1x32xf32, #tpu.memory_space<vmem>>, vector<1x32xf32>
      %193 = vector.broadcast %192 : vector<1x32xf32> to vector<2x32xf32>
      %194 = arith.addf %191, %193 : vector<2x32xf32>
      %cst_107 = arith.constant 0.000000e+00 : f32
      %195 = vector.broadcast %cst_107 : f32 to vector<2x32xf32>
      %196 = arith.maximumf %194, %195 : vector<2x32xf32>
      %c0_108 = arith.constant 0 : index
      %c0_109 = arith.constant 0 : index
      %197 = vector.load %arg32[%c0_108, %c0_109] : memref<32x4xbf16, #tpu.memory_space<vmem>>, vector<32x4xbf16>
      %198 = arith.truncf %196 : vector<2x32xf32> to vector<2x32xbf16>
      %cst_110 = arith.constant dense<0.000000e+00> : vector<2x4xf32>
      %199 = tpu.matmul %198, %197, %cst_110 {dimension_numbers = #tpu.dot_dimension_numbers<[1], [0], [0], [1], [0, 0, 1, 1], [], []>} : vector<2x32xbf16>, vector<32x4xbf16>, vector<2x4xf32> -> vector<2x4xf32>
      %c0_111 = arith.constant 0 : index
      %c0_112 = arith.constant 0 : index
      %200 = vector.load %arg33[%c0_111, %c0_112] : memref<1x4xf32, #tpu.memory_space<vmem>>, vector<1x4xf32>
      %201 = vector.broadcast %200 : vector<1x4xf32> to vector<2x4xf32>
      %202 = arith.addf %199, %201 : vector<2x4xf32>
      %203 = vector.shape_cast %202 : vector<2x4xf32> to vector<1x2x4xf32>
      %c0_113 = arith.constant 0 : index
      %c0_114 = arith.constant 0 : index
      %c0_115 = arith.constant 0 : index
      %204 = vector.load %arg34[%c0_113, %c0_114, %c0_115] : memref<1x2x4xf32, #tpu.memory_space<vmem>>, vector<1x2x4xf32>
      tpu.vector_store %arg34[%c0_113, %c0_114, %c0_115], %203 {strides = array<i32>} : memref<1x2x4xf32, #tpu.memory_space<vmem>>, vector<1x2x4xf32>,
    } else {
    }
    return
  }
  func.func @transform_0(%arg0: i32, %arg1: i32) -> (i32, i32, i32) {
    %c0_i32 = arith.constant 0 : i32
    %c0_i32_0 = arith.constant 0 : i32
    %c0_i32_1 = arith.constant 0 : i32
    return %arg0, %c0_i32, %c0_i32_0 : i32, i32, i32
  }
  func.func @transform_1(%arg0: i32, %arg1: i32) -> (i32, i32) {
    %c0_i32 = arith.constant 0 : i32
    %c0_i32_0 = arith.constant 0 : i32
    %c0_i32_1 = arith.constant 0 : i32
    return %c0_i32, %c0_i32_0 : i32, i32
  }
  func.func @transform_2(%arg0: i32, %arg1: i32) -> (i32, i32) {
    %c0_i32 = arith.constant 0 : i32
    %c0_i32_0 = arith.constant 0 : i32
    %c0_i32_1 = arith.constant 0 : i32
    return %c0_i32, %c0_i32_0 : i32, i32
  }
  func.func @transform_3(%arg0: i32, %arg1: i32) -> (i32, i32) {
    %c0_i32 = arith.constant 0 : i32
    %c0_i32_0 = arith.constant 0 : i32
    %c0_i32_1 = arith.constant 0 : i32
    return %c0_i32, %c0_i32_0 : i32, i32
  }
  func.func @transform_4(%arg0: i32, %arg1: i32) -> (i32, i32) {
    %c0_i32 = arith.constant 0 : i32
    %c0_i32_0 = arith.constant 0 : i32
    %c0_i32_1 = arith.constant 0 : i32
    return %c0_i32, %c0_i32_0 : i32, i32
  }
  func.func @transform_5(%arg0: i32, %arg1: i32) -> (i32, i32) {
    %c0_i32 = arith.constant 0 : i32
    %c0_i32_0 = arith.constant 0 : i32
    %c0_i32_1 = arith.constant 0 : i32
    return %c0_i32, %c0_i32_0 : i32, i32
  }
  func.func @transform_6(%arg0: i32, %arg1: i32) -> (i32, i32, i32) {
    %c0_i32 = arith.constant 0 : i32
    %c0_i32_0 = arith.constant 0 : i32
    %c0_i32_1 = arith.constant 0 : i32
    return %arg1, %c0_i32, %c0_i32_0 : i32, i32, i32
  }
  func.func @transform_7(%arg0: i32, %arg1: i32) -> (i32, i32, i32) {
    %c0_i32 = arith.constant 0 : i32
    %c0_i32_0 = arith.constant 0 : i32
    %c0_i32_1 = arith.constant 0 : i32
    return %arg1, %c0_i32, %c0_i32_0 : i32, i32, i32
  }
  func.func @transform_8(%arg0: i32, %arg1: i32) -> (i32, i32, i32) {
    %c0_i32 = arith.constant 0 : i32
    %c0_i32_0 = arith.constant 0 : i32
    %c0_i32_1 = arith.constant 0 : i32
    return %arg1, %c0_i32, %c0_i32_0 : i32, i32, i32
  }
  func.func @transform_9(%arg0: i32, %arg1: i32) -> (i32, i32, i32) {
    %c0_i32 = arith.constant 0 : i32
    %c0_i32_0 = arith.constant 0 : i32
    %c0_i32_1 = arith.constant 0 : i32
    return %arg1, %c0_i32, %c0_i32_0 : i32, i32, i32
  }
  func.func @transform_10(%arg0: i32, %arg1: i32) -> (i32, i32, i32) {
    %c0_i32 = arith.constant 0 : i32
    %c0_i32_0 = arith.constant 0 : i32
    %c0_i32_1 = arith.constant 0 : i32
    return %arg1, %c0_i32, %c0_i32_0 : i32, i32, i32
  }
  func.func @transform_11(%arg0: i32, %arg1: i32) -> (i32, i32, i32) {
    %c0_i32 = arith.constant 0 : i32
    %c0_i32_0 = arith.constant 0 : i32
    %c0_i32_1 = arith.constant 0 : i32
    return %arg1, %c0_i32, %c0_i32_0 : i32, i32, i32
  }
  func.func @transform_12(%arg0: i32, %arg1: i32) -> (i32, i32, i32) {
    %c0_i32 = arith.constant 0 : i32
    %c0_i32_0 = arith.constant 0 : i32
    %c0_i32_1 = arith.constant 0 : i32
    return %arg1, %c0_i32, %c0_i32_0 : i32, i32, i32
  }
  func.func @transform_13(%arg0: i32, %arg1: i32) -> (i32, i32, i32) {
    %c0_i32 = arith.constant 0 : i32
    %c0_i32_0 = arith.constant 0 : i32
    %c0_i32_1 = arith.constant 0 : i32
    return %arg1, %c0_i32, %c0_i32_0 : i32, i32, i32
  }
  func.func @transform_14(%arg0: i32, %arg1: i32) -> (i32, i32, i32) {
    %c0_i32 = arith.constant 0 : i32
    %c0_i32_0 = arith.constant 0 : i32
    %c0_i32_1 = arith.constant 0 : i32
    return %arg1, %c0_i32, %c0_i32_0 : i32, i32, i32
  }
  func.func @transform_15(%arg0: i32, %arg1: i32) -> (i32, i32, i32) {
    %c0_i32 = arith.constant 0 : i32
    %c0_i32_0 = arith.constant 0 : i32
    %c0_i32_1 = arith.constant 0 : i32
    return %arg1, %c0_i32, %c0_i32_0 : i32, i32, i32
  }
  func.func @transform_16(%arg0: i32, %arg1: i32) -> (i32, i32, i32) {
    %c0_i32 = arith.constant 0 : i32
    %c0_i32_0 = arith.constant 0 : i32
    %c0_i32_1 = arith.constant 0 : i32
    return %arg1, %c0_i32, %c0_i32_0 : i32, i32, i32
  }
  func.func @transform_17(%arg0: i32, %arg1: i32) -> (i32, i32, i32) {
    %c0_i32 = arith.constant 0 : i32
    %c0_i32_0 = arith.constant 0 : i32
    %c0_i32_1 = arith.constant 0 : i32
    return %arg1, %c0_i32, %c0_i32_0 : i32, i32, i32
  }
  func.func @transform_18(%arg0: i32, %arg1: i32) -> (i32, i32, i32) {
    %c0_i32 = arith.constant 0 : i32
    %c0_i32_0 = arith.constant 0 : i32
    %c0_i32_1 = arith.constant 0 : i32
    return %arg1, %c0_i32, %c0_i32_0 : i32, i32, i32
  }
  func.func @transform_19(%arg0: i32, %arg1: i32) -> (i32, i32, i32) {
    %c0_i32 = arith.constant 0 : i32
    %c0_i32_0 = arith.constant 0 : i32
    %c0_i32_1 = arith.constant 0 : i32
    return %arg1, %c0_i32, %c0_i32_0 : i32, i32, i32
  }
  func.func @transform_20(%arg0: i32, %arg1: i32) -> (i32, i32, i32) {
    %c0_i32 = arith.constant 0 : i32
    %c0_i32_0 = arith.constant 0 : i32
    %c0_i32_1 = arith.constant 0 : i32
    return %arg1, %c0_i32, %c0_i32_0 : i32, i32, i32
  }
  func.func @transform_21(%arg0: i32, %arg1: i32) -> (i32, i32, i32) {
    %c0_i32 = arith.constant 0 : i32
    %c0_i32_0 = arith.constant 0 : i32
    %c0_i32_1 = arith.constant 0 : i32
    return %arg1, %c0_i32, %c0_i32_0 : i32, i32, i32
  }
  func.func @transform_22(%arg0: i32, %arg1: i32) -> (i32, i32, i32) {
    %c0_i32 = arith.constant 0 : i32
    %c0_i32_0 = arith.constant 0 : i32
    %c0_i32_1 = arith.constant 0 : i32
    return %arg1, %c0_i32, %c0_i32_0 : i32, i32, i32
  }
  func.func @transform_23(%arg0: i32, %arg1: i32) -> (i32, i32, i32) {
    %c0_i32 = arith.constant 0 : i32
    %c0_i32_0 = arith.constant 0 : i32
    %c0_i32_1 = arith.constant 0 : i32
    return %arg1, %c0_i32, %c0_i32_0 : i32, i32, i32
  }
  func.func @transform_24(%arg0: i32, %arg1: i32) -> (i32, i32, i32) {
    %c0_i32 = arith.constant 0 : i32
    %c0_i32_0 = arith.constant 0 : i32
    %c0_i32_1 = arith.constant 0 : i32
    return %arg1, %c0_i32, %c0_i32_0 : i32, i32, i32
  }
  func.func @transform_25(%arg0: i32, %arg1: i32) -> (i32, i32, i32) {
    %c0_i32 = arith.constant 0 : i32
    %c0_i32_0 = arith.constant 0 : i32
    %c0_i32_1 = arith.constant 0 : i32
    return %arg1, %c0_i32, %c0_i32_0 : i32, i32, i32
  }
  func.func @transform_26(%arg0: i32, %arg1: i32) -> (i32, i32, i32) {
    %c0_i32 = arith.constant 0 : i32
    %c0_i32_0 = arith.constant 0 : i32
    %c0_i32_1 = arith.constant 0 : i32
    return %arg1, %c0_i32, %c0_i32_0 : i32, i32, i32
  }
  func.func @transform_27(%arg0: i32, %arg1: i32) -> (i32, i32, i32) {
    %c0_i32 = arith.constant 0 : i32
    %c0_i32_0 = arith.constant 0 : i32
    %c0_i32_1 = arith.constant 0 : i32
    return %arg1, %c0_i32, %c0_i32_0 : i32, i32, i32
  }
  func.func @transform_28(%arg0: i32, %arg1: i32) -> (i32, i32) {
    %c0_i32 = arith.constant 0 : i32
    %c0_i32_0 = arith.constant 0 : i32
    %c0_i32_1 = arith.constant 0 : i32
    return %c0_i32, %c0_i32_0 : i32, i32
  }
  func.func @transform_29(%arg0: i32, %arg1: i32) -> (i32, i32) {
    %c0_i32 = arith.constant 0 : i32
    %c0_i32_0 = arith.constant 0 : i32
    %c0_i32_1 = arith.constant 0 : i32
    return %c0_i32, %c0_i32_0 : i32, i32
  }
  func.func @transform_30(%arg0: i32, %arg1: i32) -> (i32, i32) {
    %c0_i32 = arith.constant 0 : i32
    %c0_i32_0 = arith.constant 0 : i32
    %c0_i32_1 = arith.constant 0 : i32
    return %c0_i32, %c0_i32_0 : i32, i32
  }
  func.func @transform_31(%arg0: i32, %arg1: i32) -> (i32, i32) {
    %c0_i32 = arith.constant 0 : i32
    %c0_i32_0 = arith.constant 0 : i32
    %c0_i32_1 = arith.constant 0 : i32
    return %c0_i32, %c0_i32_0 : i32, i32
  }
  func.func @transform_32(%arg0: i32, %arg1: i32) -> (i32, i32, i32) {
    %c0_i32 = arith.constant 0 : i32
    %c0_i32_0 = arith.constant 0 : i32
    %c0_i32_1 = arith.constant 0 : i32
    return %arg0, %c0_i32, %c0_i32_0 : i32, i32, i32
  }
}

</mosaic_0001>

<llo_original>
// kernel: tpu_custom_call.1
$region0: #{tpu_custom_call.1}
  #allocation0 [shape = 'u32[]', space=smem, size = 0x4, offset = 0x4, fixed_abs, tag = 'smem constant byte address 0x4 - core index']
  #allocation1 [shape = 'u32[144,128]{1,0:T(1,128)}', space=vmem, size = 0x12000, scoped, tag = 'internal scratch']
  #allocation2 [shape = 'f32[16,32]{1,0:T(8,128)}', space=vmem, size = 0x2000, scoped, tag = 'scratch operand']
  %s0 = inlined_call_operand.smem [shape: u32[33], index: -1, kind: input, shape index: {}]
  %s1 = sld [smem:[%s0]]
  %s2 = scalar_lea.smem %s0, 1
  %s3 = sld [smem:[%s2]]
  %s4 = scalar_lea.smem %s0, 2
  %s5 = sld [smem:[%s4]]
  %s6 = scalar_lea.smem %s0, 3
  %s7 = sld [smem:[%s6]]
  %s8 = scalar_lea.smem %s0, 4
  %s9 = sld [smem:[%s8]]
  %s10 = scalar_lea.smem %s0, 5
  %s11 = sld [smem:[%s10]]
  %s12 = scalar_lea.smem %s0, 6
  %s13 = sld [smem:[%s12]]
  %s14 = scalar_lea.smem %s0, 7
  %s15 = sld [smem:[%s14]]
  %s16 = scalar_lea.smem %s0, 8
  %s17 = sld [smem:[%s16]]
  %s18 = scalar_lea.smem %s0, 9
  %s19 = sld [smem:[%s18]]
  %s20 = scalar_lea.smem %s0, 10
  %s21 = sld [smem:[%s20]]
  %s22 = scalar_lea.smem %s0, 11
  %s23 = sld [smem:[%s22]]
  %s24 = scalar_lea.smem %s0, 12
  %s25 = sld [smem:[%s24]]
  %s26 = scalar_lea.smem %s0, 13
  %s27 = sld [smem:[%s26]]
  %s28 = scalar_lea.smem %s0, 14
  %s29 = sld [smem:[%s28]]
  %s30 = scalar_lea.smem %s0, 15
  %s31 = sld [smem:[%s30]]
  %s32 = scalar_lea.smem %s0, 16
  %s33 = sld [smem:[%s32]]
  %s34 = scalar_lea.smem %s0, 17
  %s35 = sld [smem:[%s34]]
  %s36 = scalar_lea.smem %s0, 18
  %s37 = sld [smem:[%s36]]
  %s38 = scalar_lea.smem %s0, 19
  %s39 = sld [smem:[%s38]]
  %s40 = scalar_lea.smem %s0, 20
  %s41 = sld [smem:[%s40]]
  %s42 = scalar_lea.smem %s0, 21
  %s43 = sld [smem:[%s42]]
  %s44 = scalar_lea.smem %s0, 22
  %s45 = sld [smem:[%s44]]
  %s46 = scalar_lea.smem %s0, 23
  %s47 = sld [smem:[%s46]]
  %s48 = scalar_lea.smem %s0, 24
  %s49 = sld [smem:[%s48]]
  %s50 = scalar_lea.smem %s0, 25
  %s51 = sld [smem:[%s50]]
  %s52 = scalar_lea.smem %s0, 26
  %s53 = sld [smem:[%s52]]
  %s54 = scalar_lea.smem %s0, 27
  %s55 = sld [smem:[%s54]]
  %s56 = scalar_lea.smem %s0, 28
  %s57 = sld [smem:[%s56]]
  %s58 = scalar_lea.smem %s0, 29
  %s59 = sld [smem:[%s58]]
  %s60 = scalar_lea.smem %s0, 30
  %s61 = sld [smem:[%s60]]
  %s62 = scalar_lea.smem %s0, 31
  %s63 = sld [smem:[%s62]]
  %s64 = scalar_lea.smem %s0, 32
  %s65 = sld [smem:[%s64]]
  %s66 = sld [smem:[#allocation0]]
  $region197: #{tpu_custom_call.1} parent=0
    _
  %s68 = ssub.s32 1, %s66
  %s69 = scalar_select 0, %s68, %s66
  $region1: #{tpu_custom_call.1} parent=0
    #allocation3 [shape = 'u8[1024]{0}', space=vmem, size = 0x400, scoped, tag = 'input window, operand 1, single buffered']
    #allocation4 [shape = 's32[2]{0}', space=sflag, size = 0x8, scoped, tag = 'scoped memory for tpu_custom_call.1']
    #allocation5 [shape = 's32[2]{0}', space=sflag, size = 0x8, scoped, tag = 'scoped memory for tpu_custom_call.1']
    #allocation6 [shape = 'u8[1024]{0}', space=vmem, size = 0x400, scoped, tag = 'input window, operand 2, single buffered']
    #allocation7 [shape = 's32[1]{0}', space=sflag, size = 0x4, scoped, tag = 'scoped memory for tpu_custom_call.1']
    #allocation8 [shape = 'u8[512]{0}', space=vmem, size = 0x400, scoped, tag = 'input window, operand 3, single buffered']
    #allocation9 [shape = 'u8[2048]{0}', space=vmem, size = 0x800, scoped, tag = 'input window, operand 4, single buffered']
    #allocation10 [shape = 's32[1]{0}', space=sflag, size = 0x4, scoped, tag = 'scoped memory for tpu_custom_call.1']
    #allocation11 [shape = 'u8[512]{0}', space=vmem, size = 0x400, scoped, tag = 'input window, operand 5, single buffered']
    #allocation12 [shape = 'u8[1024]{0}', space=vmem, size = 0x400, scoped, tag = 'input window, operand 9']
    #allocation13 [shape = 's32[2]{0}', space=sflag, size = 0x8, scoped, tag = 'scoped memory for tpu_custom_call.1']
    #allocation14 [shape = 'u8[1024]{0}', space=vmem, size = 0x400, scoped, tag = 'input window, operand 11']
    #allocation15 [shape = 'u8[1024]{0}', space=vmem, size = 0x400, scoped, tag = 'output window, operand 0, single buffered']
    %70 = vsyncpa [#allocation4], 0
    %71 = vsyncpa [#allocation7], 0
    %72 = vsyncpa [#allocation10], 0
    %73 = vsyncpa [#allocation13], 0
    %s74 = scalar_lea.sflag [#allocation13], 1
    %75 = vsyncpa %s74, 0
    %76 = vsyncpa [#allocation5], 0
    loop: start=0, step=1, limit=4
    $region2: #{tpu_custom_call.1} parent=1 // loop_pre_header
      _
    $region3: #{tpu_custom_call.1} parent=1 // loop_header
      %s78 = sphi 0, %s82
      %p79 = scmp.ge.s32.totalorder %s78, 4
      %s85 = sphi 0, %s97
      %s86 = sphi 0, %s93
      %s87 = sphi 0, %s85
      %s88 = sphi 0, %s86
      %s89 = sphi 0, %s87
      %s90 = sphi 0, %s88
      %s100 = sphi 0, %s102
      %s103 = sphi 0, %s100
      %s104 = sphi 0, %s103
      %s120 = sphi 0, %s104
      %s124 = sphi 0, %s124
      %s126 = sphi 0, %s124
      %s127 = sphi 0, %s126
      %s141 = sphi 0, %s127
      %s145 = sphi 0, %s145
      %s147 = sphi 0, %s145
      %s148 = sphi 0, %s147
      %s162 = sphi 0, %s148
      %s166 = sphi 0, %s166
      %s168 = sphi 0, %s166
      %s169 = sphi 0, %s168
      %s183 = sphi 0, %s169
      %s187 = sphi 0, %s187
      %s189 = sphi 0, %s187
      %s190 = sphi 0, %s189
      %s204 = sphi 0, %s190
      %s208 = sphi 0, %s208
      %s210 = sphi 0, %s208
      %s211 = sphi 0, %s210
      %s225 = sphi 0, %s211
      %s231 = sphi 0, %s233
      %s234 = sphi 0, %s231
      %s235 = sphi 0, %s234
      %s251 = sphi 0, %s235
      %s257 = sphi 0, %s259
      %s260 = sphi 0, %s257
      %s261 = sphi 0, %s260
      %s277 = sphi 0, %s261
      %s283 = sphi 0, %s285
      %s286 = sphi 0, %s283
      %s287 = sphi 0, %s286
      %s303 = sphi 0, %s287
      %s309 = sphi 0, %s311
      %s312 = sphi 0, %s309
      %s313 = sphi 0, %s312
      %s329 = sphi 0, %s313
      %s335 = sphi 0, %s337
      %s338 = sphi 0, %s335
      %s339 = sphi 0, %s338
      %s355 = sphi 0, %s339
      %s361 = sphi 0, %s363
      %s364 = sphi 0, %s361
      %s365 = sphi 0, %s364
      %s381 = sphi 0, %s365
      %s387 = sphi 0, %s389
      %s390 = sphi 0, %s387
      %s391 = sphi 0, %s390
      %s407 = sphi 0, %s391
      %s413 = sphi 0, %s415
      %s416 = sphi 0, %s413
      %s417 = sphi 0, %s416
      %s433 = sphi 0, %s417
      %s439 = sphi 0, %s441
      %s442 = sphi 0, %s439
      %s443 = sphi 0, %s442
      %s459 = sphi 0, %s443
      %s465 = sphi 0, %s467
      %s468 = sphi 0, %s465
      %s469 = sphi 0, %s468
      %s485 = sphi 0, %s469
      %s491 = sphi 0, %s493
      %s494 = sphi 0, %s491
      %s495 = sphi 0, %s494
      %s511 = sphi 0, %s495
      %s517 = sphi 0, %s519
      %s520 = sphi 0, %s517
      %s521 = sphi 0, %s520
      %s537 = sphi 0, %s521
      %s543 = sphi 0, %s545
      %s546 = sphi 0, %s543
      %s547 = sphi 0, %s546
      %s563 = sphi 0, %s547
      %s569 = sphi 0, %s571
      %s572 = sphi 0, %s569
      %s573 = sphi 0, %s572
      %s589 = sphi 0, %s573
      %s595 = sphi 0, %s597
      %s598 = sphi 0, %s595
      %s599 = sphi 0, %s598
      %s615 = sphi 0, %s599
      %s621 = sphi 0, %s623
      %s624 = sphi 0, %s621
      %s625 = sphi 0, %s624
      %s641 = sphi 0, %s625
      %s647 = sphi 0, %s649
      %s650 = sphi 0, %s647
      %s651 = sphi 0, %s650
      %s667 = sphi 0, %s651
      %s673 = sphi 0, %s675
      %s676 = sphi 0, %s673
      %s677 = sphi 0, %s676
      %s693 = sphi 0, %s677
      %s699 = sphi 0, %s701
      %s702 = sphi 0, %s699
      %s703 = sphi 0, %s702
      %s719 = sphi 0, %s703
      %s725 = sphi 0, %s727
      %s728 = sphi 0, %s725
      %s729 = sphi 0, %s728
      %s745 = sphi 0, %s729
      %s751 = sphi 0, %s753
      %s754 = sphi 0, %s751
      %s755 = sphi 0, %s754
      %s771 = sphi 0, %s755
      %s777 = sphi 0, %s779
      %s780 = sphi 0, %s777
      %s781 = sphi 0, %s780
      %s797 = sphi 0, %s781
      %s801 = sphi 0, %s801
      %s803 = sphi 0, %s801
      %s804 = sphi 0, %s803
      %s818 = sphi 0, %s804
      %s822 = sphi 0, %s822
      %s824 = sphi 0, %s822
      %s825 = sphi 0, %s824
      %s839 = sphi 0, %s825
      %s843 = sphi 0, %s843
      %s845 = sphi 0, %s843
      %s846 = sphi 0, %s845
      %s860 = sphi 0, %s846
      %s864 = sphi 0, %s864
      %s866 = sphi 0, %s864
      %s867 = sphi 0, %s866
      %s881 = sphi 0, %s867
      %s887 = sphi 0, %s889
      %s890 = sphi 0, %s887
      %s891 = sphi 0, %s890
      %s907 = sphi 0, %s891
    $region4: #{tpu_custom_call.1} parent=1 // loop_header_branch
      %81 = sbr.rel (%p79) target = $region8
    $region5: #{tpu_custom_call.1} parent=1 // loop_body
      %s83 = ssub.s32 %s78, 1
      %s84 = ssub.s32 %s78, 2
      %s91 = sadd.s32 1, %s86
      %p92 = scmp.ge.s32.totalorder %s91, 2
      %s93 = scalar_select %p92, 0, %s91
      %s94 = sadd.s32 1, %s85
      %s95 = scalar_select %p92, %s94, %s85
      %p96 = scmp.ge.s32.totalorder %s95, 1
      %s97 = scalar_select %p96, 0, %s95
      %s98 = ssub.s32 %s85, %s97
      %p99 = scmp.eq.s32.totalorder %s98, 0
      %s101 = sadd.s32 %s100, 1
      %s102 = scalar_select %p99, %s100, %s101
      %p105 = pneg %p99
      %p106 = scmp.eq.s32.totalorder %s78, 1
      %p107 = por %p105, %p106
      %p108 = scmp.ne.s32.totalorder %s100, %s103
      %p109 = scmp.eq.s32.totalorder %s78, 0
      %p110 = por %p108, %p109
      %p111 = scmp.ne.s32.totalorder %s100, %s103
      %p112 = scmp.eq.s32.totalorder %s83, 1
      %p113 = por %p111, %p112
      %p114 = scmp.ne.s32.totalorder %s103, %s104
      %p115 = scmp.eq.s32.totalorder %s83, 0
      %p116 = por %p114, %p115
      %p117 = scmp.ne.s32.totalorder %s103, %s104
      %p118 = scmp.eq.s32.totalorder %s84, 1
      %p119 = por %p117, %p118
      %p121 = scmp.ne.s32.totalorder %s104, %s120
      %p122 = scmp.eq.s32.totalorder %s84, 0
      %p123 = por %p121, %p122
      %s125 = sadd.s32 %s124, 1
      %p128 = scmp.eq.s32.totalorder %s78, 1
      %p129 = scmp.ne.s32.totalorder %s124, %s126
      %p130 = scmp.eq.s32.totalorder %s78, 0
      %p131 = por %p129, %p130
      %p132 = scmp.ne.s32.totalorder %s124, %s126
      %p133 = scmp.eq.s32.totalorder %s83, 1
      %p134 = por %p132, %p133
      %p135 = scmp.ne.s32.totalorder %s126, %s127
      %p136 = scmp.eq.s32.totalorder %s83, 0
      %p137 = por %p135, %p136
      %p138 = scmp.ne.s32.totalorder %s126, %s127
      %p139 = scmp.eq.s32.totalorder %s84, 1
      %p140 = por %p138, %p139
      %p142 = scmp.ne.s32.totalorder %s127, %s141
      %p143 = scmp.eq.s32.totalorder %s84, 0
      %p144 = por %p142, %p143
      %s146 = sadd.s32 %s145, 1
      %p149 = scmp.eq.s32.totalorder %s78, 1
      %p150 = scmp.ne.s32.totalorder %s145, %s147
      %p151 = scmp.eq.s32.totalorder %s78, 0
      %p152 = por %p150, %p151
      %p153 = scmp.ne.s32.totalorder %s145, %s147
      %p154 = scmp.eq.s32.totalorder %s83, 1
      %p155 = por %p153, %p154
      %p156 = scmp.ne.s32.totalorder %s147, %s148
      %p157 = scmp.eq.s32.totalorder %s83, 0
      %p158 = por %p156, %p157
      %p159 = scmp.ne.s32.totalorder %s147, %s148
      %p160 = scmp.eq.s32.totalorder %s84, 1
      %p161 = por %p159, %p160
      %p163 = scmp.ne.s32.totalorder %s148, %s162
      %p164 = scmp.eq.s32.totalorder %s84, 0
      %p165 = por %p163, %p164
      %s167 = sadd.s32 %s166, 1
      %p170 = scmp.eq.s32.totalorder %s78, 1
      %p171 = scmp.ne.s32.totalorder %s166, %s168
      %p172 = scmp.eq.s32.totalorder %s78, 0
      %p173 = por %p171, %p172
      %p174 = scmp.ne.s32.totalorder %s166, %s168
      %p175 = scmp.eq.s32.totalorder %s83, 1
      %p176 = por %p174, %p175
      %p177 = scmp.ne.s32.totalorder %s168, %s169
      %p178 = scmp.eq.s32.totalorder %s83, 0
      %p179 = por %p177, %p178
      %p180 = scmp.ne.s32.totalorder %s168, %s169
      %p181 = scmp.eq.s32.totalorder %s84, 1
      %p182 = por %p180, %p181
      %p184 = scmp.ne.s32.totalorder %s169, %s183
      %p185 = scmp.eq.s32.totalorder %s84, 0
      %p186 = por %p184, %p185
      %s188 = sadd.s32 %s187, 1
      %p191 = scmp.eq.s32.totalorder %s78, 1
      %p192 = scmp.ne.s32.totalorder %s187, %s189
      %p193 = scmp.eq.s32.totalorder %s78, 0
      %p194 = por %p192, %p193
      %p195 = scmp.ne.s32.totalorder %s187, %s189
      %p196 = scmp.eq.s32.totalorder %s83, 1
      %p197 = por %p195, %p196
      %p198 = scmp.ne.s32.totalorder %s189, %s190
      %p199 = scmp.eq.s32.totalorder %s83, 0
      %p200 = por %p198, %p199
      %p201 = scmp.ne.s32.totalorder %s189, %s190
      %p202 = scmp.eq.s32.totalorder %s84, 1
      %p203 = por %p201, %p202
      %p205 = scmp.ne.s32.totalorder %s190, %s204
      %p206 = scmp.eq.s32.totalorder %s84, 0
      %p207 = por %p205, %p206
      %s209 = sadd.s32 %s208, 1
      %p212 = scmp.eq.s32.totalorder %s78, 1
      %p213 = scmp.ne.s32.totalorder %s208, %s210
      %p214 = scmp.eq.s32.totalorder %s78, 0
      %p215 = por %p213, %p214
      %p216 = scmp.ne.s32.totalorder %s208, %s210
      %p217 = scmp.eq.s32.totalorder %s83, 1
      %p218 = por %p216, %p217
      %p219 = scmp.ne.s32.totalorder %s210, %s211
      %p220 = scmp.eq.s32.totalorder %s83, 0
      %p221 = por %p219, %p220
      %p222 = scmp.ne.s32.totalorder %s210, %s211
      %p223 = scmp.eq.s32.totalorder %s84, 1
      %p224 = por %p222, %p223
      %p226 = scmp.ne.s32.totalorder %s211, %s225
      %p227 = scmp.eq.s32.totalorder %s84, 0
      %p228 = por %p226, %p227
      %s229 = ssub.s32 %s86, %s93
      %p230 = scmp.eq.s32.totalorder %s229, 0
      %s232 = sadd.s32 %s231, 1
      %s233 = scalar_select %p230, %s231, %s232
      %p236 = pneg %p230
      %p237 = scmp.eq.s32.totalorder %s78, 1
      %p238 = por %p236, %p237
      %p239 = scmp.ne.s32.totalorder %s231, %s234
      %p240 = scmp.eq.s32.totalorder %s78, 0
      %p241 = por %p239, %p240
      %p242 = scmp.ne.s32.totalorder %s231, %s234
      %p243 = scmp.eq.s32.totalorder %s83, 1
      %p244 = por %p242, %p243
      %p245 = scmp.ne.s32.totalorder %s234, %s235
      %p246 = scmp.eq.s32.totalorder %s83, 0
      %p247 = por %p245, %p246
      %p248 = scmp.ne.s32.totalorder %s234, %s235
      %p249 = scmp.eq.s32.totalorder %s84, 1
      %p250 = por %p248, %p249
      %p252 = scmp.ne.s32.totalorder %s235, %s251
      %p253 = scmp.eq.s32.totalorder %s84, 0
      %p254 = por %p252, %p253
      %s255 = ssub.s32 %s86, %s93
      %p256 = scmp.eq.s32.totalorder %s255, 0
      %s258 = sadd.s32 %s257, 1
      %s259 = scalar_select %p256, %s257, %s258
      %p262 = pneg %p256
      %p263 = scmp.eq.s32.totalorder %s78, 1
      %p264 = por %p262, %p263
      %p265 = scmp.ne.s32.totalorder %s257, %s260
      %p266 = scmp.eq.s32.totalorder %s78, 0
      %p267 = por %p265, %p266
      %p268 = scmp.ne.s32.totalorder %s257, %s260
      %p269 = scmp.eq.s32.totalorder %s83, 1
      %p270 = por %p268, %p269
      %p271 = scmp.ne.s32.totalorder %s260, %s261
      %p272 = scmp.eq.s32.totalorder %s83, 0
      %p273 = por %p271, %p272
      %p274 = scmp.ne.s32.totalorder %s260, %s261
      %p275 = scmp.eq.s32.totalorder %s84, 1
      %p276 = por %p274, %p275
      %p278 = scmp.ne.s32.totalorder %s261, %s277
      %p279 = scmp.eq.s32.totalorder %s84, 0
      %p280 = por %p278, %p279
      %s281 = ssub.s32 %s86, %s93
      %p282 = scmp.eq.s32.totalorder %s281, 0
      %s284 = sadd.s32 %s283, 1
      %s285 = scalar_select %p282, %s283, %s284
      %p288 = pneg %p282
      %p289 = scmp.eq.s32.totalorder %s78, 1
      %p290 = por %p288, %p289
      %p291 = scmp.ne.s32.totalorder %s283, %s286
      %p292 = scmp.eq.s32.totalorder %s78, 0
      %p293 = por %p291, %p292
      %p294 = scmp.ne.s32.totalorder %s283, %s286
      %p295 = scmp.eq.s32.totalorder %s83, 1
      %p296 = por %p294, %p295
      %p297 = scmp.ne.s32.totalorder %s286, %s287
      %p298 = scmp.eq.s32.totalorder %s83, 0
      %p299 = por %p297, %p298
      %p300 = scmp.ne.s32.totalorder %s286, %s287
      %p301 = scmp.eq.s32.totalorder %s84, 1
      %p302 = por %p300, %p301
      %p304 = scmp.ne.s32.totalorder %s287, %s303
      %p305 = scmp.eq.s32.totalorder %s84, 0
      %p306 = por %p304, %p305
      %s307 = ssub.s32 %s86, %s93
      %p308 = scmp.eq.s32.totalorder %s307, 0
      %s310 = sadd.s32 %s309, 1
      %s311 = scalar_select %p308, %s309, %s310
      %p314 = pneg %p308
      %p315 = scmp.eq.s32.totalorder %s78, 1
      %p316 = por %p314, %p315
      %p317 = scmp.ne.s32.totalorder %s309, %s312
      %p318 = scmp.eq.s32.totalorder %s78, 0
      %p319 = por %p317, %p318
      %p320 = scmp.ne.s32.totalorder %s309, %s312
      %p321 = scmp.eq.s32.totalorder %s83, 1
      %p322 = por %p320, %p321
      %p323 = scmp.ne.s32.totalorder %s312, %s313
      %p324 = scmp.eq.s32.totalorder %s83, 0
      %p325 = por %p323, %p324
      %p326 = scmp.ne.s32.totalorder %s312, %s313
      %p327 = scmp.eq.s32.totalorder %s84, 1
      %p328 = por %p326, %p327
      %p330 = scmp.ne.s32.totalorder %s313, %s329
      %p331 = scmp.eq.s32.totalorder %s84, 0
      %p332 = por %p330, %p331
      %s333 = ssub.s32 %s86, %s93
      %p334 = scmp.eq.s32.totalorder %s333, 0
      %s336 = sadd.s32 %s335, 1
      %s337 = scalar_select %p334, %s335, %s336
      %p340 = pneg %p334
      %p341 = scmp.eq.s32.totalorder %s78, 1
      %p342 = por %p340, %p341
      %p343 = scmp.ne.s32.totalorder %s335, %s338
      %p344 = scmp.eq.s32.totalorder %s78, 0
      %p345 = por %p343, %p344
      %p346 = scmp.ne.s32.totalorder %s335, %s338
      %p347 = scmp.eq.s32.totalorder %s83, 1
      %p348 = por %p346, %p347
      %p349 = scmp.ne.s32.totalorder %s338, %s339
      %p350 = scmp.eq.s32.totalorder %s83, 0
      %p351 = por %p349, %p350
      %p352 = scmp.ne.s32.totalorder %s338, %s339
      %p353 = scmp.eq.s32.totalorder %s84, 1
      %p354 = por %p352, %p353
      %p356 = scmp.ne.s32.totalorder %s339, %s355
      %p357 = scmp.eq.s32.totalorder %s84, 0
      %p358 = por %p356, %p357
      %s359 = ssub.s32 %s86, %s93
      %p360 = scmp.eq.s32.totalorder %s359, 0
      %s362 = sadd.s32 %s361, 1
      %s363 = scalar_select %p360, %s361, %s362
      %p366 = pneg %p360
      %p367 = scmp.eq.s32.totalorder %s78, 1
      %p368 = por %p366, %p367
      %p369 = scmp.ne.s32.totalorder %s361, %s364
      %p370 = scmp.eq.s32.totalorder %s78, 0
      %p371 = por %p369, %p370
      %p372 = scmp.ne.s32.totalorder %s361, %s364
      %p373 = scmp.eq.s32.totalorder %s83, 1
      %p374 = por %p372, %p373
      %p375 = scmp.ne.s32.totalorder %s364, %s365
      %p376 = scmp.eq.s32.totalorder %s83, 0
      %p377 = por %p375, %p376
      %p378 = scmp.ne.s32.totalorder %s364, %s365
      %p379 = scmp.eq.s32.totalorder %s84, 1
      %p380 = por %p378, %p379
      %p382 = scmp.ne.s32.totalorder %s365, %s381
      %p383 = scmp.eq.s32.totalorder %s84, 0
      %p384 = por %p382, %p383
      %s385 = ssub.s32 %s86, %s93
      %p386 = scmp.eq.s32.totalorder %s385, 0
      %s388 = sadd.s32 %s387, 1
      %s389 = scalar_select %p386, %s387, %s388
      %p392 = pneg %p386
      %p393 = scmp.eq.s32.totalorder %s78, 1
      %p394 = por %p392, %p393
      %p395 = scmp.ne.s32.totalorder %s387, %s390
      %p396 = scmp.eq.s32.totalorder %s78, 0
      %p397 = por %p395, %p396
      %p398 = scmp.ne.s32.totalorder %s387, %s390
      %p399 = scmp.eq.s32.totalorder %s83, 1
      %p400 = por %p398, %p399
      %p401 = scmp.ne.s32.totalorder %s390, %s391
      %p402 = scmp.eq.s32.totalorder %s83, 0
      %p403 = por %p401, %p402
      %p404 = scmp.ne.s32.totalorder %s390, %s391
      %p405 = scmp.eq.s32.totalorder %s84, 1
      %p406 = por %p404, %p405
      %p408 = scmp.ne.s32.totalorder %s391, %s407
      %p409 = scmp.eq.s32.totalorder %s84, 0
      %p410 = por %p408, %p409
      %s411 = ssub.s32 %s86, %s93
      %p412 = scmp.eq.s32.totalorder %s411, 0
      %s414 = sadd.s32 %s413, 1
      %s415 = scalar_select %p412, %s413, %s414
      %p418 = pneg %p412
      %p419 = scmp.eq.s32.totalorder %s78, 1
      %p420 = por %p418, %p419
      %p421 = scmp.ne.s32.totalorder %s413, %s416
      %p422 = scmp.eq.s32.totalorder %s78, 0
      %p423 = por %p421, %p422
      %p424 = scmp.ne.s32.totalorder %s413, %s416
      %p425 = scmp.eq.s32.totalorder %s83, 1
      %p426 = por %p424, %p425
      %p427 = scmp.ne.s32.totalorder %s416, %s417
      %p428 = scmp.eq.s32.totalorder %s83, 0
      %p429 = por %p427, %p428
      %p430 = scmp.ne.s32.totalorder %s416, %s417
      %p431 = scmp.eq.s32.totalorder %s84, 1
      %p432 = por %p430, %p431
      %p434 = scmp.ne.s32.totalorder %s417, %s433
      %p435 = scmp.eq.s32.totalorder %s84, 0
      %p436 = por %p434, %p435
      %s437 = ssub.s32 %s86, %s93
      %p438 = scmp.eq.s32.totalorder %s437, 0
      %s440 = sadd.s32 %s439, 1
      %s441 = scalar_select %p438, %s439, %s440
      %p444 = pneg %p438
      %p445 = scmp.eq.s32.totalorder %s78, 1
      %p446 = por %p444, %p445
      %p447 = scmp.ne.s32.totalorder %s439, %s442
      %p448 = scmp.eq.s32.totalorder %s78, 0
      %p449 = por %p447, %p448
      %p450 = scmp.ne.s32.totalorder %s439, %s442
      %p451 = scmp.eq.s32.totalorder %s83, 1
      %p452 = por %p450, %p451
      %p453 = scmp.ne.s32.totalorder %s442, %s443
      %p454 = scmp.eq.s32.totalorder %s83, 0
      %p455 = por %p453, %p454
      %p456 = scmp.ne.s32.totalorder %s442, %s443
      %p457 = scmp.eq.s32.totalorder %s84, 1
      %p458 = por %p456, %p457
      %p460 = scmp.ne.s32.totalorder %s443, %s459
      %p461 = scmp.eq.s32.totalorder %s84, 0
      %p462 = por %p460, %p461
      %s463 = ssub.s32 %s86, %s93
      %p464 = scmp.eq.s32.totalorder %s463, 0
      %s466 = sadd.s32 %s465, 1
      %s467 = scalar_select %p464, %s465, %s466
      %p470 = pneg %p464
      %p471 = scmp.eq.s32.totalorder %s78, 1
      %p472 = por %p470, %p471
      %p473 = scmp.ne.s32.totalorder %s465, %s468
      %p474 = scmp.eq.s32.totalorder %s78, 0
      %p475 = por %p473, %p474
      %p476 = scmp.ne.s32.totalorder %s465, %s468
      %p477 = scmp.eq.s32.totalorder %s83, 1
      %p478 = por %p476, %p477
      %p479 = scmp.ne.s32.totalorder %s468, %s469
      %p480 = scmp.eq.s32.totalorder %s83, 0
      %p481 = por %p479, %p480
      %p482 = scmp.ne.s32.totalorder %s468, %s469
      %p483 = scmp.eq.s32.totalorder %s84, 1
      %p484 = por %p482, %p483
      %p486 = scmp.ne.s32.totalorder %s469, %s485
      %p487 = scmp.eq.s32.totalorder %s84, 0
      %p488 = por %p486, %p487
      %s489 = ssub.s32 %s86, %s93
      %p490 = scmp.eq.s32.totalorder %s489, 0
      %s492 = sadd.s32 %s491, 1
      %s493 = scalar_select %p490, %s491, %s492
      %p496 = pneg %p490
      %p497 = scmp.eq.s32.totalorder %s78, 1
      %p498 = por %p496, %p497
      %p499 = scmp.ne.s32.totalorder %s491, %s494
      %p500 = scmp.eq.s32.totalorder %s78, 0
      %p501 = por %p499, %p500
      %p502 = scmp.ne.s32.totalorder %s491, %s494
      %p503 = scmp.eq.s32.totalorder %s83, 1
      %p504 = por %p502, %p503
      %p505 = scmp.ne.s32.totalorder %s494, %s495
      %p506 = scmp.eq.s32.totalorder %s83, 0
      %p507 = por %p505, %p506
      %p508 = scmp.ne.s32.totalorder %s494, %s495
      %p509 = scmp.eq.s32.totalorder %s84, 1
      %p510 = por %p508, %p509
      %p512 = scmp.ne.s32.totalorder %s495, %s511
      %p513 = scmp.eq.s32.totalorder %s84, 0
      %p514 = por %p512, %p513
      %s515 = ssub.s32 %s86, %s93
      %p516 = scmp.eq.s32.totalorder %s515, 0
      %s518 = sadd.s32 %s517, 1
      %s519 = scalar_select %p516, %s517, %s518
      %p522 = pneg %p516
      %p523 = scmp.eq.s32.totalorder %s78, 1
      %p524 = por %p522, %p523
      %p525 = scmp.ne.s32.totalorder %s517, %s520
      %p526 = scmp.eq.s32.totalorder %s78, 0
      %p527 = por %p525, %p526
      %p528 = scmp.ne.s32.totalorder %s517, %s520
      %p529 = scmp.eq.s32.totalorder %s83, 1
      %p530 = por %p528, %p529
      %p531 = scmp.ne.s32.totalorder %s520, %s521
      %p532 = scmp.eq.s32.totalorder %s83, 0
      %p533 = por %p531, %p532
      %p534 = scmp.ne.s32.totalorder %s520, %s521
      %p535 = scmp.eq.s32.totalorder %s84, 1
      %p536 = por %p534, %p535
      %p538 = scmp.ne.s32.totalorder %s521, %s537
      %p539 = scmp.eq.s32.totalorder %s84, 0
      %p540 = por %p538, %p539
      %s541 = ssub.s32 %s86, %s93
      %p542 = scmp.eq.s32.totalorder %s541, 0
      %s544 = sadd.s32 %s543, 1
      %s545 = scalar_select %p542, %s543, %s544
      %p548 = pneg %p542
      %p549 = scmp.eq.s32.totalorder %s78, 1
      %p550 = por %p548, %p549
      %p551 = scmp.ne.s32.totalorder %s543, %s546
      %p552 = scmp.eq.s32.totalorder %s78, 0
      %p553 = por %p551, %p552
      %p554 = scmp.ne.s32.totalorder %s543, %s546
      %p555 = scmp.eq.s32.totalorder %s83, 1
      %p556 = por %p554, %p555
      %p557 = scmp.ne.s32.totalorder %s546, %s547
      %p558 = scmp.eq.s32.totalorder %s83, 0
      %p559 = por %p557, %p558
      %p560 = scmp.ne.s32.totalorder %s546, %s547
      %p561 = scmp.eq.s32.totalorder %s84, 1
      %p562 = por %p560, %p561
      %p564 = scmp.ne.s32.totalorder %s547, %s563
      %p565 = scmp.eq.s32.totalorder %s84, 0
      %p566 = por %p564, %p565
      %s567 = ssub.s32 %s86, %s93
      %p568 = scmp.eq.s32.totalorder %s567, 0
      %s570 = sadd.s32 %s569, 1
      %s571 = scalar_select %p568, %s569, %s570
      %p574 = pneg %p568
      %p575 = scmp.eq.s32.totalorder %s78, 1
      %p576 = por %p574, %p575
      %p577 = scmp.ne.s32.totalorder %s569, %s572
      %p578 = scmp.eq.s32.totalorder %s78, 0
      %p579 = por %p577, %p578
      %p580 = scmp.ne.s32.totalorder %s569, %s572
      %p581 = scmp.eq.s32.totalorder %s83, 1
      %p582 = por %p580, %p581
      %p583 = scmp.ne.s32.totalorder %s572, %s573
      %p584 = scmp.eq.s32.totalorder %s83, 0
      %p585 = por %p583, %p584
      %p586 = scmp.ne.s32.totalorder %s572, %s573
      %p587 = scmp.eq.s32.totalorder %s84, 1
      %p588 = por %p586, %p587
      %p590 = scmp.ne.s32.totalorder %s573, %s589
      %p591 = scmp.eq.s32.totalorder %s84, 0
      %p592 = por %p590, %p591
      %s593 = ssub.s32 %s86, %s93
      %p594 = scmp.eq.s32.totalorder %s593, 0
      %s596 = sadd.s32 %s595, 1
      %s597 = scalar_select %p594, %s595, %s596
      %p600 = pneg %p594
      %p601 = scmp.eq.s32.totalorder %s78, 1
      %p602 = por %p600, %p601
      %p603 = scmp.ne.s32.totalorder %s595, %s598
      %p604 = scmp.eq.s32.totalorder %s78, 0
      %p605 = por %p603, %p604
      %p606 = scmp.ne.s32.totalorder %s595, %s598
      %p607 = scmp.eq.s32.totalorder %s83, 1
      %p608 = por %p606, %p607
      %p609 = scmp.ne.s32.totalorder %s598, %s599
      %p610 = scmp.eq.s32.totalorder %s83, 0
      %p611 = por %p609, %p610
      %p612 = scmp.ne.s32.totalorder %s598, %s599
      %p613 = scmp.eq.s32.totalorder %s84, 1
      %p614 = por %p612, %p613
      %p616 = scmp.ne.s32.totalorder %s599, %s615
      %p617 = scmp.eq.s32.totalorder %s84, 0
      %p618 = por %p616, %p617
      %s619 = ssub.s32 %s86, %s93
      %p620 = scmp.eq.s32.totalorder %s619, 0
      %s622 = sadd.s32 %s621, 1
      %s623 = scalar_select %p620, %s621, %s622
      %p626 = pneg %p620
      %p627 = scmp.eq.s32.totalorder %s78, 1
      %p628 = por %p626, %p627
      %p629 = scmp.ne.s32.totalorder %s621, %s624
      %p630 = scmp.eq.s32.totalorder %s78, 0
      %p631 = por %p629, %p630
      %p632 = scmp.ne.s32.totalorder %s621, %s624
      %p633 = scmp.eq.s32.totalorder %s83, 1
      %p634 = por %p632, %p633
      %p635 = scmp.ne.s32.totalorder %s624, %s625
      %p636 = scmp.eq.s32.totalorder %s83, 0
      %p637 = por %p635, %p636
      %p638 = scmp.ne.s32.totalorder %s624, %s625
      %p639 = scmp.eq.s32.totalorder %s84, 1
      %p640 = por %p638, %p639
      %p642 = scmp.ne.s32.totalorder %s625, %s641
      %p643 = scmp.eq.s32.totalorder %s84, 0
      %p644 = por %p642, %p643
      %s645 = ssub.s32 %s86, %s93
      %p646 = scmp.eq.s32.totalorder %s645, 0
      %s648 = sadd.s32 %s647, 1
      %s649 = scalar_select %p646, %s647, %s648
      %p652 = pneg %p646
      %p653 = scmp.eq.s32.totalorder %s78, 1
      %p654 = por %p652, %p653
      %p655 = scmp.ne.s32.totalorder %s647, %s650
      %p656 = scmp.eq.s32.totalorder %s78, 0
      %p657 = por %p655, %p656
      %p658 = scmp.ne.s32.totalorder %s647, %s650
      %p659 = scmp.eq.s32.totalorder %s83, 1
      %p660 = por %p658, %p659
      %p661 = scmp.ne.s32.totalorder %s650, %s651
      %p662 = scmp.eq.s32.totalorder %s83, 0
      %p663 = por %p661, %p662
      %p664 = scmp.ne.s32.totalorder %s650, %s651
      %p665 = scmp.eq.s32.totalorder %s84, 1
      %p666 = por %p664, %p665
      %p668 = scmp.ne.s32.totalorder %s651, %s667
      %p669 = scmp.eq.s32.totalorder %s84, 0
      %p670 = por %p668, %p669
      %s671 = ssub.s32 %s86, %s93
      %p672 = scmp.eq.s32.totalorder %s671, 0
      %s674 = sadd.s32 %s673, 1
      %s675 = scalar_select %p672, %s673, %s674
      %p678 = pneg %p672
      %p679 = scmp.eq.s32.totalorder %s78, 1
      %p680 = por %p678, %p679
      %p681 = scmp.ne.s32.totalorder %s673, %s676
      %p682 = scmp.eq.s32.totalorder %s78, 0
      %p683 = por %p681, %p682
      %p684 = scmp.ne.s32.totalorder %s673, %s676
      %p685 = scmp.eq.s32.totalorder %s83, 1
      %p686 = por %p684, %p685
      %p687 = scmp.ne.s32.totalorder %s676, %s677
      %p688 = scmp.eq.s32.totalorder %s83, 0
      %p689 = por %p687, %p688
      %p690 = scmp.ne.s32.totalorder %s676, %s677
      %p691 = scmp.eq.s32.totalorder %s84, 1
      %p692 = por %p690, %p691
      %p694 = scmp.ne.s32.totalorder %s677, %s693
      %p695 = scmp.eq.s32.totalorder %s84, 0
      %p696 = por %p694, %p695
      %s697 = ssub.s32 %s86, %s93
      %p698 = scmp.eq.s32.totalorder %s697, 0
      %s700 = sadd.s32 %s699, 1
      %s701 = scalar_select %p698, %s699, %s700
      %p704 = pneg %p698
      %p705 = scmp.eq.s32.totalorder %s78, 1
      %p706 = por %p704, %p705
      %p707 = scmp.ne.s32.totalorder %s699, %s702
      %p708 = scmp.eq.s32.totalorder %s78, 0
      %p709 = por %p707, %p708
      %p710 = scmp.ne.s32.totalorder %s699, %s702
      %p711 = scmp.eq.s32.totalorder %s83, 1
      %p712 = por %p710, %p711
      %p713 = scmp.ne.s32.totalorder %s702, %s703
      %p714 = scmp.eq.s32.totalorder %s83, 0
      %p715 = por %p713, %p714
      %p716 = scmp.ne.s32.totalorder %s702, %s703
      %p717 = scmp.eq.s32.totalorder %s84, 1
      %p718 = por %p716, %p717
      %p720 = scmp.ne.s32.totalorder %s703, %s719
      %p721 = scmp.eq.s32.totalorder %s84, 0
      %p722 = por %p720, %p721
      %s723 = ssub.s32 %s86, %s93
      %p724 = scmp.eq.s32.totalorder %s723, 0
      %s726 = sadd.s32 %s725, 1
      %s727 = scalar_select %p724, %s725, %s726
      %p730 = pneg %p724
      %p731 = scmp.eq.s32.totalorder %s78, 1
      %p732 = por %p730, %p731
      %p733 = scmp.ne.s32.totalorder %s725, %s728
      %p734 = scmp.eq.s32.totalorder %s78, 0
      %p735 = por %p733, %p734
      %p736 = scmp.ne.s32.totalorder %s725, %s728
      %p737 = scmp.eq.s32.totalorder %s83, 1
      %p738 = por %p736, %p737
      %p739 = scmp.ne.s32.totalorder %s728, %s729
      %p740 = scmp.eq.s32.totalorder %s83, 0
      %p741 = por %p739, %p740
      %p742 = scmp.ne.s32.totalorder %s728, %s729
      %p743 = scmp.eq.s32.totalorder %s84, 1
      %p744 = por %p742, %p743
      %p746 = scmp.ne.s32.totalorder %s729, %s745
      %p747 = scmp.eq.s32.totalorder %s84, 0
      %p748 = por %p746, %p747
      %s749 = ssub.s32 %s86, %s93
      %p750 = scmp.eq.s32.totalorder %s749, 0
      %s752 = sadd.s32 %s751, 1
      %s753 = scalar_select %p750, %s751, %s752
      %p756 = pneg %p750
      %p757 = scmp.eq.s32.totalorder %s78, 1
      %p758 = por %p756, %p757
      %p759 = scmp.ne.s32.totalorder %s751, %s754
      %p760 = scmp.eq.s32.totalorder %s78, 0
      %p761 = por %p759, %p760
      %p762 = scmp.ne.s32.totalorder %s751, %s754
      %p763 = scmp.eq.s32.totalorder %s83, 1
      %p764 = por %p762, %p763
      %p765 = scmp.ne.s32.totalorder %s754, %s755
      %p766 = scmp.eq.s32.totalorder %s83, 0
      %p767 = por %p765, %p766
      %p768 = scmp.ne.s32.totalorder %s754, %s755
      %p769 = scmp.eq.s32.totalorder %s84, 1
      %p770 = por %p768, %p769
      %p772 = scmp.ne.s32.totalorder %s755, %s771
      %p773 = scmp.eq.s32.totalorder %s84, 0
      %p774 = por %p772, %p773
      %s775 = ssub.s32 %s86, %s93
      %p776 = scmp.eq.s32.totalorder %s775, 0
      %s778 = sadd.s32 %s777, 1
      %s779 = scalar_select %p776, %s777, %s778
      %p782 = pneg %p776
      %p783 = scmp.eq.s32.totalorder %s78, 1
      %p784 = por %p782, %p783
      %p785 = scmp.ne.s32.totalorder %s777, %s780
      %p786 = scmp.eq.s32.totalorder %s78, 0
      %p787 = por %p785, %p786
      %p788 = scmp.ne.s32.totalorder %s777, %s780
      %p789 = scmp.eq.s32.totalorder %s83, 1
      %p790 = por %p788, %p789
      %p791 = scmp.ne.s32.totalorder %s780, %s781
      %p792 = scmp.eq.s32.totalorder %s83, 0
      %p793 = por %p791, %p792
      %p794 = scmp.ne.s32.totalorder %s780, %s781
      %p795 = scmp.eq.s32.totalorder %s84, 1
      %p796 = por %p794, %p795
      %p798 = scmp.ne.s32.totalorder %s781, %s797
      %p799 = scmp.eq.s32.totalorder %s84, 0
      %p800 = por %p798, %p799
      %s802 = sadd.s32 %s801, 1
      %p805 = scmp.eq.s32.totalorder %s78, 1
      %p806 = scmp.ne.s32.totalorder %s801, %s803
      %p807 = scmp.eq.s32.totalorder %s78, 0
      %p808 = por %p806, %p807
      %p809 = scmp.ne.s32.totalorder %s801, %s803
      %p810 = scmp.eq.s32.totalorder %s83, 1
      %p811 = por %p809, %p810
      %p812 = scmp.ne.s32.totalorder %s803, %s804
      %p813 = scmp.eq.s32.totalorder %s83, 0
      %p814 = por %p812, %p813
      %p815 = scmp.ne.s32.totalorder %s803, %s804
      %p816 = scmp.eq.s32.totalorder %s84, 1
      %p817 = por %p815, %p816
      %p819 = scmp.ne.s32.totalorder %s804, %s818
      %p820 = scmp.eq.s32.totalorder %s84, 0
      %p821 = por %p819, %p820
      %s823 = sadd.s32 %s822, 1
      %p826 = scmp.eq.s32.totalorder %s78, 1
      %p827 = scmp.ne.s32.totalorder %s822, %s824
      %p828 = scmp.eq.s32.totalorder %s78, 0
      %p829 = por %p827, %p828
      %p830 = scmp.ne.s32.totalorder %s822, %s824
      %p831 = scmp.eq.s32.totalorder %s83, 1
      %p832 = por %p830, %p831
      %p833 = scmp.ne.s32.totalorder %s824, %s825
      %p834 = scmp.eq.s32.totalorder %s83, 0
      %p835 = por %p833, %p834
      %p836 = scmp.ne.s32.totalorder %s824, %s825
      %p837 = scmp.eq.s32.totalorder %s84, 1
      %p838 = por %p836, %p837
      %p840 = scmp.ne.s32.totalorder %s825, %s839
      %p841 = scmp.eq.s32.totalorder %s84, 0
      %p842 = por %p840, %p841
      %s844 = sadd.s32 %s843, 1
      %p847 = scmp.eq.s32.totalorder %s78, 1
      %p848 = scmp.ne.s32.totalorder %s843, %s845
      %p849 = scmp.eq.s32.totalorder %s78, 0
      %p850 = por %p848, %p849
      %p851 = scmp.ne.s32.totalorder %s843, %s845
      %p852 = scmp.eq.s32.totalorder %s83, 1
      %p853 = por %p851, %p852
      %p854 = scmp.ne.s32.totalorder %s845, %s846
      %p855 = scmp.eq.s32.totalorder %s83, 0
      %p856 = por %p854, %p855
      %p857 = scmp.ne.s32.totalorder %s845, %s846
      %p858 = scmp.eq.s32.totalorder %s84, 1
      %p859 = por %p857, %p858
      %p861 = scmp.ne.s32.totalorder %s846, %s860
      %p862 = scmp.eq.s32.totalorder %s84, 0
      %p863 = por %p861, %p862
      %s865 = sadd.s32 %s864, 1
      %p868 = scmp.eq.s32.totalorder %s78, 1
      %p869 = scmp.ne.s32.totalorder %s864, %s866
      %p870 = scmp.eq.s32.totalorder %s78, 0
      %p871 = por %p869, %p870
      %p872 = scmp.ne.s32.totalorder %s864, %s866
      %p873 = scmp.eq.s32.totalorder %s83, 1
      %p874 = por %p872, %p873
      %p875 = scmp.ne.s32.totalorder %s866, %s867
      %p876 = scmp.eq.s32.totalorder %s83, 0
      %p877 = por %p875, %p876
      %p878 = scmp.ne.s32.totalorder %s866, %s867
      %p879 = scmp.eq.s32.totalorder %s84, 1
      %p880 = por %p878, %p879
      %p882 = scmp.ne.s32.totalorder %s867, %s881
      %p883 = scmp.eq.s32.totalorder %s84, 0
      %p884 = por %p882, %p883
      %s885 = ssub.s32 %s85, %s97
      %p886 = scmp.eq.s32.totalorder %s885, 0
      %s888 = sadd.s32 %s887, 1
      %s889 = scalar_select %p886, %s887, %s888
      %p892 = pneg %p886
      %p893 = scmp.eq.s32.totalorder %s78, 1
      %p894 = por %p892, %p893
      %p895 = scmp.ne.s32.totalorder %s887, %s890
      %p896 = scmp.eq.s32.totalorder %s78, 0
      %p897 = por %p895, %p896
      %p898 = scmp.ne.s32.totalorder %s887, %s890
      %p899 = scmp.eq.s32.totalorder %s83, 1
      %p900 = por %p898, %p899
      %p901 = scmp.ne.s32.totalorder %s890, %s891
      %p902 = scmp.eq.s32.totalorder %s83, 0
      %p903 = por %p901, %p902
      %p904 = scmp.ne.s32.totalorder %s890, %s891
      %p905 = scmp.eq.s32.totalorder %s84, 1
      %p906 = por %p904, %p905
      %p908 = scmp.ne.s32.totalorder %s891, %s907
      %p909 = scmp.eq.s32.totalorder %s84, 0
      %p910 = por %p908, %p909
      %p911 = scmp.le.s32.totalorder 1, %s78
      %p912 = scmp.lt.s32.totalorder %s78, 3
      %p913 = pnand %p911, %p912
      %p914 = pneg %p913
      // Predicated region
      $region9: #{tpu_custom_call.1} parent=5 // pred_check
        _
      $region10: #{tpu_custom_call.1} parent=5 // pred_check_branch
        %916 = sbr.rel (%p913) target = $region12
      $region11: #{tpu_custom_call.1} parent=5 // pred_region
        %s917 = ssub.s32 %s78, 1
        // Predicated region
        $region13: #{tpu_custom_call.1} parent=11 // pred_check
          %p918 = pneg %p116
        $region14: #{tpu_custom_call.1} parent=11 // pred_check_branch
          %920 = sbr.rel (%p918) target = $region16
        $region15: #{tpu_custom_call.1} parent=11 // pred_region
          %s921 = smul.u32 2, %s87
          %p922 = scmp.lt.s32.totalorder %s921, 1
          %s923 = scalar_select %p922, %s921, 1
          %s924 = smul.addr %s923, 8
          %s925 = scalar_lea.vmem %s1, %s924
          %s926 = smul.u32 2, %s87
        $region16: #{tpu_custom_call.1} parent=11 // pred_fallthru
          _
        // Predicated region
        $region17: #{tpu_custom_call.1} parent=11 // pred_check
          %p927 = pneg %p137
        $region18: #{tpu_custom_call.1} parent=11 // pred_check_branch
          %929 = sbr.rel (%p927) target = $region20
        $region19: #{tpu_custom_call.1} parent=11 // pred_region
          %s931 = ssub.s32 32, 32
          %932 = vsyncadd [#allocation4], %s931
          %s934 = sshll.u32 [#allocation3], 4
          %s935 = int_to_ptr.vmem [resolvable:$true] %s934
          %937 = dma.hbm_to_vmem [thread:$0]  %s3, 32, %s935, [#allocation4]
        $region20: #{tpu_custom_call.1} parent=11 // pred_fallthru
          _
        // Predicated region
        $region21: #{tpu_custom_call.1} parent=11 // pred_check
          %p938 = pneg %p158
        $region22: #{tpu_custom_call.1} parent=11 // pred_check_branch
          %940 = sbr.rel (%p938) target = $region24
        $region23: #{tpu_custom_call.1} parent=11 // pred_region
          %s942 = ssub.s32 32, 32
          %943 = vsyncadd [#allocation7], %s942
          %s945 = sshll.u32 [#allocation6], 4
          %s946 = int_to_ptr.vmem [resolvable:$true] %s945
          %948 = dma.hbm_to_vmem [thread:$0]  %s5, 32, %s946, [#allocation7]
        $region24: #{tpu_custom_call.1} parent=11 // pred_fallthru
          _
        // Predicated region
        $region25: #{tpu_custom_call.1} parent=11 // pred_check
          %p949 = pneg %p179
        $region26: #{tpu_custom_call.1} parent=11 // pred_check_branch
          %951 = sbr.rel (%p949) target = $region28
        $region27: #{tpu_custom_call.1} parent=11 // pred_region
          %s953 = ssub.s32 16, 16
          %954 = vsyncadd [#allocation7], %s953
          %s956 = sshll.u32 [#allocation8], 4
          %s957 = int_to_ptr.vmem [resolvable:$true] %s956
          %959 = dma.hbm_to_vmem [thread:$0]  %s7, 16, %s957, [#allocation7]
        $region28: #{tpu_custom_call.1} parent=11 // pred_fallthru
          _
        // Predicated region
        $region29: #{tpu_custom_call.1} parent=11 // pred_check
          %p960 = pneg %p200
        $region30: #{tpu_custom_call.1} parent=11 // pred_check_branch
          %962 = sbr.rel (%p960) target = $region32
        $region31: #{tpu_custom_call.1} parent=11 // pred_region
          %s964 = ssub.s32 64, 64
          %965 = vsyncadd [#allocation10], %s964
          %s967 = sshll.u32 [#allocation9], 4
          %s968 = int_to_ptr.vmem [resolvable:$true] %s967
          %970 = dma.hbm_to_vmem [thread:$0]  %s9, 64, %s968, [#allocation10]
        $region32: #{tpu_custom_call.1} parent=11 // pred_fallthru
          _
        // Predicated region
        $region33: #{tpu_custom_call.1} parent=11 // pred_check
          %p971 = pneg %p221
        $region34: #{tpu_custom_call.1} parent=11 // pred_check_branch
          %973 = sbr.rel (%p971) target = $region36
        $region35: #{tpu_custom_call.1} parent=11 // pred_region
          %s975 = ssub.s32 16, 16
          %976 = vsyncadd [#allocation10], %s975
          %s978 = sshll.u32 [#allocation11], 4
          %s979 = int_to_ptr.vmem [resolvable:$true] %s978
          %981 = dma.hbm_to_vmem [thread:$0]  %s11, 16, %s979, [#allocation10]
        $region36: #{tpu_custom_call.1} parent=11 // pred_fallthru
          _
        // Predicated region
        $region37: #{tpu_custom_call.1} parent=11 // pred_check
          %p982 = pneg %p814
        $region38: #{tpu_custom_call.1} parent=11 // pred_check_branch
          %984 = sbr.rel (%p982) target = $region40
        $region39: #{tpu_custom_call.1} parent=11 // pred_region
          _
        $region40: #{tpu_custom_call.1} parent=11 // pred_fallthru
          _
        // Predicated region
        $region41: #{tpu_custom_call.1} parent=11 // pred_check
          %p985 = pneg %p835
        $region42: #{tpu_custom_call.1} parent=11 // pred_check_branch
          %987 = sbr.rel (%p985) target = $region44
        $region43: #{tpu_custom_call.1} parent=11 // pred_region
          _
        $region44: #{tpu_custom_call.1} parent=11 // pred_fallthru
          _
        // Predicated region
        $region45: #{tpu_custom_call.1} parent=11 // pred_check
          %p988 = pneg %p856
        $region46: #{tpu_custom_call.1} parent=11 // pred_check_branch
          %990 = sbr.rel (%p988) target = $region48
        $region47: #{tpu_custom_call.1} parent=11 // pred_region
          _
        $region48: #{tpu_custom_call.1} parent=11 // pred_fallthru
          _
        // Predicated region
        $region49: #{tpu_custom_call.1} parent=11 // pred_check
          %p991 = pneg %p877
        $region50: #{tpu_custom_call.1} parent=11 // pred_check_branch
          %993 = sbr.rel (%p991) target = $region52
        $region51: #{tpu_custom_call.1} parent=11 // pred_region
          _
        $region52: #{tpu_custom_call.1} parent=11 // pred_fallthru
          _
      $region12: #{tpu_custom_call.1} parent=5 // pred_fallthru
        _
      %p994 = scmp.lt.s32.totalorder %s78, 2
      // Predicated region
      $region53: #{tpu_custom_call.1} parent=5 // pred_check
        %p995 = pneg %p994
      $region54: #{tpu_custom_call.1} parent=5 // pred_check_branch
        %997 = sbr.rel (%p995) target = $region56
      $region55: #{tpu_custom_call.1} parent=5 // pred_region
        // Predicated region
        $region57: #{tpu_custom_call.1} parent=55 // pred_check
          %p998 = pneg %p241
        $region58: #{tpu_custom_call.1} parent=55 // pred_check_branch
          %1000 = sbr.rel (%p998) target = $region60
        $region59: #{tpu_custom_call.1} parent=55 // pred_region
          %p1001 = scmp.lt.s32.totalorder %s86, 1
          %s1002 = scalar_select %p1001, %s86, 1
          %s1003 = smul.addr %s1002, 4
          %s1004 = smul.addr %s1003, 4
          %s1005 = scalar_lea.vmem %s13, %s1004
        $region60: #{tpu_custom_call.1} parent=55 // pred_fallthru
          _
        // Predicated region
        $region61: #{tpu_custom_call.1} parent=55 // pred_check
          %p1006 = pneg %p267
        $region62: #{tpu_custom_call.1} parent=55 // pred_check_branch
          %1008 = sbr.rel (%p1006) target = $region64
        $region63: #{tpu_custom_call.1} parent=55 // pred_region
          %p1009 = scmp.lt.s32.totalorder %s86, 1
          %s1010 = scalar_select %p1009, %s86, 1
          %s1011 = scalar_lea.vmem %s15, %s1010
        $region64: #{tpu_custom_call.1} parent=55 // pred_fallthru
          _
        // Predicated region
        $region65: #{tpu_custom_call.1} parent=55 // pred_check
          %p1012 = pneg %p293
        $region66: #{tpu_custom_call.1} parent=55 // pred_check_branch
          %1014 = sbr.rel (%p1012) target = $region68
        $region67: #{tpu_custom_call.1} parent=55 // pred_region
          %p1015 = scmp.lt.s32.totalorder %s86, 1
          %s1016 = scalar_select %p1015, %s86, 1
          %s1017 = smul.addr %s1016, 4
          %s1018 = smul.addr %s1017, 4
          %s1019 = scalar_lea.vmem %s17, %s1018
        $region68: #{tpu_custom_call.1} parent=55 // pred_fallthru
          _
        // Predicated region
        $region69: #{tpu_custom_call.1} parent=55 // pred_check
          %p1020 = pneg %p319
        $region70: #{tpu_custom_call.1} parent=55 // pred_check_branch
          %1022 = sbr.rel (%p1020) target = $region72
        $region71: #{tpu_custom_call.1} parent=55 // pred_region
          %s1023 = sand.u32 %s78, 1
          %s1024 = scalar_lea.sflag [#allocation13], %s1023
          %s1025 = sand.u32 %s309, 1
          %s1026 = scalar_lea.vmem [#allocation12], %s1025
          %s1028 = ssub.s32 16, 16
          %1029 = vsyncadd %s1024, %s1028
          %s1030 = smul.addr %s86, 16
          %s1031 = scalar_lea.hbm %s19, %s1030
          %s1033 = sshll.u32 %s1026, 4
          %s1034 = int_to_ptr.vmem [resolvable:$true] %s1033
          %1036 = dma.hbm_to_vmem [thread:$0]  %s1031, 16, %s1034, %s1024
        $region72: #{tpu_custom_call.1} parent=55 // pred_fallthru
          _
        // Predicated region
        $region73: #{tpu_custom_call.1} parent=55 // pred_check
          %p1037 = pneg %p345
        $region74: #{tpu_custom_call.1} parent=55 // pred_check_branch
          %1039 = sbr.rel (%p1037) target = $region76
        $region75: #{tpu_custom_call.1} parent=55 // pred_region
          %p1040 = scmp.lt.s32.totalorder %s86, 1
          %s1041 = scalar_select %p1040, %s86, 1
          %s1042 = smul.addr %s1041, 4
          %s1043 = smul.addr %s1042, 4
          %s1044 = scalar_lea.vmem %s21, %s1043
        $region76: #{tpu_custom_call.1} parent=55 // pred_fallthru
          _
        // Predicated region
        $region77: #{tpu_custom_call.1} parent=55 // pred_check
          %p1045 = pneg %p371
        $region78: #{tpu_custom_call.1} parent=55 // pred_check_branch
          %1047 = sbr.rel (%p1045) target = $region80
        $region79: #{tpu_custom_call.1} parent=55 // pred_region
          %s1048 = sand.u32 %s78, 1
          %s1049 = scalar_lea.sflag [#allocation13], %s1048
          %s1050 = sand.u32 %s361, 1
          %s1051 = scalar_lea.vmem [#allocation14], %s1050
          %s1053 = ssub.s32 16, 16
          %1054 = vsyncadd %s1049, %s1053
          %s1055 = smul.addr %s86, 16
          %s1056 = scalar_lea.hbm %s23, %s1055
          %s1058 = sshll.u32 %s1051, 4
          %s1059 = int_to_ptr.vmem [resolvable:$true] %s1058
          %1061 = dma.hbm_to_vmem [thread:$0]  %s1056, 16, %s1059, %s1049
        $region80: #{tpu_custom_call.1} parent=55 // pred_fallthru
          _
        // Predicated region
        $region81: #{tpu_custom_call.1} parent=55 // pred_check
          %p1062 = pneg %p397
        $region82: #{tpu_custom_call.1} parent=55 // pred_check_branch
          %1064 = sbr.rel (%p1062) target = $region84
        $region83: #{tpu_custom_call.1} parent=55 // pred_region
          %p1065 = scmp.lt.s32.totalorder %s86, 1
          %s1066 = scalar_select %p1065, %s86, 1
          %s1067 = smul.addr %s1066, 4
          %s1068 = smul.addr %s1067, 4
          %s1069 = scalar_lea.vmem %s25, %s1068
        $region84: #{tpu_custom_call.1} parent=55 // pred_fallthru
          _
        // Predicated region
        $region85: #{tpu_custom_call.1} parent=55 // pred_check
          %p1070 = pneg %p423
        $region86: #{tpu_custom_call.1} parent=55 // pred_check_branch
          %1072 = sbr.rel (%p1070) target = $region88
        $region87: #{tpu_custom_call.1} parent=55 // pred_region
          %p1073 = scmp.lt.s32.totalorder %s86, 1
          %s1074 = scalar_select %p1073, %s86, 1
          %s1075 = scalar_lea.vmem %s27, %s1074
        $region88: #{tpu_custom_call.1} parent=55 // pred_fallthru
          _
        // Predicated region
        $region89: #{tpu_custom_call.1} parent=55 // pred_check
          %p1076 = pneg %p449
        $region90: #{tpu_custom_call.1} parent=55 // pred_check_branch
          %1078 = sbr.rel (%p1076) target = $region92
        $region91: #{tpu_custom_call.1} parent=55 // pred_region
          %p1079 = scmp.lt.s32.totalorder %s86, 1
          %s1080 = scalar_select %p1079, %s86, 1
          %s1081 = scalar_lea.vmem %s29, %s1080
        $region92: #{tpu_custom_call.1} parent=55 // pred_fallthru
          _
        // Predicated region
        $region93: #{tpu_custom_call.1} parent=55 // pred_check
          %p1082 = pneg %p475
        $region94: #{tpu_custom_call.1} parent=55 // pred_check_branch
          %1084 = sbr.rel (%p1082) target = $region96
        $region95: #{tpu_custom_call.1} parent=55 // pred_region
          %p1085 = scmp.lt.s32.totalorder %s86, 1
          %s1086 = scalar_select %p1085, %s86, 1
          %s1087 = scalar_lea.vmem %s31, %s1086
        $region96: #{tpu_custom_call.1} parent=55 // pred_fallthru
          _
        // Predicated region
        $region97: #{tpu_custom_call.1} parent=55 // pred_check
          %p1088 = pneg %p501
        $region98: #{tpu_custom_call.1} parent=55 // pred_check_branch
          %1090 = sbr.rel (%p1088) target = $region100
        $region99: #{tpu_custom_call.1} parent=55 // pred_region
          %p1091 = scmp.lt.s32.totalorder %s86, 1
          %s1092 = scalar_select %p1091, %s86, 1
          %s1093 = smul.addr %s1092, 4
          %s1094 = smul.addr %s1093, 4
          %s1095 = scalar_lea.vmem %s33, %s1094
        $region100: #{tpu_custom_call.1} parent=55 // pred_fallthru
          _
        // Predicated region
        $region101: #{tpu_custom_call.1} parent=55 // pred_check
          %p1096 = pneg %p527
        $region102: #{tpu_custom_call.1} parent=55 // pred_check_branch
          %1098 = sbr.rel (%p1096) target = $region104
        $region103: #{tpu_custom_call.1} parent=55 // pred_region
          %p1099 = scmp.lt.s32.totalorder %s86, 1
          %s1100 = scalar_select %p1099, %s86, 1
          %s1101 = scalar_lea.vmem %s35, %s1100
        $region104: #{tpu_custom_call.1} parent=55 // pred_fallthru
          _
        // Predicated region
        $region105: #{tpu_custom_call.1} parent=55 // pred_check
          %p1102 = pneg %p553
        $region106: #{tpu_custom_call.1} parent=55 // pred_check_branch
          %1104 = sbr.rel (%p1102) target = $region108
        $region107: #{tpu_custom_call.1} parent=55 // pred_region
          %p1105 = scmp.lt.s32.totalorder %s86, 1
          %s1106 = scalar_select %p1105, %s86, 1
          %s1107 = smul.addr %s1106, 8
          %s1108 = smul.addr %s1107, 4
          %s1109 = scalar_lea.vmem %s37, %s1108
        $region108: #{tpu_custom_call.1} parent=55 // pred_fallthru
          _
        // Predicated region
        $region109: #{tpu_custom_call.1} parent=55 // pred_check
          %p1110 = pneg %p579
        $region110: #{tpu_custom_call.1} parent=55 // pred_check_branch
          %1112 = sbr.rel (%p1110) target = $region112
        $region111: #{tpu_custom_call.1} parent=55 // pred_region
          %p1113 = scmp.lt.s32.totalorder %s86, 1
          %s1114 = scalar_select %p1113, %s86, 1
          %s1115 = scalar_lea.vmem %s39, %s1114
        $region112: #{tpu_custom_call.1} parent=55 // pred_fallthru
          _
        // Predicated region
        $region113: #{tpu_custom_call.1} parent=55 // pred_check
          %p1116 = pneg %p605
        $region114: #{tpu_custom_call.1} parent=55 // pred_check_branch
          %1118 = sbr.rel (%p1116) target = $region116
        $region115: #{tpu_custom_call.1} parent=55 // pred_region
          %p1119 = scmp.lt.s32.totalorder %s86, 1
          %s1120 = scalar_select %p1119, %s86, 1
          %s1121 = scalar_lea.vmem %s41, %s1120
        $region116: #{tpu_custom_call.1} parent=55 // pred_fallthru
          _
        // Predicated region
        $region117: #{tpu_custom_call.1} parent=55 // pred_check
          %p1122 = pneg %p631
        $region118: #{tpu_custom_call.1} parent=55 // pred_check_branch
          %1124 = sbr.rel (%p1122) target = $region120
        $region119: #{tpu_custom_call.1} parent=55 // pred_region
          %p1125 = scmp.lt.s32.totalorder %s86, 1
          %s1126 = scalar_select %p1125, %s86, 1
          %s1127 = scalar_lea.vmem %s43, %s1126
        $region120: #{tpu_custom_call.1} parent=55 // pred_fallthru
          _
        // Predicated region
        $region121: #{tpu_custom_call.1} parent=55 // pred_check
          %p1128 = pneg %p657
        $region122: #{tpu_custom_call.1} parent=55 // pred_check_branch
          %1130 = sbr.rel (%p1128) target = $region124
        $region123: #{tpu_custom_call.1} parent=55 // pred_region
          %p1131 = scmp.lt.s32.totalorder %s86, 1
          %s1132 = scalar_select %p1131, %s86, 1
          %s1133 = smul.addr %s1132, 4
          %s1134 = smul.addr %s1133, 4
          %s1135 = scalar_lea.vmem %s45, %s1134
        $region124: #{tpu_custom_call.1} parent=55 // pred_fallthru
          _
        // Predicated region
        $region125: #{tpu_custom_call.1} parent=55 // pred_check
          %p1136 = pneg %p683
        $region126: #{tpu_custom_call.1} parent=55 // pred_check_branch
          %1138 = sbr.rel (%p1136) target = $region128
        $region127: #{tpu_custom_call.1} parent=55 // pred_region
          %p1139 = scmp.lt.s32.totalorder %s86, 1
          %s1140 = scalar_select %p1139, %s86, 1
          %s1141 = scalar_lea.vmem %s47, %s1140
        $region128: #{tpu_custom_call.1} parent=55 // pred_fallthru
          _
        // Predicated region
        $region129: #{tpu_custom_call.1} parent=55 // pred_check
          %p1142 = pneg %p709
        $region130: #{tpu_custom_call.1} parent=55 // pred_check_branch
          %1144 = sbr.rel (%p1142) target = $region132
        $region131: #{tpu_custom_call.1} parent=55 // pred_region
          %p1145 = scmp.lt.s32.totalorder %s86, 1
          %s1146 = scalar_select %p1145, %s86, 1
          %s1147 = smul.addr %s1146, 8
          %s1148 = smul.addr %s1147, 4
          %s1149 = scalar_lea.vmem %s49, %s1148
        $region132: #{tpu_custom_call.1} parent=55 // pred_fallthru
          _
        // Predicated region
        $region133: #{tpu_custom_call.1} parent=55 // pred_check
          %p1150 = pneg %p735
        $region134: #{tpu_custom_call.1} parent=55 // pred_check_branch
          %1152 = sbr.rel (%p1150) target = $region136
        $region135: #{tpu_custom_call.1} parent=55 // pred_region
          %p1153 = scmp.lt.s32.totalorder %s86, 1
          %s1154 = scalar_select %p1153, %s86, 1
          %s1155 = scalar_lea.vmem %s51, %s1154
        $region136: #{tpu_custom_call.1} parent=55 // pred_fallthru
          _
        // Predicated region
        $region137: #{tpu_custom_call.1} parent=55 // pred_check
          %p1156 = pneg %p761
        $region138: #{tpu_custom_call.1} parent=55 // pred_check_branch
          %1158 = sbr.rel (%p1156) target = $region140
        $region139: #{tpu_custom_call.1} parent=55 // pred_region
          %p1159 = scmp.lt.s32.totalorder %s86, 1
          %s1160 = scalar_select %p1159, %s86, 1
          %s1161 = scalar_lea.vmem %s53, %s1160
        $region140: #{tpu_custom_call.1} parent=55 // pred_fallthru
          _
        // Predicated region
        $region141: #{tpu_custom_call.1} parent=55 // pred_check
          %p1162 = pneg %p787
        $region142: #{tpu_custom_call.1} parent=55 // pred_check_branch
          %1164 = sbr.rel (%p1162) target = $region144
        $region143: #{tpu_custom_call.1} parent=55 // pred_region
          %p1165 = scmp.lt.s32.totalorder %s86, 1
          %s1166 = scalar_select %p1165, %s86, 1
          %s1167 = scalar_lea.vmem %s55, %s1166
        $region144: #{tpu_custom_call.1} parent=55 // pred_fallthru
          _
      $region56: #{tpu_custom_call.1} parent=5 // pred_fallthru
        _
      %p1168 = scmp.le.s32.totalorder 1, %s78
      %p1169 = scmp.lt.s32.totalorder %s78, 3
      %p1170 = pnand %p1168, %p1169
      %p1171 = pneg %p1170
      // Predicated region
      $region145: #{tpu_custom_call.1} parent=5 // pred_check
        _
      $region146: #{tpu_custom_call.1} parent=5 // pred_check_branch
        %1173 = sbr.rel (%p1170) target = $region148
      $region147: #{tpu_custom_call.1} parent=5 // pred_region
        %s1174 = ssub.s32 %s78, 1
        // Predicated region
        $region149: #{tpu_custom_call.1} parent=147 // pred_check
          %p1175 = pneg %p137
        $region150: #{tpu_custom_call.1} parent=147 // pred_check_branch
          %1177 = sbr.rel (%p1175) target = $region152
        $region151: #{tpu_custom_call.1} parent=147 // pred_region
          %1178 = dma.done [#allocation4], 32
        $region152: #{tpu_custom_call.1} parent=147 // pred_fallthru
          _
        // Predicated region
        $region153: #{tpu_custom_call.1} parent=147 // pred_check
          %p1179 = pneg %p158
        $region154: #{tpu_custom_call.1} parent=147 // pred_check_branch
          %1181 = sbr.rel (%p1179) target = $region156
        $region155: #{tpu_custom_call.1} parent=147 // pred_region
          %1182 = dma.done [#allocation7], 32
        $region156: #{tpu_custom_call.1} parent=147 // pred_fallthru
          _
        // Predicated region
        $region157: #{tpu_custom_call.1} parent=147 // pred_check
          %p1183 = pneg %p179
        $region158: #{tpu_custom_call.1} parent=147 // pred_check_branch
          %1185 = sbr.rel (%p1183) target = $region160
        $region159: #{tpu_custom_call.1} parent=147 // pred_region
          %1186 = dma.done [#allocation7], 16
        $region160: #{tpu_custom_call.1} parent=147 // pred_fallthru
          _
        // Predicated region
        $region161: #{tpu_custom_call.1} parent=147 // pred_check
          %p1187 = pneg %p200
        $region162: #{tpu_custom_call.1} parent=147 // pred_check_branch
          %1189 = sbr.rel (%p1187) target = $region164
        $region163: #{tpu_custom_call.1} parent=147 // pred_region
          %1190 = dma.done [#allocation10], 64
        $region164: #{tpu_custom_call.1} parent=147 // pred_fallthru
          _
        // Predicated region
        $region165: #{tpu_custom_call.1} parent=147 // pred_check
          %p1191 = pneg %p221
        $region166: #{tpu_custom_call.1} parent=147 // pred_check_branch
          %1193 = sbr.rel (%p1191) target = $region168
        $region167: #{tpu_custom_call.1} parent=147 // pred_region
          %1194 = dma.done [#allocation10], 16
        $region168: #{tpu_custom_call.1} parent=147 // pred_fallthru
          _
        %s1195 = sand.u32 %s83, 1
        %s1196 = scalar_lea.sflag [#allocation13], %s1195
        %s1197 = sand.u32 %s312, 1
        %s1198 = scalar_lea.vmem [#allocation12], %s1197
        // Predicated region
        $region169: #{tpu_custom_call.1} parent=147 // pred_check
          %p1199 = pneg %p325
        $region170: #{tpu_custom_call.1} parent=147 // pred_check_branch
          %1201 = sbr.rel (%p1199) target = $region172
        $region171: #{tpu_custom_call.1} parent=147 // pred_region
          %1202 = dma.done %s1196, 16
        $region172: #{tpu_custom_call.1} parent=147 // pred_fallthru
          _
        %s1203 = sand.u32 %s83, 1
        %s1204 = scalar_lea.sflag [#allocation13], %s1203
        %s1205 = sand.u32 %s364, 1
        %s1206 = scalar_lea.vmem [#allocation14], %s1205
        // Predicated region
        $region173: #{tpu_custom_call.1} parent=147 // pred_check
          %p1207 = pneg %p377
        $region174: #{tpu_custom_call.1} parent=147 // pred_check_branch
          %1209 = sbr.rel (%p1207) target = $region176
        $region175: #{tpu_custom_call.1} parent=147 // pred_region
          %1210 = dma.done %s1204, 16
        $region176: #{tpu_custom_call.1} parent=147 // pred_fallthru
          _
        %s1211 = smul.u32 2, %s87
        %p1212 = scmp.lt.s32.totalorder %s1211, 1
        %s1213 = scalar_select %p1212, %s1211, 1
        %s1214 = smul.addr %s1213, 8
        %s1215 = scalar_lea.vmem %s1, %s1214
        %p1216 = pneg %p116
        %p1217 = pneg %p113
        %p1218 = pneg %p137
        %p1219 = pneg %p134
        %p1220 = pneg %p158
        %p1221 = pneg %p155
        %p1222 = pneg %p179
        %p1223 = pneg %p176
        %p1224 = pneg %p200
        %p1225 = pneg %p197
        %p1226 = pneg %p221
        %p1227 = pneg %p218
        %p1228 = scmp.lt.s32.totalorder %s88, 1
        %s1229 = scalar_select %p1228, %s88, 1
        %s1230 = smul.addr %s1229, 4
        %s1231 = smul.addr %s1230, 4
        %s1232 = scalar_lea.vmem %s13, %s1231
        %p1233 = pneg %p247
        %p1234 = pneg %p244
        %p1235 = scmp.lt.s32.totalorder %s88, 1
        %s1236 = scalar_select %p1235, %s88, 1
        %s1237 = scalar_lea.vmem %s15, %s1236
        %p1238 = pneg %p273
        %p1239 = pneg %p270
        %p1240 = scmp.lt.s32.totalorder %s88, 1
        %s1241 = scalar_select %p1240, %s88, 1
        %s1242 = smul.addr %s1241, 4
        %s1243 = smul.addr %s1242, 4
        %s1244 = scalar_lea.vmem %s17, %s1243
        %p1245 = pneg %p299
        %p1246 = pneg %p296
        %s1247 = sand.u32 %s83, 1
        %s1248 = scalar_lea.sflag [#allocation13], %s1247
        %s1249 = sand.u32 %s312, 1
        %s1250 = scalar_lea.vmem [#allocation12], %s1249
        %p1251 = pneg %p325
        %p1252 = pneg %p322
        %p1253 = scmp.lt.s32.totalorder %s88, 1
        %s1254 = scalar_select %p1253, %s88, 1
        %s1255 = smul.addr %s1254, 4
        %s1256 = smul.addr %s1255, 4
        %s1257 = scalar_lea.vmem %s21, %s1256
        %p1258 = pneg %p351
        %p1259 = pneg %p348
        %s1260 = sand.u32 %s83, 1
        %s1261 = scalar_lea.sflag [#allocation13], %s1260
        %s1262 = sand.u32 %s364, 1
        %s1263 = scalar_lea.vmem [#allocation14], %s1262
        %p1264 = pneg %p377
        %p1265 = pneg %p374
        %p1266 = scmp.lt.s32.totalorder %s88, 1
        %s1267 = scalar_select %p1266, %s88, 1
        %s1268 = smul.addr %s1267, 4
        %s1269 = smul.addr %s1268, 4
        %s1270 = scalar_lea.vmem %s25, %s1269
        %p1271 = pneg %p403
        %p1272 = pneg %p400
        %p1273 = scmp.lt.s32.totalorder %s88, 1
        %s1274 = scalar_select %p1273, %s88, 1
        %s1275 = scalar_lea.vmem %s27, %s1274
        %p1276 = pneg %p429
        %p1277 = pneg %p426
        %p1278 = scmp.lt.s32.totalorder %s88, 1
        %s1279 = scalar_select %p1278, %s88, 1
        %s1280 = scalar_lea.vmem %s29, %s1279
        %p1281 = pneg %p455
        %p1282 = pneg %p452
        %p1283 = scmp.lt.s32.totalorder %s88, 1
        %s1284 = scalar_select %p1283, %s88, 1
        %s1285 = scalar_lea.vmem %s31, %s1284
        %p1286 = pneg %p481
        %p1287 = pneg %p478
        %p1288 = scmp.lt.s32.totalorder %s88, 1
        %s1289 = scalar_select %p1288, %s88, 1
        %s1290 = smul.addr %s1289, 4
        %s1291 = smul.addr %s1290, 4
        %s1292 = scalar_lea.vmem %s33, %s1291
        %p1293 = pneg %p507
        %p1294 = pneg %p504
        %p1295 = scmp.lt.s32.totalorder %s88, 1
        %s1296 = scalar_select %p1295, %s88, 1
        %s1297 = scalar_lea.vmem %s35, %s1296
        %p1298 = pneg %p533
        %p1299 = pneg %p530
        %p1300 = scmp.lt.s32.totalorder %s88, 1
        %s1301 = scalar_select %p1300, %s88, 1
        %s1302 = smul.addr %s1301, 8
        %s1303 = smul.addr %s1302, 4
        %s1304 = scalar_lea.vmem %s37, %s1303
        %p1305 = pneg %p559
        %p1306 = pneg %p556
        %p1307 = scmp.lt.s32.totalorder %s88, 1
        %s1308 = scalar_select %p1307, %s88, 1
        %s1309 = scalar_lea.vmem %s39, %s1308
        %p1310 = pneg %p585
        %p1311 = pneg %p582
        %p1312 = scmp.lt.s32.totalorder %s88, 1
        %s1313 = scalar_select %p1312, %s88, 1
        %s1314 = scalar_lea.vmem %s41, %s1313
        %p1315 = pneg %p611
        %p1316 = pneg %p608
        %p1317 = scmp.lt.s32.totalorder %s88, 1
        %s1318 = scalar_select %p1317, %s88, 1
        %s1319 = scalar_lea.vmem %s43, %s1318
        %p1320 = pneg %p637
        %p1321 = pneg %p634
        %p1322 = scmp.lt.s32.totalorder %s88, 1
        %s1323 = scalar_select %p1322, %s88, 1
        %s1324 = smul.addr %s1323, 4
        %s1325 = smul.addr %s1324, 4
        %s1326 = scalar_lea.vmem %s45, %s1325
        %p1327 = pneg %p663
        %p1328 = pneg %p660
        %p1329 = scmp.lt.s32.totalorder %s88, 1
        %s1330 = scalar_select %p1329, %s88, 1
        %s1331 = scalar_lea.vmem %s47, %s1330
        %p1332 = pneg %p689
        %p1333 = pneg %p686
        %p1334 = scmp.lt.s32.totalorder %s88, 1
        %s1335 = scalar_select %p1334, %s88, 1
        %s1336 = smul.addr %s1335, 8
        %s1337 = smul.addr %s1336, 4
        %s1338 = scalar_lea.vmem %s49, %s1337
        %p1339 = pneg %p715
        %p1340 = pneg %p712
        %p1341 = scmp.lt.s32.totalorder %s88, 1
        %s1342 = scalar_select %p1341, %s88, 1
        %s1343 = scalar_lea.vmem %s51, %s1342
        %p1344 = pneg %p741
        %p1345 = pneg %p738
        %p1346 = scmp.lt.s32.totalorder %s88, 1
        %s1347 = scalar_select %p1346, %s88, 1
        %s1348 = scalar_lea.vmem %s53, %s1347
        %p1349 = pneg %p767
        %p1350 = pneg %p764
        %p1351 = scmp.lt.s32.totalorder %s88, 1
        %s1352 = scalar_select %p1351, %s88, 1
        %s1353 = scalar_lea.vmem %s55, %s1352
        %p1354 = pneg %p793
        %p1355 = pneg %p790
        %p1356 = pneg %p814
        %p1357 = pneg %p811
        %p1358 = pneg %p835
        %p1359 = pneg %p832
        %p1360 = pneg %p856
        %p1361 = pneg %p853
        %p1362 = pneg %p877
        %p1363 = pneg %p874
        %p1364 = pneg %p903
        %p1365 = pneg %p900
        %s1366 = smul.u32 2, %s87
        %p1367 = scmp.lt.s32.totalorder %s1366, 1
        %s1368 = scalar_select %p1367, %s1366, 1
        %s1369 = smul.addr %s1368, 8
        %s1370 = scalar_lea.vmem %s1, %s1369
        %s1371 = smul.u32 2, %s87
        %p1372 = scmp.lt.s32.totalorder %s88, 1
        %s1373 = scalar_select %p1372, %s88, 1
        %s1374 = smul.addr %s1373, 4
        %s1375 = smul.addr %s1374, 4
        %s1376 = scalar_lea.vmem %s13, %s1375
        %p1377 = scmp.lt.s32.totalorder %s88, 1
        %s1378 = scalar_select %p1377, %s88, 1
        %s1379 = scalar_lea.vmem %s15, %s1378
        %p1380 = scmp.lt.s32.totalorder %s88, 1
        %s1381 = scalar_select %p1380, %s88, 1
        %s1382 = smul.addr %s1381, 4
        %s1383 = smul.addr %s1382, 4
        %s1384 = scalar_lea.vmem %s17, %s1383
        %p1385 = scmp.lt.s32.totalorder %s88, 1
        %s1386 = scalar_select %p1385, %s88, 1
        %s1387 = smul.addr %s1386, 4
        %s1388 = smul.addr %s1387, 4
        %s1389 = scalar_lea.vmem %s21, %s1388
        %p1390 = scmp.lt.s32.totalorder %s88, 1
        %s1391 = scalar_select %p1390, %s88, 1
        %s1392 = smul.addr %s1391, 4
        %s1393 = smul.addr %s1392, 4
        %s1394 = scalar_lea.vmem %s25, %s1393
        %p1395 = scmp.lt.s32.totalorder %s88, 1
        %s1396 = scalar_select %p1395, %s88, 1
        %s1397 = scalar_lea.vmem %s27, %s1396
        %p1398 = scmp.lt.s32.totalorder %s88, 1
        %s1399 = scalar_select %p1398, %s88, 1
        %s1400 = scalar_lea.vmem %s29, %s1399
        %p1401 = scmp.lt.s32.totalorder %s88, 1
        %s1402 = scalar_select %p1401, %s88, 1
        %s1403 = scalar_lea.vmem %s31, %s1402
        %p1404 = scmp.lt.s32.totalorder %s88, 1
        %s1405 = scalar_select %p1404, %s88, 1
        %s1406 = smul.addr %s1405, 4
        %s1407 = smul.addr %s1406, 4
        %s1408 = scalar_lea.vmem %s33, %s1407
        %p1409 = scmp.lt.s32.totalorder %s88, 1
        %s1410 = scalar_select %p1409, %s88, 1
        %s1411 = scalar_lea.vmem %s35, %s1410
        %p1412 = scmp.lt.s32.totalorder %s88, 1
        %s1413 = scalar_select %p1412, %s88, 1
        %s1414 = smul.addr %s1413, 8
        %s1415 = smul.addr %s1414, 4
        %s1416 = scalar_lea.vmem %s37, %s1415
        %p1417 = scmp.lt.s32.totalorder %s88, 1
        %s1418 = scalar_select %p1417, %s88, 1
        %s1419 = scalar_lea.vmem %s39, %s1418
        %p1420 = scmp.lt.s32.totalorder %s88, 1
        %s1421 = scalar_select %p1420, %s88, 1
        %s1422 = scalar_lea.vmem %s41, %s1421
        %p1423 = scmp.lt.s32.totalorder %s88, 1
        %s1424 = scalar_select %p1423, %s88, 1
        %s1425 = scalar_lea.vmem %s43, %s1424
        %p1426 = scmp.lt.s32.totalorder %s88, 1
        %s1427 = scalar_select %p1426, %s88, 1
        %s1428 = smul.addr %s1427, 4
        %s1429 = smul.addr %s1428, 4
        %s1430 = scalar_lea.vmem %s45, %s1429
        %p1431 = scmp.lt.s32.totalorder %s88, 1
        %s1432 = scalar_select %p1431, %s88, 1
        %s1433 = scalar_lea.vmem %s47, %s1432
        %p1434 = scmp.lt.s32.totalorder %s88, 1
        %s1435 = scalar_select %p1434, %s88, 1
        %s1436 = smul.addr %s1435, 8
        %s1437 = smul.addr %s1436, 4
        %s1438 = scalar_lea.vmem %s49, %s1437
        %p1439 = scmp.lt.s32.totalorder %s88, 1
        %s1440 = scalar_select %p1439, %s88, 1
        %s1441 = scalar_lea.vmem %s51, %s1440
        %p1442 = scmp.lt.s32.totalorder %s88, 1
        %s1443 = scalar_select %p1442, %s88, 1
        %s1444 = scalar_lea.vmem %s53, %s1443
        %p1445 = scmp.lt.s32.totalorder %s88, 1
        %s1446 = scalar_select %p1445, %s88, 1
        %s1447 = scalar_lea.vmem %s55, %s1446
        %p1449 = scmp.eq.s32.totalorder %s88, 0
        // Predicated region
        $region177: #{tpu_custom_call.1} parent=147 // pred_check
          %p1450 = pneg %p1449
        $region178: #{tpu_custom_call.1} parent=147 // pred_check_branch
          %1452 = sbr.rel (%p1450) target = $region180
        $region179: #{tpu_custom_call.1} parent=147 // pred_region
          %v1453 = vld [vmem:[%s1370] sm:$0xff]
          %v1454 = vld [vmem:[%s1370 + $0x8] sm:$0xff]
          %v1455 = vpack.c.bf16 %v1454, %v1453
          %v1456 = vld [vmem:[#allocation6] sm:$0x3]
          %v1457 = vld [vmem:[#allocation8] sm:$0x1]
          %v1459 = vlaneseq
          %v1460 = vshrl.u32 %v1459, 7
          %v1461 = vsub.s32 0, %v1460
          %v1462 = vrot.slane %v1457, %v1461
          %vm1464 = vcmask 31744
          %v1466 = vsel %vm1464, %v1455, 0
          %vm1468 = vcmask 1041408
          %v1470 = vsel %vm1468, %v1456, 0
          %1472 = vmatprep.subr.bf16.mxu0 0
          %1473 = vmatpush1.bf16.msra.mxu0 %v1470
          %1474 = vmatprep.subr.bf16.mxu0 0
          %1475 = vmatpush1.bf16.msra.mxu0 0
          %1476 = vmatprep.subr.bf16.mxu0 0
          %1477 = vmatpush1.bf16.msra.mxu0 0
          %1478 = vmatprep.subr.bf16.mxu0 0
          %1479 = vmatpush1.bf16.msra.mxu0 0
          %1480 = vmatprep.subr.bf16.mxu0 0
          %1481 = vmatpush1.bf16.msra.mxu0 0
          %1482 = vmatprep.subr.bf16.mxu0 0
          %1483 = vmatpush1.bf16.msra.mxu0 0
          %1484 = vmatprep.subr.bf16.mxu0 0
          %1485 = vmatpush1.bf16.msra.mxu0 0
          %1486 = vmatprep.subr.bf16.mxu0 0
          %1487 = vmatpush1.bf16.msra.mxu0 0
          %1488 = vmatprep.subr.bf16.mxu0 0
          %1489 = vmatpush1.bf16.msra.mxu0 0
          %1490 = vmatprep.subr.bf16.mxu0 0
          %1491 = vmatpush1.bf16.msra.mxu0 0
          %1492 = vmatprep.subr.bf16.mxu0 0
          %1493 = vmatpush1.bf16.msra.mxu0 0
          %1494 = vmatprep.subr.bf16.mxu0 0
          %1495 = vmatpush1.bf16.msra.mxu0 0
          %1496 = vmatprep.subr.bf16.mxu0 0
          %1497 = vmatpush1.bf16.msra.mxu0 0
          %1498 = vmatprep.subr.bf16.mxu0 0
          %1499 = vmatpush1.bf16.msra.mxu0 0
          %1500 = vmatprep.subr.bf16.mxu0 0
          %1501 = vmatpush1.bf16.msra.mxu0 0
          %1502 = vmatprep.subr.bf16.mxu0 0
          %1503 = vmatpush1.bf16.msra.mxu0 0
          %1504 = vmatprep.mubr.bf16.mxu0 0
          %1505 = vmatmul.mubr.bf16.gmra.mrb[0].mxu0 %v1466
          %v1506 = vpop.f32.mrb[0].mxu0
          %v1507 = vadd.f32 %v1462, %v1506
          %v1508 = vpop.f32.mrb[0].mxu0
          %v1509 = vpop.f32.mrb[0].mxu0
          %v1510 = vadd.f32 %v1462, %v1509
          %v1511 = vpop.f32.mrb[0].mxu0
          %1512 = vdwg.mxu0
          %v1513 = vand.u32 2147483647, %v1507
          %vm1514 = vcmp.le.f32.partialorder %v1513, 0.7853982
          %vm1515 = vcmp.lt.s32.totalorder %v1507, 0
          %v1516 = vand.u32 %v1507, 2139095040
          %v1517 = vshrl.u32 %v1516, 23
          %v1518 = vsub.s32 %v1517, 127
          %v1519 = vand.u32 2147483647, %v1507
          %v1520 = vand.u32 %v1519, 8388607
          %v1521 = vor.u32 %v1520, 8388608
          %v1522 = vsub.s32 0, %v1521
          %v1523 = vadd.s32 %v1518, 1
          %vm1524 = vcmp.gt.s32.totalorder %v1523, 0
          %v1525 = vsel %vm1524, %v1523, 0
          %v1526 = vshrl.u32 %v1525, 5
          %v1527 = vand.u32 %v1525, 31
          %v1528 = vsub.s32 32, %v1527
          %v1529 = vshrl.u32 683565275, %v1528
          %v1530 = vshll.u32 683565275, %v1527
          %v1531 = vshrl.u32 2475754826, %v1528
          %v1532 = vor.u32 %v1530, %v1531
          %v1533 = vshll.u32 2475754826, %v1527
          %v1534 = vshrl.u32 2131351028, %v1528
          %v1535 = vor.u32 %v1533, %v1534
          %v1536 = vshll.u32 2131351028, %v1527
          %v1537 = vshrl.u32 2102212464, %v1528
          %v1538 = vor.u32 %v1536, %v1537
          %v1539 = vshll.u32 2102212464, %v1527
          %v1540 = vshrl.u32 920167782, %v1528
          %v1541 = vor.u32 %v1539, %v1540
          %v1542 = vshll.u32 920167782, %v1527
          %v1543 = vshrl.u32 1326507024, %v1528
          %v1544 = vor.u32 %v1542, %v1543
          %vm1545 = vcmp.lt.s32.totalorder %v1526, 1
          %vm1546 = vcmp.lt.s32.totalorder %v1526, 2
          %vm1547 = vcmp.lt.s32.totalorder %v1526, 3
          %vm1548 = vcmp.lt.s32.totalorder %v1526, 4
          %v1549 = vsel %vm1545, %v1529, %v1532
          %v1550 = vsel %vm1548, %v1538, 2102212464
          %v1551 = vsel %vm1547, %v1535, %v1550
          %v1552 = vsel %vm1546, %v1549, %v1551
          %v1553 = vsel %vm1545, %v1532, %v1535
          %v1554 = vsel %vm1548, %v1541, 920167782
          %v1555 = vsel %vm1547, %v1538, %v1554
          %v1556 = vsel %vm1546, %v1553, %v1555
          %v1557 = vsel %vm1545, %v1535, %v1538
          %v1558 = vsel %vm1548, %v1544, 1326507024
          %v1559 = vsel %vm1547, %v1541, %v1558
          %v1560 = vsel %vm1546, %v1557, %v1559
          %v1561 = vshll.u32 %v1521, 8
          %v1562 = vmul.u32.u64.compose %v1561, %v1560
          %v1563 = vextract.low.u32 %v1562
          %v1564 = vextract.high.u32 %v1562
          %v1565 = vmul.u32.u64.compose %v1561, %v1556
          %v1566 = vextract.low.u32 %v1565
          %v1567 = vextract.high.u32 %v1565
          %v1568 = vmul.u32 %v1561, %v1552
          %v1569 = vadd.s32 %v1564, %v1566
          %vm1570 = vc.u32 %v1564, %v1566
          %v1571 = vadd.s32 %v1567, 1
          %v1572 = vsel %vm1570, %v1571, %v1567
          %v1573 = vadd.s32 %v1568, %v1572
          %v1574 = vadd.s32 %v1573, 536870912
          %v1575 = vshrl.u32 %v1574, 30
          %v1576 = vshll.u32 %v1575, 30
          %v1577 = vsub.s32 %v1573, %v1576
          %vm1578 = vcmp.lt.s32.totalorder %v1577, 0
          %v1579 = vsub.s32 0, %v1577
          %v1580 = vsel %vm1578, %v1579, %v1577
          %v1581 = vclz %v1580
          %v1582 = vsub.s32 %v1581, 2
          %vm1583 = vcmp.gt.s32.totalorder 0, %v1582
          %v1584 = vsel %vm1583, 0, %v1582
          %v1585 = vsub.s32 32, %v1584
          %v1586 = vshll.u32 %v1577, %v1584
          %v1587 = vshrl.u32 %v1569, %v1585
          %v1588 = vor.u32 %v1586, %v1587
          %v1589 = vsub.s32 4294967266, %v1584
          %v1590 = vadd.s32 %v1589, 127
          %v1591 = vshll.u32 %v1590, 23
          %v1592 = vor.u32 4788187, %v1591
          %v1593 = vand.u32 2147483647, %v1592
          %v1595 = vcvt.s32.f32 %v1588
          %v1596 = vmul.f32 %v1595, %v1593
          %v1597 = vxor.u32 %v1596, 2147483648
          %v1598 = vsel %vm1515, %v1597, %v1596
          %v1599 = vsub.s32 4, %v1575
          %v1600 = vsel %vm1515, %v1599, %v1575
          %v1601 = vsel %vm1514, %v1507, %v1598
          %v1602 = vsel %vm1514, 0, %v1600
          %v1603 = vcosq.f32.pop %v1601
          %v1604 = vsinq.f32.pop %v1601
          %vm1605 = vweird.f32 %v1507
          %v1606 = vadd.s32 %v1602, 3
          %v1607 = vand.u32 %v1606, 3
          %vm1608 = vcmp.lt.s32.totalorder %v1607, 2
          %vm1609 = vcmp.eq.s32.totalorder %v1607, 0
          %v1610 = vxor.u32 %v1604, 2147483648
          %v1611 = vsel %vm1609, %v1603, %v1610
          %vm1612 = vcmp.eq.s32.totalorder %v1607, 2
          %v1613 = vxor.u32 %v1603, 2147483648
          %v1614 = vsel %vm1612, %v1613, %v1604
          %v1615 = vsel %vm1608, %v1611, %v1614
          %v1616 = vsel %vm1605, nan, %v1615
          %v1617 = vand.u32 2147483647, %v1510
          %vm1618 = vcmp.le.f32.partialorder %v1617, 0.7853982
          %vm1619 = vcmp.lt.s32.totalorder %v1510, 0
          %v1620 = vand.u32 %v1510, 2139095040
          %v1621 = vshrl.u32 %v1620, 23
          %v1622 = vsub.s32 %v1621, 127
          %v1623 = vand.u32 2147483647, %v1510
          %v1624 = vand.u32 %v1623, 8388607
          %v1625 = vor.u32 %v1624, 8388608
          %v1626 = vsub.s32 0, %v1625
          %v1627 = vadd.s32 %v1622, 1
          %vm1628 = vcmp.gt.s32.totalorder %v1627, 0
          %v1629 = vsel %vm1628, %v1627, 0
          %v1630 = vshrl.u32 %v1629, 5
          %v1631 = vand.u32 %v1629, 31
          %v1632 = vsub.s32 32, %v1631
          %v1633 = vshrl.u32 683565275, %v1632
          %v1634 = vshll.u32 683565275, %v1631
          %v1635 = vshrl.u32 2475754826, %v1632
          %v1636 = vor.u32 %v1634, %v1635
          %v1637 = vshll.u32 2475754826, %v1631
          %v1638 = vshrl.u32 2131351028, %v1632
          %v1639 = vor.u32 %v1637, %v1638
          %v1640 = vshll.u32 2131351028, %v1631
          %v1641 = vshrl.u32 2102212464, %v1632
          %v1642 = vor.u32 %v1640, %v1641
          %v1643 = vshll.u32 2102212464, %v1631
          %v1644 = vshrl.u32 920167782, %v1632
          %v1645 = vor.u32 %v1643, %v1644
          %v1646 = vshll.u32 920167782, %v1631
          %v1647 = vshrl.u32 1326507024, %v1632
          %v1648 = vor.u32 %v1646, %v1647
          %vm1649 = vcmp.lt.s32.totalorder %v1630, 1
          %vm1650 = vcmp.lt.s32.totalorder %v1630, 2
          %vm1651 = vcmp.lt.s32.totalorder %v1630, 3
          %vm1652 = vcmp.lt.s32.totalorder %v1630, 4
          %v1653 = vsel %vm1649, %v1633, %v1636
          %v1654 = vsel %vm1652, %v1642, 2102212464
          %v1655 = vsel %vm1651, %v1639, %v1654
          %v1656 = vsel %vm1650, %v1653, %v1655
          %v1657 = vsel %vm1649, %v1636, %v1639
          %v1658 = vsel %vm1652, %v1645, 920167782
          %v1659 = vsel %vm1651, %v1642, %v1658
          %v1660 = vsel %vm1650, %v1657, %v1659
          %v1661 = vsel %vm1649, %v1639, %v1642
          %v1662 = vsel %vm1652, %v1648, 1326507024
          %v1663 = vsel %vm1651, %v1645, %v1662
          %v1664 = vsel %vm1650, %v1661, %v1663
          %v1665 = vshll.u32 %v1625, 8
          %v1666 = vmul.u32.u64.compose %v1665, %v1664
          %v1667 = vextract.low.u32 %v1666
          %v1668 = vextract.high.u32 %v1666
          %v1669 = vmul.u32.u64.compose %v1665, %v1660
          %v1670 = vextract.low.u32 %v1669
          %v1671 = vextract.high.u32 %v1669
          %v1672 = vmul.u32 %v1665, %v1656
          %v1673 = vadd.s32 %v1668, %v1670
          %vm1674 = vc.u32 %v1668, %v1670
          %v1675 = vadd.s32 %v1671, 1
          %v1676 = vsel %vm1674, %v1675, %v1671
          %v1677 = vadd.s32 %v1672, %v1676
          %v1678 = vadd.s32 %v1677, 536870912
          %v1679 = vshrl.u32 %v1678, 30
          %v1680 = vshll.u32 %v1679, 30
          %v1681 = vsub.s32 %v1677, %v1680
          %vm1682 = vcmp.lt.s32.totalorder %v1681, 0
          %v1683 = vsub.s32 0, %v1681
          %v1684 = vsel %vm1682, %v1683, %v1681
          %v1685 = vclz %v1684
          %v1686 = vsub.s32 %v1685, 2
          %vm1687 = vcmp.gt.s32.totalorder 0, %v1686
          %v1688 = vsel %vm1687, 0, %v1686
          %v1689 = vsub.s32 32, %v1688
          %v1690 = vshll.u32 %v1681, %v1688
          %v1691 = vshrl.u32 %v1673, %v1689
          %v1692 = vor.u32 %v1690, %v1691
          %v1693 = vsub.s32 4294967266, %v1688
          %v1694 = vadd.s32 %v1693, 127
          %v1695 = vshll.u32 %v1694, 23
          %v1696 = vor.u32 4788187, %v1695
          %v1697 = vand.u32 2147483647, %v1696
          %v1699 = vcvt.s32.f32 %v1692
          %v1700 = vmul.f32 %v1699, %v1697
          %v1701 = vxor.u32 %v1700, 2147483648
          %v1702 = vsel %vm1619, %v1701, %v1700
          %v1703 = vsub.s32 4, %v1679
          %v1704 = vsel %vm1619, %v1703, %v1679
          %v1705 = vsel %vm1618, %v1510, %v1702
          %v1706 = vsel %vm1618, 0, %v1704
          %v1707 = vcosq.f32.pop %v1705
          %v1708 = vsinq.f32.pop %v1705
          %vm1709 = vweird.f32 %v1510
          %v1710 = vadd.s32 %v1706, 3
          %v1711 = vand.u32 %v1710, 3
          %vm1712 = vcmp.lt.s32.totalorder %v1711, 2
          %vm1713 = vcmp.eq.s32.totalorder %v1711, 0
          %v1714 = vxor.u32 %v1708, 2147483648
          %v1715 = vsel %vm1713, %v1707, %v1714
          %vm1716 = vcmp.eq.s32.totalorder %v1711, 2
          %v1717 = vxor.u32 %v1707, 2147483648
          %v1718 = vsel %vm1716, %v1717, %v1708
          %v1719 = vsel %vm1712, %v1715, %v1718
          %v1720 = vsel %vm1709, nan, %v1719
          %v1721 = vld [vmem:[#allocation3] sm:$0x3]
          %v1722 = vld [vmem:[#allocation9] sm:$0xf]
          %v1723 = vpack.c.bf16 %v1720, %v1616
          %vm1724 = vcmask 56320
          %v1726 = vsel %vm1724, %v1723, 0
          %vm1728 = vcmask 1042432
          %vm1729 = vcmask 1043456
          %v1730 = vsel %vm1728, 4294967295, 65535
          %v1731 = vsel %vm1729, %v1730, 0
          %v1733 = vand.u32 %v1722, %v1731
          %1735 = vmatprep.subr.bf16.mxu0 0
          %1736 = vmatpush1.bf16.msra.mxu0 %v1733
          %1737 = vmatprep.subr.bf16.mxu0 0
          %1738 = vmatpush1.bf16.msra.mxu0 0
          %1739 = vmatprep.subr.bf16.mxu0 0
          %1740 = vmatpush1.bf16.msra.mxu0 0
          %1741 = vmatprep.subr.bf16.mxu0 0
          %1742 = vmatpush1.bf16.msra.mxu0 0
          %1743 = vmatprep.subr.bf16.mxu0 0
          %1744 = vmatpush1.bf16.msra.mxu0 0
          %1745 = vmatprep.subr.bf16.mxu0 0
          %1746 = vmatpush1.bf16.msra.mxu0 0
          %1747 = vmatprep.subr.bf16.mxu0 0
          %1748 = vmatpush1.bf16.msra.mxu0 0
          %1749 = vmatprep.subr.bf16.mxu0 0
          %1750 = vmatpush1.bf16.msra.mxu0 0
          %1751 = vmatprep.subr.bf16.mxu0 0
          %1752 = vmatpush1.bf16.msra.mxu0 0
          %1753 = vmatprep.subr.bf16.mxu0 0
          %1754 = vmatpush1.bf16.msra.mxu0 0
          %1755 = vmatprep.subr.bf16.mxu0 0
          %1756 = vmatpush1.bf16.msra.mxu0 0
          %1757 = vmatprep.subr.bf16.mxu0 0
          %1758 = vmatpush1.bf16.msra.mxu0 0
          %1759 = vmatprep.subr.bf16.mxu0 0
          %1760 = vmatpush1.bf16.msra.mxu0 0
          %1761 = vmatprep.subr.bf16.mxu0 0
          %1762 = vmatpush1.bf16.msra.mxu0 0
          %1763 = vmatprep.subr.bf16.mxu0 0
          %1764 = vmatpush1.bf16.msra.mxu0 0
          %1765 = vmatprep.subr.bf16.mxu0 0
          %1766 = vmatpush1.bf16.msra.mxu0 0
          %1767 = vmatprep.mubr.bf16.mxu0 0
          %1768 = vmatmul.mubr.bf16.gmra.mrb[0].mxu0 %v1726
          %v1769 = vpop.f32.mrb[0].mxu0
          %v1770 = vadd.f32 0.0, %v1769
          %v1771 = vpop.f32.mrb[0].mxu0
          %v1772 = vpop.f32.mrb[0].mxu0
          %v1773 = vadd.f32 0.0, %v1772
          %v1774 = vpop.f32.mrb[0].mxu0
          %1775 = vdwg.mxu0
          %v1777 = vsel %vm1468, %v1721, 0
          %1779 = vmatprep.subr.bf16.mxu0 0
          %1780 = vmatpush1.bf16.msra.mxu0 %v1777
          %1781 = vmatprep.subr.bf16.mxu0 0
          %1782 = vmatpush1.bf16.msra.mxu0 0
          %1783 = vmatprep.subr.bf16.mxu0 0
          %1784 = vmatpush1.bf16.msra.mxu0 0
          %1785 = vmatprep.subr.bf16.mxu0 0
          %1786 = vmatpush1.bf16.msra.mxu0 0
          %1787 = vmatprep.subr.bf16.mxu0 0
          %1788 = vmatpush1.bf16.msra.mxu0 0
          %1789 = vmatprep.subr.bf16.mxu0 0
          %1790 = vmatpush1.bf16.msra.mxu0 0
          %1791 = vmatprep.subr.bf16.mxu0 0
          %1792 = vmatpush1.bf16.msra.mxu0 0
          %1793 = vmatprep.subr.bf16.mxu0 0
          %1794 = vmatpush1.bf16.msra.mxu0 0
          %1795 = vmatprep.subr.bf16.mxu0 0
          %1796 = vmatpush1.bf16.msra.mxu0 0
          %1797 = vmatprep.subr.bf16.mxu0 0
          %1798 = vmatpush1.bf16.msra.mxu0 0
          %1799 = vmatprep.subr.bf16.mxu0 0
          %1800 = vmatpush1.bf16.msra.mxu0 0
          %1801 = vmatprep.subr.bf16.mxu0 0
          %1802 = vmatpush1.bf16.msra.mxu0 0
          %1803 = vmatprep.subr.bf16.mxu0 0
          %1804 = vmatpush1.bf16.msra.mxu0 0
          %1805 = vmatprep.subr.bf16.mxu0 0
          %1806 = vmatpush1.bf16.msra.mxu0 0
          %1807 = vmatprep.subr.bf16.mxu0 0
          %1808 = vmatpush1.bf16.msra.mxu0 0
          %1809 = vmatprep.subr.bf16.mxu0 0
          %1810 = vmatpush1.bf16.msra.mxu0 0
          %1811 = vmatprep.mubr.bf16.mxu0 0
          %1812 = vmatmul.mubr.bf16.gmra.mrb[0].mxu0 %v1466
          %v1813 = vpop.f32.mrb[0].mxu0
          %v1814 = vadd.f32 %v1770, %v1813
          %v1815 = vpop.f32.mrb[0].mxu0
          %v1816 = vpop.f32.mrb[0].mxu0
          %v1817 = vadd.f32 %v1773, %v1816
          %v1818 = vpop.f32.mrb[0].mxu0
          %1819 = vdwg.mxu0
          %v1820 = vld [vmem:[#allocation11] sm:$0x1]
          %v1822 = vlaneseq
          %v1823 = vshrl.u32 %v1822, 7
          %v1824 = vsub.s32 0, %v1823
          %v1825 = vrot.slane %v1820, %v1824
          %v1827 = vadd.f32 %v1814, %v1825
          %v1828 = vadd.f32 %v1817, %v1825
          %vm1829 = vcmask 261120
          %1830 = vst.msk [vmem:[#allocation2] sm:$0xff] %vm1829, %v1827
          %1831 = vst.msk [vmem:[#allocation2 + $0x8] sm:$0xff] %vm1829, %v1828
        $region180: #{tpu_custom_call.1} parent=147 // pred_fallthru
          _
        %v1832 = vld [vmem:[#allocation2] sm:$0xff]
        %v1833 = vld [vmem:[#allocation2 + $0x8] sm:$0xff]
        %v1834 = vpack.c.bf16 %v1833, %v1832
        %v1835 = vld [vmem:[%s1376] sm:$0xf]
        %v1836 = vld [vmem:[%s1376 + $0x4] sm:$0xf]
        %v1837 = vld [vmem:[%s1376 + $0x8] sm:$0xf]
        %v1838 = vld [vmem:[%s1376 + $0xc] sm:$0xf]
        %v1839 = vld [vmem:[%s1379] sm:$0x1]
        %v1841 = vlaneseq
        %v1842 = vshrl.u32 %v1841, 7
        %v1843 = vsub.s32 0, %v1842
        %v1844 = vrot.slane %v1839, %v1843
        %v1850 = vunpack.c.l.b16 %v1835
        %v1851 = vunpack.c.l.b16 %v1836
        %v1852 = vunpack.c.l.b16 %v1837
        %v1853 = vunpack.c.l.b16 %v1838
        %v1854 = vpack.c.b16 %v1851, %v1850
        %v1855 = vpack.c.b16 %v1853, %v1852
        %vm1858 = vcmask 261120
        %v1860 = vsel %vm1858, %v1834, 0
        %1862 = vmatprep.subr.bf16.mxu0 0
        %1863 = vmatpush1.bf16.msra.mxu0 %v1854
        %1864 = vmatprep.subr.bf16.mxu0 0
        %1865 = vmatpush1.bf16.msra.mxu0 %v1855
        %1866 = vmatprep.subr.bf16.mxu0 0
        %1867 = vmatpush1.bf16.msra.mxu0 0
        %1868 = vmatprep.subr.bf16.mxu0 0
        %1869 = vmatpush1.bf16.msra.mxu0 0
        %1870 = vmatprep.subr.bf16.mxu0 0
        %1871 = vmatpush1.bf16.msra.mxu0 0
        %1872 = vmatprep.subr.bf16.mxu0 0
        %1873 = vmatpush1.bf16.msra.mxu0 0
        %1874 = vmatprep.subr.bf16.mxu0 0
        %1875 = vmatpush1.bf16.msra.mxu0 0
        %1876 = vmatprep.subr.bf16.mxu0 0
        %1877 = vmatpush1.bf16.msra.mxu0 0
        %1878 = vmatprep.subr.bf16.mxu0 0
        %1879 = vmatpush1.bf16.msra.mxu0 0
        %1880 = vmatprep.subr.bf16.mxu0 0
        %1881 = vmatpush1.bf16.msra.mxu0 0
        %1882 = vmatprep.subr.bf16.mxu0 0
        %1883 = vmatpush1.bf16.msra.mxu0 0
        %1884 = vmatprep.subr.bf16.mxu0 0
        %1885 = vmatpush1.bf16.msra.mxu0 0
        %1886 = vmatprep.subr.bf16.mxu0 0
        %1887 = vmatpush1.bf16.msra.mxu0 0
        %1888 = vmatprep.subr.bf16.mxu0 0
        %1889 = vmatpush1.bf16.msra.mxu0 0
        %1890 = vmatprep.subr.bf16.mxu0 0
        %1891 = vmatpush1.bf16.msra.mxu0 0
        %1892 = vmatprep.subr.bf16.mxu0 0
        %1893 = vmatpush1.bf16.msra.mxu0 0
        %1894 = vmatprep.mubr.bf16.mxu0 0
        %1895 = vmatmul.mubr.bf16.gmra.mrb[0].mxu0 %v1860
        %v1896 = vpop.f32.mrb[0].mxu0
        %v1897 = vadd.f32 %v1844, %v1896
        %v1898 = vpop.f32.mrb[0].mxu0
        %v1899 = vpop.f32.mrb[0].mxu0
        %v1900 = vadd.f32 %v1844, %v1899
        %v1901 = vpop.f32.mrb[0].mxu0
        %1902 = vdwg.mxu0
        %v1903 = vmul.f32 %v1897, 0.35355338
        %v1904 = vmul.f32 %v1900, 0.35355338
        %v1905 = vld [vmem:[%s1384] sm:$0xf]
        %v1906 = vld [vmem:[%s1384 + $0x4] sm:$0xf]
        %v1907 = vld [vmem:[%s1384 + $0x8] sm:$0xf]
        %v1908 = vld [vmem:[%s1384 + $0xc] sm:$0xf]
        %v1909 = vld [vmem:[%s1198] sm:$0x1]
        %v1911 = vlaneseq
        %v1912 = vshrl.u32 %v1911, 7
        %v1913 = vsub.s32 0, %v1912
        %v1914 = vrot.slane %v1909, %v1913
        %v1920 = vunpack.c.l.b16 %v1905
        %v1921 = vunpack.c.l.b16 %v1906
        %v1922 = vunpack.c.l.b16 %v1907
        %v1923 = vunpack.c.l.b16 %v1908
        %v1924 = vpack.c.b16 %v1921, %v1920
        %v1925 = vpack.c.b16 %v1923, %v1922
        %1928 = vmatprep.subr.bf16.mxu0 0
        %1929 = vmatpush1.bf16.msra.mxu0 %v1924
        %1930 = vmatprep.subr.bf16.mxu0 0
        %1931 = vmatpush1.bf16.msra.mxu0 %v1925
        %1932 = vmatprep.subr.bf16.mxu0 0
        %1933 = vmatpush1.bf16.msra.mxu0 0
        %1934 = vmatprep.subr.bf16.mxu0 0
        %1935 = vmatpush1.bf16.msra.mxu0 0
        %1936 = vmatprep.subr.bf16.mxu0 0
        %1937 = vmatpush1.bf16.msra.mxu0 0
        %1938 = vmatprep.subr.bf16.mxu0 0
        %1939 = vmatpush1.bf16.msra.mxu0 0
        %1940 = vmatprep.subr.bf16.mxu0 0
        %1941 = vmatpush1.bf16.msra.mxu0 0
        %1942 = vmatprep.subr.bf16.mxu0 0
        %1943 = vmatpush1.bf16.msra.mxu0 0
        %1944 = vmatprep.subr.bf16.mxu0 0
        %1945 = vmatpush1.bf16.msra.mxu0 0
        %1946 = vmatprep.subr.bf16.mxu0 0
        %1947 = vmatpush1.bf16.msra.mxu0 0
        %1948 = vmatprep.subr.bf16.mxu0 0
        %1949 = vmatpush1.bf16.msra.mxu0 0
        %1950 = vmatprep.subr.bf16.mxu0 0
        %1951 = vmatpush1.bf16.msra.mxu0 0
        %1952 = vmatprep.subr.bf16.mxu0 0
        %1953 = vmatpush1.bf16.msra.mxu0 0
        %1954 = vmatprep.subr.bf16.mxu0 0
        %1955 = vmatpush1.bf16.msra.mxu0 0
        %1956 = vmatprep.subr.bf16.mxu0 0
        %1957 = vmatpush1.bf16.msra.mxu0 0
        %1958 = vmatprep.subr.bf16.mxu0 0
        %1959 = vmatpush1.bf16.msra.mxu0 0
        %1960 = vmatprep.mubr.bf16.mxu0 0
        %1961 = vmatmul.mubr.bf16.gmra.mrb[0].mxu0 %v1860
        %v1962 = vpop.f32.mrb[0].mxu0
        %v1963 = vadd.f32 %v1914, %v1962
        %v1964 = vpop.f32.mrb[0].mxu0
        %v1965 = vpop.f32.mrb[0].mxu0
        %v1966 = vadd.f32 %v1914, %v1965
        %v1967 = vpop.f32.mrb[0].mxu0
        %1968 = vdwg.mxu0
        %v1969 = vld [vmem:[%s1389] sm:$0xf]
        %v1970 = vld [vmem:[%s1389 + $0x4] sm:$0xf]
        %v1971 = vld [vmem:[%s1389 + $0x8] sm:$0xf]
        %v1972 = vld [vmem:[%s1389 + $0xc] sm:$0xf]
        %v1973 = vld [vmem:[%s1206] sm:$0x1]
        %v1975 = vlaneseq
        %v1976 = vshrl.u32 %v1975, 7
        %v1977 = vsub.s32 0, %v1976
        %v1978 = vrot.slane %v1973, %v1977
        %v1984 = vunpack.c.l.b16 %v1969
        %v1985 = vunpack.c.l.b16 %v1970
        %v1986 = vunpack.c.l.b16 %v1971
        %v1987 = vunpack.c.l.b16 %v1972
        %v1988 = vpack.c.b16 %v1985, %v1984
        %v1989 = vpack.c.b16 %v1987, %v1986
        %1992 = vmatprep.subr.bf16.mxu0 0
        %1993 = vmatpush1.bf16.msra.mxu0 %v1988
        %1994 = vmatprep.subr.bf16.mxu0 0
        %1995 = vmatpush1.bf16.msra.mxu0 %v1989
        %1996 = vmatprep.subr.bf16.mxu0 0
        %1997 = vmatpush1.bf16.msra.mxu0 0
        %1998 = vmatprep.subr.bf16.mxu0 0
        %1999 = vmatpush1.bf16.msra.mxu0 0
        %2000 = vmatprep.subr.bf16.mxu0 0
        %2001 = vmatpush1.bf16.msra.mxu0 0
        %2002 = vmatprep.subr.bf16.mxu0 0
        %2003 = vmatpush1.bf16.msra.mxu0 0
        %2004 = vmatprep.subr.bf16.mxu0 0
        %2005 = vmatpush1.bf16.msra.mxu0 0
        %2006 = vmatprep.subr.bf16.mxu0 0
        %2007 = vmatpush1.bf16.msra.mxu0 0
        %2008 = vmatprep.subr.bf16.mxu0 0
        %2009 = vmatpush1.bf16.msra.mxu0 0
        %2010 = vmatprep.subr.bf16.mxu0 0
        %2011 = vmatpush1.bf16.msra.mxu0 0
        %2012 = vmatprep.subr.bf16.mxu0 0
        %2013 = vmatpush1.bf16.msra.mxu0 0
        %2014 = vmatprep.subr.bf16.mxu0 0
        %2015 = vmatpush1.bf16.msra.mxu0 0
        %2016 = vmatprep.subr.bf16.mxu0 0
        %2017 = vmatpush1.bf16.msra.mxu0 0
        %2018 = vmatprep.subr.bf16.mxu0 0
        %2019 = vmatpush1.bf16.msra.mxu0 0
        %2020 = vmatprep.subr.bf16.mxu0 0
        %2021 = vmatpush1.bf16.msra.mxu0 0
        %2022 = vmatprep.subr.bf16.mxu0 0
        %2023 = vmatpush1.bf16.msra.mxu0 0
        %2024 = vmatprep.mubr.bf16.mxu0 0
        %2025 = vmatmul.mubr.bf16.gmra.mrb[0].mxu0 %v1860
        %v2026 = vpop.f32.mrb[0].mxu0
        %v2027 = vadd.f32 %v1978, %v2026
        %v2028 = vpop.f32.mrb[0].mxu0
        %v2029 = vpop.f32.mrb[0].mxu0
        %v2030 = vadd.f32 %v1978, %v2029
        %v2031 = vpop.f32.mrb[0].mxu0
        %2032 = vdwg.mxu0
        %v2033 = vpack.c.bf16 %v1904, %v1903
        %2035 = vrot.lane.b32.xlu0 %v2033, 120
        %v2036 = vpop.permute.xlu0 %2035
        %2037 = vrot.lane.b32.xlu0 %v2033, 112
        %v2038 = vpop.permute.xlu0 %2037
        %2039 = vrot.lane.b32.xlu0 %v2033, 104
        %v2040 = vpop.permute.xlu0 %2039
        %v2043 = vpack.i.b16 %v2036, %v2033
        %v2045 = vshrl.u32 %v2033, 16
        %v2046 = vshrl.u32 %v2036, 16
        %v2047 = vpack.i.b16 %v2046, %v2045
        %v2051 = vpack.i.b16 %v2040, %v2038
        %v2053 = vshrl.u32 %v2038, 16
        %v2054 = vshrl.u32 %v2040, 16
        %v2055 = vpack.i.b16 %v2054, %v2053
        %v2058 = vpack.i.b16 0, 0
        %v2060 = vshrl.u32 0, 16
        %v2061 = vpack.i.b16 %v2060, %v2060
        %v2063 = vcombine.high %v2043, %v2058
        %v2065 = vunpack.c.l.s4 1983009808
        %v2066 = vunpack.c.0.s8 %v2065
        %v2067 = vlaneseq
        %v2068 = vshrl.u32 %v2067, 7
        %v2069 = vsub.s32 %v2066, %v2068
        %v2070 = vrot.slane %v2043, %v2069
        %v2072 = vunpack.c.l.s4 1983009808
        %v2073 = vunpack.c.0.s8 %v2072
        %v2074 = vlaneseq
        %v2075 = vshrl.u32 %v2074, 7
        %v2076 = vsub.s32 %v2073, %v2075
        %v2077 = vrot.slane %v2063, %v2076
        %v2078 = vcombine.high %v2051, %v2058
        %v2080 = vunpack.c.l.s4 1983009808
        %v2081 = vunpack.c.0.s8 %v2080
        %v2082 = vlaneseq
        %v2083 = vshrl.u32 %v2082, 7
        %v2084 = vsub.s32 %v2081, %v2083
        %v2085 = vrot.slane %v2051, %v2084
        %v2087 = vunpack.c.l.s4 1983009808
        %v2088 = vunpack.c.0.s8 %v2087
        %v2089 = vlaneseq
        %v2090 = vshrl.u32 %v2089, 7
        %v2091 = vsub.s32 %v2088, %v2090
        %v2092 = vrot.slane %v2078, %v2091
        %v2093 = vcombine.low %v2070, %v2085
        %v2094 = vcombine.high %v2070, %v2085
        %v2096 = vunpack.c.l.s4 1934713408
        %v2097 = vunpack.c.0.s8 %v2096
        %v2098 = vlaneseq
        %v2099 = vshrl.u32 %v2098, 7
        %v2100 = vsub.s32 %v2097, %v2099
        %v2101 = vrot.slane %v2093, %v2100
        %v2103 = vunpack.c.l.s4 1934713408
        %v2104 = vunpack.c.0.s8 %v2103
        %v2105 = vlaneseq
        %v2106 = vshrl.u32 %v2105, 7
        %v2107 = vsub.s32 %v2104, %v2106
        %v2108 = vrot.slane %v2094, %v2107
        %v2109 = vcombine.low %v2077, %v2092
        %v2110 = vcombine.high %v2077, %v2092
        %v2112 = vunpack.c.l.s4 1934713408
        %v2113 = vunpack.c.0.s8 %v2112
        %v2114 = vlaneseq
        %v2115 = vshrl.u32 %v2114, 7
        %v2116 = vsub.s32 %v2113, %v2115
        %v2117 = vrot.slane %v2109, %v2116
        %v2119 = vunpack.c.l.s4 1934713408
        %v2120 = vunpack.c.0.s8 %v2119
        %v2121 = vlaneseq
        %v2122 = vshrl.u32 %v2121, 7
        %v2123 = vsub.s32 %v2120, %v2122
        %v2124 = vrot.slane %v2110, %v2123
        %v2125 = vcombine.high %v2101, 0
        %v2126 = vcombine.high %v2108, 0
        %v2127 = vcombine.high %v2117, 0
        %v2128 = vcombine.high %v2124, 0
        %v2129 = vcombine.high %v2047, %v2061
        %v2131 = vunpack.c.l.s4 1983009808
        %v2132 = vunpack.c.0.s8 %v2131
        %v2133 = vlaneseq
        %v2134 = vshrl.u32 %v2133, 7
        %v2135 = vsub.s32 %v2132, %v2134
        %v2136 = vrot.slane %v2047, %v2135
        %v2138 = vunpack.c.l.s4 1983009808
        %v2139 = vunpack.c.0.s8 %v2138
        %v2140 = vlaneseq
        %v2141 = vshrl.u32 %v2140, 7
        %v2142 = vsub.s32 %v2139, %v2141
        %v2143 = vrot.slane %v2129, %v2142
        %v2144 = vcombine.high %v2055, %v2061
        %v2146 = vunpack.c.l.s4 1983009808
        %v2147 = vunpack.c.0.s8 %v2146
        %v2148 = vlaneseq
        %v2149 = vshrl.u32 %v2148, 7
        %v2150 = vsub.s32 %v2147, %v2149
        %v2151 = vrot.slane %v2055, %v2150
        %v2153 = vunpack.c.l.s4 1983009808
        %v2154 = vunpack.c.0.s8 %v2153
        %v2155 = vlaneseq
        %v2156 = vshrl.u32 %v2155, 7
        %v2157 = vsub.s32 %v2154, %v2156
        %v2158 = vrot.slane %v2144, %v2157
        %v2159 = vcombine.low %v2136, %v2151
        %v2160 = vcombine.high %v2136, %v2151
        %v2162 = vunpack.c.l.s4 1934713408
        %v2163 = vunpack.c.0.s8 %v2162
        %v2164 = vlaneseq
        %v2165 = vshrl.u32 %v2164, 7
        %v2166 = vsub.s32 %v2163, %v2165
        %v2167 = vrot.slane %v2159, %v2166
        %v2169 = vunpack.c.l.s4 1934713408
        %v2170 = vunpack.c.0.s8 %v2169
        %v2171 = vlaneseq
        %v2172 = vshrl.u32 %v2171, 7
        %v2173 = vsub.s32 %v2170, %v2172
        %v2174 = vrot.slane %v2160, %v2173
        %v2175 = vcombine.low %v2143, %v2158
        %v2176 = vcombine.high %v2143, %v2158
        %v2178 = vunpack.c.l.s4 1934713408
        %v2179 = vunpack.c.0.s8 %v2178
        %v2180 = vlaneseq
        %v2181 = vshrl.u32 %v2180, 7
        %v2182 = vsub.s32 %v2179, %v2181
        %v2183 = vrot.slane %v2175, %v2182
        %v2185 = vunpack.c.l.s4 1934713408
        %v2186 = vunpack.c.0.s8 %v2185
        %v2187 = vlaneseq
        %v2188 = vshrl.u32 %v2187, 7
        %v2189 = vsub.s32 %v2186, %v2188
        %v2190 = vrot.slane %v2176, %v2189
        %v2191 = vcombine.high %v2167, 0
        %v2192 = vcombine.high %v2174, 0
        %v2193 = vcombine.high %v2183, 0
        %v2194 = vcombine.high %v2190, 0
        %v2195 = vcombine.low %v2101, %v2108
        %v2197 = vunpack.c.l.s4 1983009808
        %v2198 = vunpack.c.0.s8 %v2197
        %v2199 = vlaneseq
        %v2200 = vshrl.u32 %v2199, 7
        %v2201 = vsub.s32 %v2198, %v2200
        %v2202 = vrot.slane %v2195, %v2201
        %v2203 = vcombine.low %v2125, %v2126
        %v2205 = vunpack.c.l.s4 1983009808
        %v2206 = vunpack.c.0.s8 %v2205
        %v2207 = vlaneseq
        %v2208 = vshrl.u32 %v2207, 7
        %v2209 = vsub.s32 %v2206, %v2208
        %v2210 = vrot.slane %v2203, %v2209
        %v2211 = vcombine.low %v2202, %v2210
        %v2213 = vunpack.c.l.s4 1934713408
        %v2214 = vunpack.c.0.s8 %v2213
        %v2215 = vlaneseq
        %v2216 = vshrl.u32 %v2215, 7
        %v2217 = vsub.s32 %v2214, %v2216
        %v2218 = vrot.slane %v2211, %v2217
        %v2219 = vcombine.high %v2218, 0
        %v2220 = vcombine.low %v2167, %v2174
        %v2222 = vunpack.c.l.s4 1983009808
        %v2223 = vunpack.c.0.s8 %v2222
        %v2224 = vlaneseq
        %v2225 = vshrl.u32 %v2224, 7
        %v2226 = vsub.s32 %v2223, %v2225
        %v2227 = vrot.slane %v2220, %v2226
        %v2228 = vcombine.low %v2191, %v2192
        %v2230 = vunpack.c.l.s4 1983009808
        %v2231 = vunpack.c.0.s8 %v2230
        %v2232 = vlaneseq
        %v2233 = vshrl.u32 %v2232, 7
        %v2234 = vsub.s32 %v2231, %v2233
        %v2235 = vrot.slane %v2228, %v2234
        %v2236 = vcombine.low %v2227, %v2235
        %v2238 = vunpack.c.l.s4 1934713408
        %v2239 = vunpack.c.0.s8 %v2238
        %v2240 = vlaneseq
        %v2241 = vshrl.u32 %v2240, 7
        %v2242 = vsub.s32 %v2239, %v2241
        %v2243 = vrot.slane %v2236, %v2242
        %v2244 = vcombine.high %v2243, 0
        %v2245 = vcombine.low %v2117, %v2124
        %v2247 = vunpack.c.l.s4 1983009808
        %v2248 = vunpack.c.0.s8 %v2247
        %v2249 = vlaneseq
        %v2250 = vshrl.u32 %v2249, 7
        %v2251 = vsub.s32 %v2248, %v2250
        %v2252 = vrot.slane %v2245, %v2251
        %v2253 = vcombine.low %v2127, %v2128
        %v2255 = vunpack.c.l.s4 1983009808
        %v2256 = vunpack.c.0.s8 %v2255
        %v2257 = vlaneseq
        %v2258 = vshrl.u32 %v2257, 7
        %v2259 = vsub.s32 %v2256, %v2258
        %v2260 = vrot.slane %v2253, %v2259
        %v2261 = vcombine.low %v2252, %v2260
        %v2263 = vunpack.c.l.s4 1934713408
        %v2264 = vunpack.c.0.s8 %v2263
        %v2265 = vlaneseq
        %v2266 = vshrl.u32 %v2265, 7
        %v2267 = vsub.s32 %v2264, %v2266
        %v2268 = vrot.slane %v2261, %v2267
        %v2269 = vcombine.high %v2268, 0
        %v2270 = vcombine.low %v2183, %v2190
        %v2272 = vunpack.c.l.s4 1983009808
        %v2273 = vunpack.c.0.s8 %v2272
        %v2274 = vlaneseq
        %v2275 = vshrl.u32 %v2274, 7
        %v2276 = vsub.s32 %v2273, %v2275
        %v2277 = vrot.slane %v2270, %v2276
        %v2278 = vcombine.low %v2193, %v2194
        %v2280 = vunpack.c.l.s4 1983009808
        %v2281 = vunpack.c.0.s8 %v2280
        %v2282 = vlaneseq
        %v2283 = vshrl.u32 %v2282, 7
        %v2284 = vsub.s32 %v2281, %v2283
        %v2285 = vrot.slane %v2278, %v2284
        %v2286 = vcombine.low %v2277, %v2285
        %v2288 = vunpack.c.l.s4 1934713408
        %v2289 = vunpack.c.0.s8 %v2288
        %v2290 = vlaneseq
        %v2291 = vshrl.u32 %v2290, 7
        %v2292 = vsub.s32 %v2289, %v2291
        %v2293 = vrot.slane %v2286, %v2292
        %v2294 = vcombine.high %v2293, 0
        %v2297 = vpack.i.b16 %v2243, %v2218
        %v2298 = vshrl.u32 %v2218, 16
        %v2299 = vshrl.u32 %v2243, 16
        %v2300 = vpack.i.b16 %v2299, %v2298
        %v2303 = vpack.i.b16 %v2244, %v2219
        %v2304 = vshrl.u32 %v2219, 16
        %v2305 = vshrl.u32 %v2244, 16
        %v2306 = vpack.i.b16 %v2305, %v2304
        %v2309 = vpack.i.b16 %v2293, %v2268
        %v2310 = vshrl.u32 %v2268, 16
        %v2311 = vshrl.u32 %v2293, 16
        %v2312 = vpack.i.b16 %v2311, %v2310
        %v2315 = vpack.i.b16 %v2294, %v2269
        %v2316 = vshrl.u32 %v2269, 16
        %v2317 = vshrl.u32 %v2294, 16
        %v2318 = vpack.i.b16 %v2317, %v2316
        %v2319 = vpack.c.bf16 %v1966, %v1963
        %2321 = vrot.lane.b32.xlu0 %v2319, 120
        %v2322 = vpop.permute.xlu0 %2321
        %2323 = vrot.lane.b32.xlu0 %v2319, 112
        %v2324 = vpop.permute.xlu0 %2323
        %2325 = vrot.lane.b32.xlu0 %v2319, 104
        %v2326 = vpop.permute.xlu0 %2325
        %v2329 = vpack.i.b16 %v2322, %v2319
        %v2331 = vshrl.u32 %v2319, 16
        %v2332 = vshrl.u32 %v2322, 16
        %v2333 = vpack.i.b16 %v2332, %v2331
        %v2337 = vpack.i.b16 %v2326, %v2324
        %v2339 = vshrl.u32 %v2324, 16
        %v2340 = vshrl.u32 %v2326, 16
        %v2341 = vpack.i.b16 %v2340, %v2339
        %v2343 = vcombine.high %v2329, %v2058
        %v2345 = vunpack.c.l.s4 1983009808
        %v2346 = vunpack.c.0.s8 %v2345
        %v2347 = vlaneseq
        %v2348 = vshrl.u32 %v2347, 7
        %v2349 = vsub.s32 %v2346, %v2348
        %v2350 = vrot.slane %v2329, %v2349
        %v2352 = vunpack.c.l.s4 1983009808
        %v2353 = vunpack.c.0.s8 %v2352
        %v2354 = vlaneseq
        %v2355 = vshrl.u32 %v2354, 7
        %v2356 = vsub.s32 %v2353, %v2355
        %v2357 = vrot.slane %v2343, %v2356
        %v2358 = vcombine.high %v2337, %v2058
        %v2360 = vunpack.c.l.s4 1983009808
        %v2361 = vunpack.c.0.s8 %v2360
        %v2362 = vlaneseq
        %v2363 = vshrl.u32 %v2362, 7
        %v2364 = vsub.s32 %v2361, %v2363
        %v2365 = vrot.slane %v2337, %v2364
        %v2367 = vunpack.c.l.s4 1983009808
        %v2368 = vunpack.c.0.s8 %v2367
        %v2369 = vlaneseq
        %v2370 = vshrl.u32 %v2369, 7
        %v2371 = vsub.s32 %v2368, %v2370
        %v2372 = vrot.slane %v2358, %v2371
        %v2373 = vcombine.low %v2350, %v2365
        %v2374 = vcombine.high %v2350, %v2365
        %v2376 = vunpack.c.l.s4 1934713408
        %v2377 = vunpack.c.0.s8 %v2376
        %v2378 = vlaneseq
        %v2379 = vshrl.u32 %v2378, 7
        %v2380 = vsub.s32 %v2377, %v2379
        %v2381 = vrot.slane %v2373, %v2380
        %v2383 = vunpack.c.l.s4 1934713408
        %v2384 = vunpack.c.0.s8 %v2383
        %v2385 = vlaneseq
        %v2386 = vshrl.u32 %v2385, 7
        %v2387 = vsub.s32 %v2384, %v2386
        %v2388 = vrot.slane %v2374, %v2387
        %v2389 = vcombine.low %v2357, %v2372
        %v2390 = vcombine.high %v2357, %v2372
        %v2392 = vunpack.c.l.s4 1934713408
        %v2393 = vunpack.c.0.s8 %v2392
        %v2394 = vlaneseq
        %v2395 = vshrl.u32 %v2394, 7
        %v2396 = vsub.s32 %v2393, %v2395
        %v2397 = vrot.slane %v2389, %v2396
        %v2399 = vunpack.c.l.s4 1934713408
        %v2400 = vunpack.c.0.s8 %v2399
        %v2401 = vlaneseq
        %v2402 = vshrl.u32 %v2401, 7
        %v2403 = vsub.s32 %v2400, %v2402
        %v2404 = vrot.slane %v2390, %v2403
        %v2405 = vcombine.high %v2381, 0
        %v2406 = vcombine.high %v2388, 0
        %v2407 = vcombine.high %v2397, 0
        %v2408 = vcombine.high %v2404, 0
        %v2409 = vcombine.high %v2333, %v2061
        %v2411 = vunpack.c.l.s4 1983009808
        %v2412 = vunpack.c.0.s8 %v2411
        %v2413 = vlaneseq
        %v2414 = vshrl.u32 %v2413, 7
        %v2415 = vsub.s32 %v2412, %v2414
        %v2416 = vrot.slane %v2333, %v2415
        %v2418 = vunpack.c.l.s4 1983009808
        %v2419 = vunpack.c.0.s8 %v2418
        %v2420 = vlaneseq
        %v2421 = vshrl.u32 %v2420, 7
        %v2422 = vsub.s32 %v2419, %v2421
        %v2423 = vrot.slane %v2409, %v2422
        %v2424 = vcombine.high %v2341, %v2061
        %v2426 = vunpack.c.l.s4 1983009808
        %v2427 = vunpack.c.0.s8 %v2426
        %v2428 = vlaneseq
        %v2429 = vshrl.u32 %v2428, 7
        %v2430 = vsub.s32 %v2427, %v2429
        %v2431 = vrot.slane %v2341, %v2430
        %v2433 = vunpack.c.l.s4 1983009808
        %v2434 = vunpack.c.0.s8 %v2433
        %v2435 = vlaneseq
        %v2436 = vshrl.u32 %v2435, 7
        %v2437 = vsub.s32 %v2434, %v2436
        %v2438 = vrot.slane %v2424, %v2437
        %v2439 = vcombine.low %v2416, %v2431
        %v2440 = vcombine.high %v2416, %v2431
        %v2442 = vunpack.c.l.s4 1934713408
        %v2443 = vunpack.c.0.s8 %v2442
        %v2444 = vlaneseq
        %v2445 = vshrl.u32 %v2444, 7
        %v2446 = vsub.s32 %v2443, %v2445
        %v2447 = vrot.slane %v2439, %v2446
        %v2449 = vunpack.c.l.s4 1934713408
        %v2450 = vunpack.c.0.s8 %v2449
        %v2451 = vlaneseq
        %v2452 = vshrl.u32 %v2451, 7
        %v2453 = vsub.s32 %v2450, %v2452
        %v2454 = vrot.slane %v2440, %v2453
        %v2455 = vcombine.low %v2423, %v2438
        %v2456 = vcombine.high %v2423, %v2438
        %v2458 = vunpack.c.l.s4 1934713408
        %v2459 = vunpack.c.0.s8 %v2458
        %v2460 = vlaneseq
        %v2461 = vshrl.u32 %v2460, 7
        %v2462 = vsub.s32 %v2459, %v2461
        %v2463 = vrot.slane %v2455, %v2462
        %v2465 = vunpack.c.l.s4 1934713408
        %v2466 = vunpack.c.0.s8 %v2465
        %v2467 = vlaneseq
        %v2468 = vshrl.u32 %v2467, 7
        %v2469 = vsub.s32 %v2466, %v2468
        %v2470 = vrot.slane %v2456, %v2469
        %v2471 = vcombine.high %v2447, 0
        %v2472 = vcombine.high %v2454, 0
        %v2473 = vcombine.high %v2463, 0
        %v2474 = vcombine.high %v2470, 0
        %v2475 = vcombine.low %v2381, %v2388
        %v2477 = vunpack.c.l.s4 1983009808
        %v2478 = vunpack.c.0.s8 %v2477
        %v2479 = vlaneseq
        %v2480 = vshrl.u32 %v2479, 7
        %v2481 = vsub.s32 %v2478, %v2480
        %v2482 = vrot.slane %v2475, %v2481
        %v2483 = vcombine.low %v2405, %v2406
        %v2485 = vunpack.c.l.s4 1983009808
        %v2486 = vunpack.c.0.s8 %v2485
        %v2487 = vlaneseq
        %v2488 = vshrl.u32 %v2487, 7
        %v2489 = vsub.s32 %v2486, %v2488
        %v2490 = vrot.slane %v2483, %v2489
        %v2491 = vcombine.low %v2482, %v2490
        %v2493 = vunpack.c.l.s4 1934713408
        %v2494 = vunpack.c.0.s8 %v2493
        %v2495 = vlaneseq
        %v2496 = vshrl.u32 %v2495, 7
        %v2497 = vsub.s32 %v2494, %v2496
        %v2498 = vrot.slane %v2491, %v2497
        %v2499 = vcombine.high %v2498, 0
        %v2500 = vcombine.low %v2447, %v2454
        %v2502 = vunpack.c.l.s4 1983009808
        %v2503 = vunpack.c.0.s8 %v2502
        %v2504 = vlaneseq
        %v2505 = vshrl.u32 %v2504, 7
        %v2506 = vsub.s32 %v2503, %v2505
        %v2507 = vrot.slane %v2500, %v2506
        %v2508 = vcombine.low %v2471, %v2472
        %v2510 = vunpack.c.l.s4 1983009808
        %v2511 = vunpack.c.0.s8 %v2510
        %v2512 = vlaneseq
        %v2513 = vshrl.u32 %v2512, 7
        %v2514 = vsub.s32 %v2511, %v2513
        %v2515 = vrot.slane %v2508, %v2514
        %v2516 = vcombine.low %v2507, %v2515
        %v2518 = vunpack.c.l.s4 1934713408
        %v2519 = vunpack.c.0.s8 %v2518
        %v2520 = vlaneseq
        %v2521 = vshrl.u32 %v2520, 7
        %v2522 = vsub.s32 %v2519, %v2521
        %v2523 = vrot.slane %v2516, %v2522
        %v2524 = vcombine.high %v2523, 0
        %v2525 = vcombine.low %v2397, %v2404
        %v2527 = vunpack.c.l.s4 1983009808
        %v2528 = vunpack.c.0.s8 %v2527
        %v2529 = vlaneseq
        %v2530 = vshrl.u32 %v2529, 7
        %v2531 = vsub.s32 %v2528, %v2530
        %v2532 = vrot.slane %v2525, %v2531
        %v2533 = vcombine.low %v2407, %v2408
        %v2535 = vunpack.c.l.s4 1983009808
        %v2536 = vunpack.c.0.s8 %v2535
        %v2537 = vlaneseq
        %v2538 = vshrl.u32 %v2537, 7
        %v2539 = vsub.s32 %v2536, %v2538
        %v2540 = vrot.slane %v2533, %v2539
        %v2541 = vcombine.low %v2532, %v2540
        %v2543 = vunpack.c.l.s4 1934713408
        %v2544 = vunpack.c.0.s8 %v2543
        %v2545 = vlaneseq
        %v2546 = vshrl.u32 %v2545, 7
        %v2547 = vsub.s32 %v2544, %v2546
        %v2548 = vrot.slane %v2541, %v2547
        %v2549 = vcombine.high %v2548, 0
        %v2550 = vcombine.low %v2463, %v2470
        %v2552 = vunpack.c.l.s4 1983009808
        %v2553 = vunpack.c.0.s8 %v2552
        %v2554 = vlaneseq
        %v2555 = vshrl.u32 %v2554, 7
        %v2556 = vsub.s32 %v2553, %v2555
        %v2557 = vrot.slane %v2550, %v2556
        %v2558 = vcombine.low %v2473, %v2474
        %v2560 = vunpack.c.l.s4 1983009808
        %v2561 = vunpack.c.0.s8 %v2560
        %v2562 = vlaneseq
        %v2563 = vshrl.u32 %v2562, 7
        %v2564 = vsub.s32 %v2561, %v2563
        %v2565 = vrot.slane %v2558, %v2564
        %v2566 = vcombine.low %v2557, %v2565
        %v2568 = vunpack.c.l.s4 1934713408
        %v2569 = vunpack.c.0.s8 %v2568
        %v2570 = vlaneseq
        %v2571 = vshrl.u32 %v2570, 7
        %v2572 = vsub.s32 %v2569, %v2571
        %v2573 = vrot.slane %v2566, %v2572
        %v2574 = vcombine.high %v2573, 0
        %v2577 = vpack.i.b16 %v2523, %v2498
        %v2578 = vshrl.u32 %v2498, 16
        %v2579 = vshrl.u32 %v2523, 16
        %v2580 = vpack.i.b16 %v2579, %v2578
        %v2583 = vpack.i.b16 %v2524, %v2499
        %v2584 = vshrl.u32 %v2499, 16
        %v2585 = vshrl.u32 %v2524, 16
        %v2586 = vpack.i.b16 %v2585, %v2584
        %v2589 = vpack.i.b16 %v2573, %v2548
        %v2590 = vshrl.u32 %v2548, 16
        %v2591 = vshrl.u32 %v2573, 16
        %v2592 = vpack.i.b16 %v2591, %v2590
        %v2595 = vpack.i.b16 %v2574, %v2549
        %v2596 = vshrl.u32 %v2549, 16
        %v2597 = vshrl.u32 %v2574, 16
        %v2598 = vpack.i.b16 %v2597, %v2596
        %v2599 = vpack.c.bf16 %v2030, %v2027
        %2601 = vrot.lane.b32.xlu0 %v2599, 120
        %v2602 = vpop.permute.xlu0 %2601
        %2603 = vrot.lane.b32.xlu0 %v2599, 112
        %v2604 = vpop.permute.xlu0 %2603
        %2605 = vrot.lane.b32.xlu0 %v2599, 104
        %v2606 = vpop.permute.xlu0 %2605
        %v2609 = vpack.i.b16 %v2602, %v2599
        %v2611 = vshrl.u32 %v2599, 16
        %v2612 = vshrl.u32 %v2602, 16
        %v2613 = vpack.i.b16 %v2612, %v2611
        %v2617 = vpack.i.b16 %v2606, %v2604
        %v2619 = vshrl.u32 %v2604, 16
        %v2620 = vshrl.u32 %v2606, 16
        %v2621 = vpack.i.b16 %v2620, %v2619
        %v2623 = vcombine.high %v2609, %v2058
        %v2625 = vunpack.c.l.s4 1983009808
        %v2626 = vunpack.c.0.s8 %v2625
        %v2627 = vlaneseq
        %v2628 = vshrl.u32 %v2627, 7
        %v2629 = vsub.s32 %v2626, %v2628
        %v2630 = vrot.slane %v2609, %v2629
        %v2632 = vunpack.c.l.s4 1983009808
        %v2633 = vunpack.c.0.s8 %v2632
        %v2634 = vlaneseq
        %v2635 = vshrl.u32 %v2634, 7
        %v2636 = vsub.s32 %v2633, %v2635
        %v2637 = vrot.slane %v2623, %v2636
        %v2638 = vcombine.high %v2617, %v2058
        %v2640 = vunpack.c.l.s4 1983009808
        %v2641 = vunpack.c.0.s8 %v2640
        %v2642 = vlaneseq
        %v2643 = vshrl.u32 %v2642, 7
        %v2644 = vsub.s32 %v2641, %v2643
        %v2645 = vrot.slane %v2617, %v2644
        %v2647 = vunpack.c.l.s4 1983009808
        %v2648 = vunpack.c.0.s8 %v2647
        %v2649 = vlaneseq
        %v2650 = vshrl.u32 %v2649, 7
        %v2651 = vsub.s32 %v2648, %v2650
        %v2652 = vrot.slane %v2638, %v2651
        %v2653 = vcombine.low %v2630, %v2645
        %v2654 = vcombine.high %v2630, %v2645
        %v2656 = vunpack.c.l.s4 1934713408
        %v2657 = vunpack.c.0.s8 %v2656
        %v2658 = vlaneseq
        %v2659 = vshrl.u32 %v2658, 7
        %v2660 = vsub.s32 %v2657, %v2659
        %v2661 = vrot.slane %v2653, %v2660
        %v2663 = vunpack.c.l.s4 1934713408
        %v2664 = vunpack.c.0.s8 %v2663
        %v2665 = vlaneseq
        %v2666 = vshrl.u32 %v2665, 7
        %v2667 = vsub.s32 %v2664, %v2666
        %v2668 = vrot.slane %v2654, %v2667
        %v2669 = vcombine.low %v2637, %v2652
        %v2670 = vcombine.high %v2637, %v2652
        %v2672 = vunpack.c.l.s4 1934713408
        %v2673 = vunpack.c.0.s8 %v2672
        %v2674 = vlaneseq
        %v2675 = vshrl.u32 %v2674, 7
        %v2676 = vsub.s32 %v2673, %v2675
        %v2677 = vrot.slane %v2669, %v2676
        %v2679 = vunpack.c.l.s4 1934713408
        %v2680 = vunpack.c.0.s8 %v2679
        %v2681 = vlaneseq
        %v2682 = vshrl.u32 %v2681, 7
        %v2683 = vsub.s32 %v2680, %v2682
        %v2684 = vrot.slane %v2670, %v2683
        %v2685 = vcombine.high %v2661, 0
        %v2686 = vcombine.high %v2668, 0
        %v2687 = vcombine.high %v2677, 0
        %v2688 = vcombine.high %v2684, 0
        %v2689 = vcombine.high %v2613, %v2061
        %v2691 = vunpack.c.l.s4 1983009808
        %v2692 = vunpack.c.0.s8 %v2691
        %v2693 = vlaneseq
        %v2694 = vshrl.u32 %v2693, 7
        %v2695 = vsub.s32 %v2692, %v2694
        %v2696 = vrot.slane %v2613, %v2695
        %v2698 = vunpack.c.l.s4 1983009808
        %v2699 = vunpack.c.0.s8 %v2698
        %v2700 = vlaneseq
        %v2701 = vshrl.u32 %v2700, 7
        %v2702 = vsub.s32 %v2699, %v2701
        %v2703 = vrot.slane %v2689, %v2702
        %v2704 = vcombine.high %v2621, %v2061
        %v2706 = vunpack.c.l.s4 1983009808
        %v2707 = vunpack.c.0.s8 %v2706
        %v2708 = vlaneseq
        %v2709 = vshrl.u32 %v2708, 7
        %v2710 = vsub.s32 %v2707, %v2709
        %v2711 = vrot.slane %v2621, %v2710
        %v2713 = vunpack.c.l.s4 1983009808
        %v2714 = vunpack.c.0.s8 %v2713
        %v2715 = vlaneseq
        %v2716 = vshrl.u32 %v2715, 7
        %v2717 = vsub.s32 %v2714, %v2716
        %v2718 = vrot.slane %v2704, %v2717
        %v2719 = vcombine.low %v2696, %v2711
        %v2720 = vcombine.high %v2696, %v2711
        %v2722 = vunpack.c.l.s4 1934713408
        %v2723 = vunpack.c.0.s8 %v2722
        %v2724 = vlaneseq
        %v2725 = vshrl.u32 %v2724, 7
        %v2726 = vsub.s32 %v2723, %v2725
        %v2727 = vrot.slane %v2719, %v2726
        %v2729 = vunpack.c.l.s4 1934713408
        %v2730 = vunpack.c.0.s8 %v2729
        %v2731 = vlaneseq
        %v2732 = vshrl.u32 %v2731, 7
        %v2733 = vsub.s32 %v2730, %v2732
        %v2734 = vrot.slane %v2720, %v2733
        %v2735 = vcombine.low %v2703, %v2718
        %v2736 = vcombine.high %v2703, %v2718
        %v2738 = vunpack.c.l.s4 1934713408
        %v2739 = vunpack.c.0.s8 %v2738
        %v2740 = vlaneseq
        %v2741 = vshrl.u32 %v2740, 7
        %v2742 = vsub.s32 %v2739, %v2741
        %v2743 = vrot.slane %v2735, %v2742
        %v2745 = vunpack.c.l.s4 1934713408
        %v2746 = vunpack.c.0.s8 %v2745
        %v2747 = vlaneseq
        %v2748 = vshrl.u32 %v2747, 7
        %v2749 = vsub.s32 %v2746, %v2748
        %v2750 = vrot.slane %v2736, %v2749
        %v2751 = vcombine.high %v2727, 0
        %v2752 = vcombine.high %v2734, 0
        %v2753 = vcombine.high %v2743, 0
        %v2754 = vcombine.high %v2750, 0
        %v2755 = vcombine.low %v2661, %v2668
        %v2757 = vunpack.c.l.s4 1983009808
        %v2758 = vunpack.c.0.s8 %v2757
        %v2759 = vlaneseq
        %v2760 = vshrl.u32 %v2759, 7
        %v2761 = vsub.s32 %v2758, %v2760
        %v2762 = vrot.slane %v2755, %v2761
        %v2763 = vcombine.low %v2685, %v2686
        %v2765 = vunpack.c.l.s4 1983009808
        %v2766 = vunpack.c.0.s8 %v2765
        %v2767 = vlaneseq
        %v2768 = vshrl.u32 %v2767, 7
        %v2769 = vsub.s32 %v2766, %v2768
        %v2770 = vrot.slane %v2763, %v2769
        %v2771 = vcombine.low %v2762, %v2770
        %v2773 = vunpack.c.l.s4 1934713408
        %v2774 = vunpack.c.0.s8 %v2773
        %v2775 = vlaneseq
        %v2776 = vshrl.u32 %v2775, 7
        %v2777 = vsub.s32 %v2774, %v2776
        %v2778 = vrot.slane %v2771, %v2777
        %v2779 = vcombine.high %v2778, 0
        %v2780 = vcombine.low %v2727, %v2734
        %v2782 = vunpack.c.l.s4 1983009808
        %v2783 = vunpack.c.0.s8 %v2782
        %v2784 = vlaneseq
        %v2785 = vshrl.u32 %v2784, 7
        %v2786 = vsub.s32 %v2783, %v2785
        %v2787 = vrot.slane %v2780, %v2786
        %v2788 = vcombine.low %v2751, %v2752
        %v2790 = vunpack.c.l.s4 1983009808
        %v2791 = vunpack.c.0.s8 %v2790
        %v2792 = vlaneseq
        %v2793 = vshrl.u32 %v2792, 7
        %v2794 = vsub.s32 %v2791, %v2793
        %v2795 = vrot.slane %v2788, %v2794
        %v2796 = vcombine.low %v2787, %v2795
        %v2798 = vunpack.c.l.s4 1934713408
        %v2799 = vunpack.c.0.s8 %v2798
        %v2800 = vlaneseq
        %v2801 = vshrl.u32 %v2800, 7
        %v2802 = vsub.s32 %v2799, %v2801
        %v2803 = vrot.slane %v2796, %v2802
        %v2804 = vcombine.high %v2803, 0
        %v2805 = vcombine.low %v2677, %v2684
        %v2807 = vunpack.c.l.s4 1983009808
        %v2808 = vunpack.c.0.s8 %v2807
        %v2809 = vlaneseq
        %v2810 = vshrl.u32 %v2809, 7
        %v2811 = vsub.s32 %v2808, %v2810
        %v2812 = vrot.slane %v2805, %v2811
        %v2813 = vcombine.low %v2687, %v2688
        %v2815 = vunpack.c.l.s4 1983009808
        %v2816 = vunpack.c.0.s8 %v2815
        %v2817 = vlaneseq
        %v2818 = vshrl.u32 %v2817, 7
        %v2819 = vsub.s32 %v2816, %v2818
        %v2820 = vrot.slane %v2813, %v2819
        %v2821 = vcombine.low %v2812, %v2820
        %v2823 = vunpack.c.l.s4 1934713408
        %v2824 = vunpack.c.0.s8 %v2823
        %v2825 = vlaneseq
        %v2826 = vshrl.u32 %v2825, 7
        %v2827 = vsub.s32 %v2824, %v2826
        %v2828 = vrot.slane %v2821, %v2827
        %v2829 = vcombine.high %v2828, 0
        %v2830 = vcombine.low %v2743, %v2750
        %v2832 = vunpack.c.l.s4 1983009808
        %v2833 = vunpack.c.0.s8 %v2832
        %v2834 = vlaneseq
        %v2835 = vshrl.u32 %v2834, 7
        %v2836 = vsub.s32 %v2833, %v2835
        %v2837 = vrot.slane %v2830, %v2836
        %v2838 = vcombine.low %v2753, %v2754
        %v2840 = vunpack.c.l.s4 1983009808
        %v2841 = vunpack.c.0.s8 %v2840
        %v2842 = vlaneseq
        %v2843 = vshrl.u32 %v2842, 7
        %v2844 = vsub.s32 %v2841, %v2843
        %v2845 = vrot.slane %v2838, %v2844
        %v2846 = vcombine.low %v2837, %v2845
        %v2848 = vunpack.c.l.s4 1934713408
        %v2849 = vunpack.c.0.s8 %v2848
        %v2850 = vlaneseq
        %v2851 = vshrl.u32 %v2850, 7
        %v2852 = vsub.s32 %v2849, %v2851
        %v2853 = vrot.slane %v2846, %v2852
        %v2854 = vcombine.high %v2853, 0
        %v2857 = vpack.i.b16 %v2803, %v2778
        %v2858 = vshrl.u32 %v2778, 16
        %v2859 = vshrl.u32 %v2803, 16
        %v2860 = vpack.i.b16 %v2859, %v2858
        %v2863 = vpack.i.b16 %v2804, %v2779
        %v2864 = vshrl.u32 %v2779, 16
        %v2865 = vshrl.u32 %v2804, 16
        %v2866 = vpack.i.b16 %v2865, %v2864
        %v2869 = vpack.i.b16 %v2853, %v2828
        %v2870 = vshrl.u32 %v2828, 16
        %v2871 = vshrl.u32 %v2853, 16
        %v2872 = vpack.i.b16 %v2871, %v2870
        %v2875 = vpack.i.b16 %v2854, %v2829
        %v2876 = vshrl.u32 %v2829, 16
        %v2877 = vshrl.u32 %v2854, 16
        %v2878 = vpack.i.b16 %v2877, %v2876
        %vm2879 = vcmask 64512
        %v2881 = vsel %vm2879, %v2297, 0
        %v2884 = vsel %vm2879, %v2577, 0
        %2886 = vmatprep.subr.bf16.mxu0 0
        %2887 = vmatpush1.bf16.xpose.msra.mxu0 %v2884
        %2888 = vmatprep.subr.bf16.mxu0 0
        %2889 = vmatpush1.bf16.xpose.msra.mxu0 0
        %2890 = vmatprep.subr.bf16.mxu0 0
        %2891 = vmatpush1.bf16.xpose.msra.mxu0 0
        %2892 = vmatprep.subr.bf16.mxu0 0
        %2893 = vmatpush1.bf16.xpose.msra.mxu0 0
        %2894 = vmatprep.subr.bf16.mxu0 0
        %2895 = vmatpush1.bf16.xpose.msra.mxu0 0
        %2896 = vmatprep.subr.bf16.mxu0 0
        %2897 = vmatpush1.bf16.xpose.msra.mxu0 0
        %2898 = vmatprep.subr.bf16.mxu0 0
        %2899 = vmatpush1.bf16.xpose.msra.mxu0 0
        %2900 = vmatprep.subr.bf16.mxu0 0
        %2901 = vmatpush1.bf16.xpose.msra.mxu0 0
        %2902 = vmatprep.subr.bf16.mxu0 0
        %2903 = vmatpush1.bf16.xpose.msra.mxu0 0
        %2904 = vmatprep.subr.bf16.mxu0 0
        %2905 = vmatpush1.bf16.xpose.msra.mxu0 0
        %2906 = vmatprep.subr.bf16.mxu0 0
        %2907 = vmatpush1.bf16.xpose.msra.mxu0 0
        %2908 = vmatprep.subr.bf16.mxu0 0
        %2909 = vmatpush1.bf16.xpose.msra.mxu0 0
        %2910 = vmatprep.subr.bf16.mxu0 0
        %2911 = vmatpush1.bf16.xpose.msra.mxu0 0
        %2912 = vmatprep.subr.bf16.mxu0 0
        %2913 = vmatpush1.bf16.xpose.msra.mxu0 0
        %2914 = vmatprep.subr.bf16.mxu0 0
        %2915 = vmatpush1.bf16.xpose.msra.mxu0 0
        %2916 = vmatprep.subr.bf16.mxu0 0
        %2917 = vmatpush1.bf16.xpose.msra.mxu0 0
        %2918 = vmatprep.mubr.bf16.mxu0 0
        %2919 = vmatmul.mubr.bf16.gmra.mrb[0].mxu0 %v2881
        %v2920 = vpop.f32.mrb[0].mxu0
        %v2921 = vadd.f32 0.0, %v2920
        %v2922 = vpop.f32.mrb[0].mxu0
        %v2923 = vpop.f32.mrb[0].mxu0
        %v2924 = vpop.f32.mrb[0].mxu0
        %2925 = vdwg.mxu0
        %v2927 = vsel %vm2879, %v2300, 0
        %v2930 = vsel %vm2879, %v2580, 0
        %2932 = vmatprep.subr.bf16.mxu0 0
        %2933 = vmatpush1.bf16.xpose.msra.mxu0 %v2930
        %2934 = vmatprep.subr.bf16.mxu0 0
        %2935 = vmatpush1.bf16.xpose.msra.mxu0 0
        %2936 = vmatprep.subr.bf16.mxu0 0
        %2937 = vmatpush1.bf16.xpose.msra.mxu0 0
        %2938 = vmatprep.subr.bf16.mxu0 0
        %2939 = vmatpush1.bf16.xpose.msra.mxu0 0
        %2940 = vmatprep.subr.bf16.mxu0 0
        %2941 = vmatpush1.bf16.xpose.msra.mxu0 0
        %2942 = vmatprep.subr.bf16.mxu0 0
        %2943 = vmatpush1.bf16.xpose.msra.mxu0 0
        %2944 = vmatprep.subr.bf16.mxu0 0
        %2945 = vmatpush1.bf16.xpose.msra.mxu0 0
        %2946 = vmatprep.subr.bf16.mxu0 0
        %2947 = vmatpush1.bf16.xpose.msra.mxu0 0
        %2948 = vmatprep.subr.bf16.mxu0 0
        %2949 = vmatpush1.bf16.xpose.msra.mxu0 0
        %2950 = vmatprep.subr.bf16.mxu0 0
        %2951 = vmatpush1.bf16.xpose.msra.mxu0 0
        %2952 = vmatprep.subr.bf16.mxu0 0
        %2953 = vmatpush1.bf16.xpose.msra.mxu0 0
        %2954 = vmatprep.subr.bf16.mxu0 0
        %2955 = vmatpush1.bf16.xpose.msra.mxu0 0
        %2956 = vmatprep.subr.bf16.mxu0 0
        %2957 = vmatpush1.bf16.xpose.msra.mxu0 0
        %2958 = vmatprep.subr.bf16.mxu0 0
        %2959 = vmatpush1.bf16.xpose.msra.mxu0 0
        %2960 = vmatprep.subr.bf16.mxu0 0
        %2961 = vmatpush1.bf16.xpose.msra.mxu0 0
        %2962 = vmatprep.subr.bf16.mxu0 0
        %2963 = vmatpush1.bf16.xpose.msra.mxu0 0
        %2964 = vmatprep.mubr.bf16.mxu0 0
        %2965 = vmatmul.mubr.bf16.gmra.mrb[0].mxu0 %v2927
        %v2966 = vpop.f32.mrb[0].mxu0
        %v2967 = vadd.f32 0.0, %v2966
        %v2968 = vpop.f32.mrb[0].mxu0
        %v2969 = vpop.f32.mrb[0].mxu0
        %v2970 = vpop.f32.mrb[0].mxu0
        %2971 = vdwg.mxu0
        %v2973 = vsel %vm2879, %v2303, 0
        %v2976 = vsel %vm2879, %v2583, 0
        %2978 = vmatprep.subr.bf16.mxu0 0
        %2979 = vmatpush1.bf16.xpose.msra.mxu0 %v2976
        %2980 = vmatprep.subr.bf16.mxu0 0
        %2981 = vmatpush1.bf16.xpose.msra.mxu0 0
        %2982 = vmatprep.subr.bf16.mxu0 0
        %2983 = vmatpush1.bf16.xpose.msra.mxu0 0
        %2984 = vmatprep.subr.bf16.mxu0 0
        %2985 = vmatpush1.bf16.xpose.msra.mxu0 0
        %2986 = vmatprep.subr.bf16.mxu0 0
        %2987 = vmatpush1.bf16.xpose.msra.mxu0 0
        %2988 = vmatprep.subr.bf16.mxu0 0
        %2989 = vmatpush1.bf16.xpose.msra.mxu0 0
        %2990 = vmatprep.subr.bf16.mxu0 0
        %2991 = vmatpush1.bf16.xpose.msra.mxu0 0
        %2992 = vmatprep.subr.bf16.mxu0 0
        %2993 = vmatpush1.bf16.xpose.msra.mxu0 0
        %2994 = vmatprep.subr.bf16.mxu0 0
        %2995 = vmatpush1.bf16.xpose.msra.mxu0 0
        %2996 = vmatprep.subr.bf16.mxu0 0
        %2997 = vmatpush1.bf16.xpose.msra.mxu0 0
        %2998 = vmatprep.subr.bf16.mxu0 0
        %2999 = vmatpush1.bf16.xpose.msra.mxu0 0
        %3000 = vmatprep.subr.bf16.mxu0 0
        %3001 = vmatpush1.bf16.xpose.msra.mxu0 0
        %3002 = vmatprep.subr.bf16.mxu0 0
        %3003 = vmatpush1.bf16.xpose.msra.mxu0 0
        %3004 = vmatprep.subr.bf16.mxu0 0
        %3005 = vmatpush1.bf16.xpose.msra.mxu0 0
        %3006 = vmatprep.subr.bf16.mxu0 0
        %3007 = vmatpush1.bf16.xpose.msra.mxu0 0
        %3008 = vmatprep.subr.bf16.mxu0 0
        %3009 = vmatpush1.bf16.xpose.msra.mxu0 0
        %3010 = vmatprep.mubr.bf16.mxu0 0
        %3011 = vmatmul.mubr.bf16.gmra.mrb[0].mxu0 %v2973
        %v3012 = vpop.f32.mrb[0].mxu0
        %v3013 = vadd.f32 0.0, %v3012
        %v3014 = vpop.f32.mrb[0].mxu0
        %v3015 = vpop.f32.mrb[0].mxu0
        %v3016 = vpop.f32.mrb[0].mxu0
        %3017 = vdwg.mxu0
        %v3019 = vsel %vm2879, %v2306, 0
        %v3022 = vsel %vm2879, %v2586, 0
        %3024 = vmatprep.subr.bf16.mxu0 0
        %3025 = vmatpush1.bf16.xpose.msra.mxu0 %v3022
        %3026 = vmatprep.subr.bf16.mxu0 0
        %3027 = vmatpush1.bf16.xpose.msra.mxu0 0
        %3028 = vmatprep.subr.bf16.mxu0 0
        %3029 = vmatpush1.bf16.xpose.msra.mxu0 0
        %3030 = vmatprep.subr.bf16.mxu0 0
        %3031 = vmatpush1.bf16.xpose.msra.mxu0 0
        %3032 = vmatprep.subr.bf16.mxu0 0
        %3033 = vmatpush1.bf16.xpose.msra.mxu0 0
        %3034 = vmatprep.subr.bf16.mxu0 0
        %3035 = vmatpush1.bf16.xpose.msra.mxu0 0
        %3036 = vmatprep.subr.bf16.mxu0 0
        %3037 = vmatpush1.bf16.xpose.msra.mxu0 0
        %3038 = vmatprep.subr.bf16.mxu0 0
        %3039 = vmatpush1.bf16.xpose.msra.mxu0 0
        %3040 = vmatprep.subr.bf16.mxu0 0
        %3041 = vmatpush1.bf16.xpose.msra.mxu0 0
        %3042 = vmatprep.subr.bf16.mxu0 0
        %3043 = vmatpush1.bf16.xpose.msra.mxu0 0
        %3044 = vmatprep.subr.bf16.mxu0 0
        %3045 = vmatpush1.bf16.xpose.msra.mxu0 0
        %3046 = vmatprep.subr.bf16.mxu0 0
        %3047 = vmatpush1.bf16.xpose.msra.mxu0 0
        %3048 = vmatprep.subr.bf16.mxu0 0
        %3049 = vmatpush1.bf16.xpose.msra.mxu0 0
        %3050 = vmatprep.subr.bf16.mxu0 0
        %3051 = vmatpush1.bf16.xpose.msra.mxu0 0
        %3052 = vmatprep.subr.bf16.mxu0 0
        %3053 = vmatpush1.bf16.xpose.msra.mxu0 0
        %3054 = vmatprep.subr.bf16.mxu0 0
        %3055 = vmatpush1.bf16.xpose.msra.mxu0 0
        %3056 = vmatprep.mubr.bf16.mxu0 0
        %3057 = vmatmul.mubr.bf16.gmra.mrb[0].mxu0 %v3019
        %v3058 = vpop.f32.mrb[0].mxu0
        %v3059 = vadd.f32 0.0, %v3058
        %v3060 = vpop.f32.mrb[0].mxu0
        %v3061 = vpop.f32.mrb[0].mxu0
        %v3062 = vpop.f32.mrb[0].mxu0
        %3063 = vdwg.mxu0
        %v3065 = vsel %vm2879, %v2309, 0
        %v3068 = vsel %vm2879, %v2589, 0
        %3070 = vmatprep.subr.bf16.mxu0 0
        %3071 = vmatpush1.bf16.xpose.msra.mxu0 %v3068
        %3072 = vmatprep.subr.bf16.mxu0 0
        %3073 = vmatpush1.bf16.xpose.msra.mxu0 0
        %3074 = vmatprep.subr.bf16.mxu0 0
        %3075 = vmatpush1.bf16.xpose.msra.mxu0 0
        %3076 = vmatprep.subr.bf16.mxu0 0
        %3077 = vmatpush1.bf16.xpose.msra.mxu0 0
        %3078 = vmatprep.subr.bf16.mxu0 0
        %3079 = vmatpush1.bf16.xpose.msra.mxu0 0
        %3080 = vmatprep.subr.bf16.mxu0 0
        %3081 = vmatpush1.bf16.xpose.msra.mxu0 0
        %3082 = vmatprep.subr.bf16.mxu0 0
        %3083 = vmatpush1.bf16.xpose.msra.mxu0 0
        %3084 = vmatprep.subr.bf16.mxu0 0
        %3085 = vmatpush1.bf16.xpose.msra.mxu0 0
        %3086 = vmatprep.subr.bf16.mxu0 0
        %3087 = vmatpush1.bf16.xpose.msra.mxu0 0
        %3088 = vmatprep.subr.bf16.mxu0 0
        %3089 = vmatpush1.bf16.xpose.msra.mxu0 0
        %3090 = vmatprep.subr.bf16.mxu0 0
        %3091 = vmatpush1.bf16.xpose.msra.mxu0 0
        %3092 = vmatprep.subr.bf16.mxu0 0
        %3093 = vmatpush1.bf16.xpose.msra.mxu0 0
        %3094 = vmatprep.subr.bf16.mxu0 0
        %3095 = vmatpush1.bf16.xpose.msra.mxu0 0
        %3096 = vmatprep.subr.bf16.mxu0 0
        %3097 = vmatpush1.bf16.xpose.msra.mxu0 0
        %3098 = vmatprep.subr.bf16.mxu0 0
        %3099 = vmatpush1.bf16.xpose.msra.mxu0 0
        %3100 = vmatprep.subr.bf16.mxu0 0
        %3101 = vmatpush1.bf16.xpose.msra.mxu0 0
        %3102 = vmatprep.mubr.bf16.mxu0 0
        %3103 = vmatmul.mubr.bf16.gmra.mrb[0].mxu0 %v3065
        %v3104 = vpop.f32.mrb[0].mxu0
        %v3105 = vadd.f32 0.0, %v3104
        %v3106 = vpop.f32.mrb[0].mxu0
        %v3107 = vpop.f32.mrb[0].mxu0
        %v3108 = vpop.f32.mrb[0].mxu0
        %3109 = vdwg.mxu0
        %v3111 = vsel %vm2879, %v2312, 0
        %v3114 = vsel %vm2879, %v2592, 0
        %3116 = vmatprep.subr.bf16.mxu0 0
        %3117 = vmatpush1.bf16.xpose.msra.mxu0 %v3114
        %3118 = vmatprep.subr.bf16.mxu0 0
        %3119 = vmatpush1.bf16.xpose.msra.mxu0 0
        %3120 = vmatprep.subr.bf16.mxu0 0
        %3121 = vmatpush1.bf16.xpose.msra.mxu0 0
        %3122 = vmatprep.subr.bf16.mxu0 0
        %3123 = vmatpush1.bf16.xpose.msra.mxu0 0
        %3124 = vmatprep.subr.bf16.mxu0 0
        %3125 = vmatpush1.bf16.xpose.msra.mxu0 0
        %3126 = vmatprep.subr.bf16.mxu0 0
        %3127 = vmatpush1.bf16.xpose.msra.mxu0 0
        %3128 = vmatprep.subr.bf16.mxu0 0
        %3129 = vmatpush1.bf16.xpose.msra.mxu0 0
        %3130 = vmatprep.subr.bf16.mxu0 0
        %3131 = vmatpush1.bf16.xpose.msra.mxu0 0
        %3132 = vmatprep.subr.bf16.mxu0 0
        %3133 = vmatpush1.bf16.xpose.msra.mxu0 0
        %3134 = vmatprep.subr.bf16.mxu0 0
        %3135 = vmatpush1.bf16.xpose.msra.mxu0 0
        %3136 = vmatprep.subr.bf16.mxu0 0
        %3137 = vmatpush1.bf16.xpose.msra.mxu0 0
        %3138 = vmatprep.subr.bf16.mxu0 0
        %3139 = vmatpush1.bf16.xpose.msra.mxu0 0
        %3140 = vmatprep.subr.bf16.mxu0 0
        %3141 = vmatpush1.bf16.xpose.msra.mxu0 0
        %3142 = vmatprep.subr.bf16.mxu0 0
        %3143 = vmatpush1.bf16.xpose.msra.mxu0 0
        %3144 = vmatprep.subr.bf16.mxu0 0
        %3145 = vmatpush1.bf16.xpose.msra.mxu0 0
        %3146 = vmatprep.subr.bf16.mxu0 0
        %3147 = vmatpush1.bf16.xpose.msra.mxu0 0
        %3148 = vmatprep.mubr.bf16.mxu0 0
        %3149 = vmatmul.mubr.bf16.gmra.mrb[0].mxu0 %v3111
        %v3150 = vpop.f32.mrb[0].mxu0
        %v3151 = vadd.f32 0.0, %v3150
        %v3152 = vpop.f32.mrb[0].mxu0
        %v3153 = vpop.f32.mrb[0].mxu0
        %v3154 = vpop.f32.mrb[0].mxu0
        %3155 = vdwg.mxu0
        %v3157 = vsel %vm2879, %v2315, 0
        %v3160 = vsel %vm2879, %v2595, 0
        %3162 = vmatprep.subr.bf16.mxu0 0
        %3163 = vmatpush1.bf16.xpose.msra.mxu0 %v3160
        %3164 = vmatprep.subr.bf16.mxu0 0
        %3165 = vmatpush1.bf16.xpose.msra.mxu0 0
        %3166 = vmatprep.subr.bf16.mxu0 0
        %3167 = vmatpush1.bf16.xpose.msra.mxu0 0
        %3168 = vmatprep.subr.bf16.mxu0 0
        %3169 = vmatpush1.bf16.xpose.msra.mxu0 0
        %3170 = vmatprep.subr.bf16.mxu0 0
        %3171 = vmatpush1.bf16.xpose.msra.mxu0 0
        %3172 = vmatprep.subr.bf16.mxu0 0
        %3173 = vmatpush1.bf16.xpose.msra.mxu0 0
        %3174 = vmatprep.subr.bf16.mxu0 0
        %3175 = vmatpush1.bf16.xpose.msra.mxu0 0
        %3176 = vmatprep.subr.bf16.mxu0 0
        %3177 = vmatpush1.bf16.xpose.msra.mxu0 0
        %3178 = vmatprep.subr.bf16.mxu0 0
        %3179 = vmatpush1.bf16.xpose.msra.mxu0 0
        %3180 = vmatprep.subr.bf16.mxu0 0
        %3181 = vmatpush1.bf16.xpose.msra.mxu0 0
        %3182 = vmatprep.subr.bf16.mxu0 0
        %3183 = vmatpush1.bf16.xpose.msra.mxu0 0
        %3184 = vmatprep.subr.bf16.mxu0 0
        %3185 = vmatpush1.bf16.xpose.msra.mxu0 0
        %3186 = vmatprep.subr.bf16.mxu0 0
        %3187 = vmatpush1.bf16.xpose.msra.mxu0 0
        %3188 = vmatprep.subr.bf16.mxu0 0
        %3189 = vmatpush1.bf16.xpose.msra.mxu0 0
        %3190 = vmatprep.subr.bf16.mxu0 0
        %3191 = vmatpush1.bf16.xpose.msra.mxu0 0
        %3192 = vmatprep.subr.bf16.mxu0 0
        %3193 = vmatpush1.bf16.xpose.msra.mxu0 0
        %3194 = vmatprep.mubr.bf16.mxu0 0
        %3195 = vmatmul.mubr.bf16.gmra.mrb[0].mxu0 %v3157
        %v3196 = vpop.f32.mrb[0].mxu0
        %v3197 = vadd.f32 0.0, %v3196
        %v3198 = vpop.f32.mrb[0].mxu0
        %v3199 = vpop.f32.mrb[0].mxu0
        %v3200 = vpop.f32.mrb[0].mxu0
        %3201 = vdwg.mxu0
        %v3203 = vsel %vm2879, %v2318, 0
        %v3206 = vsel %vm2879, %v2598, 0
        %3208 = vmatprep.subr.bf16.mxu0 0
        %3209 = vmatpush1.bf16.xpose.msra.mxu0 %v3206
        %3210 = vmatprep.subr.bf16.mxu0 0
        %3211 = vmatpush1.bf16.xpose.msra.mxu0 0
        %3212 = vmatprep.subr.bf16.mxu0 0
        %3213 = vmatpush1.bf16.xpose.msra.mxu0 0
        %3214 = vmatprep.subr.bf16.mxu0 0
        %3215 = vmatpush1.bf16.xpose.msra.mxu0 0
        %3216 = vmatprep.subr.bf16.mxu0 0
        %3217 = vmatpush1.bf16.xpose.msra.mxu0 0
        %3218 = vmatprep.subr.bf16.mxu0 0
        %3219 = vmatpush1.bf16.xpose.msra.mxu0 0
        %3220 = vmatprep.subr.bf16.mxu0 0
        %3221 = vmatpush1.bf16.xpose.msra.mxu0 0
        %3222 = vmatprep.subr.bf16.mxu0 0
        %3223 = vmatpush1.bf16.xpose.msra.mxu0 0
        %3224 = vmatprep.subr.bf16.mxu0 0
        %3225 = vmatpush1.bf16.xpose.msra.mxu0 0
        %3226 = vmatprep.subr.bf16.mxu0 0
        %3227 = vmatpush1.bf16.xpose.msra.mxu0 0
        %3228 = vmatprep.subr.bf16.mxu0 0
        %3229 = vmatpush1.bf16.xpose.msra.mxu0 0
        %3230 = vmatprep.subr.bf16.mxu0 0
        %3231 = vmatpush1.bf16.xpose.msra.mxu0 0
        %3232 = vmatprep.subr.bf16.mxu0 0
        %3233 = vmatpush1.bf16.xpose.msra.mxu0 0
        %3234 = vmatprep.subr.bf16.mxu0 0
        %3235 = vmatpush1.bf16.xpose.msra.mxu0 0
        %3236 = vmatprep.subr.bf16.mxu0 0
        %3237 = vmatpush1.bf16.xpose.msra.mxu0 0
        %3238 = vmatprep.subr.bf16.mxu0 0
        %3239 = vmatpush1.bf16.xpose.msra.mxu0 0
        %3240 = vmatprep.mubr.bf16.mxu0 0
        %3241 = vmatmul.mubr.bf16.gmra.mrb[0].mxu0 %v3203
        %v3242 = vpop.f32.mrb[0].mxu0
        %v3243 = vadd.f32 0.0, %v3242
        %v3244 = vpop.f32.mrb[0].mxu0
        %v3245 = vpop.f32.mrb[0].mxu0
        %v3246 = vpop.f32.mrb[0].mxu0
        %3247 = vdwg.mxu0
        %v3248 = vsel %vm2879, %v2921, -inf
        %3249 = vmax.xlane.f32.xlu0 %v3248
        %v3250 = vpop.xlane.xlu0 %3249
        %v3251 = vsel %vm2879, %v2967, -inf
        %3252 = vmax.xlane.f32.xlu0 %v3251
        %v3253 = vpop.xlane.xlu0 %3252
        %v3254 = vsel %vm2879, %v3013, -inf
        %3255 = vmax.xlane.f32.xlu0 %v3254
        %v3256 = vpop.xlane.xlu0 %3255
        %v3257 = vsel %vm2879, %v3059, -inf
        %3258 = vmax.xlane.f32.xlu0 %v3257
        %v3259 = vpop.xlane.xlu0 %3258
        %v3260 = vsel %vm2879, %v3105, -inf
        %3261 = vmax.xlane.f32.xlu0 %v3260
        %v3262 = vpop.xlane.xlu0 %3261
        %v3263 = vsel %vm2879, %v3151, -inf
        %3264 = vmax.xlane.f32.xlu0 %v3263
        %v3265 = vpop.xlane.xlu0 %3264
        %v3266 = vsel %vm2879, %v3197, -inf
        %3267 = vmax.xlane.f32.xlu0 %v3266
        %v3268 = vpop.xlane.xlu0 %3267
        %v3269 = vsel %vm2879, %v3243, -inf
        %3270 = vmax.xlane.f32.xlu0 %v3269
        %v3271 = vpop.xlane.xlu0 %3270
        %v3272 = vsub.f32 %v2921, %v3250
        %v3273 = vsub.f32 %v2967, %v3253
        %v3274 = vsub.f32 %v3013, %v3256
        %v3275 = vsub.f32 %v3059, %v3259
        %v3276 = vsub.f32 %v3105, %v3262
        %v3277 = vsub.f32 %v3151, %v3265
        %v3278 = vsub.f32 %v3197, %v3268
        %v3279 = vsub.f32 %v3243, %v3271
        %v3280 = vmul.f32 %v3272, 1.442695
        %v3281 = vpow.pop %v3280
        %v3282 = vmul.f32 %v3273, 1.442695
        %v3283 = vpow.pop %v3282
        %v3284 = vmul.f32 %v3274, 1.442695
        %v3285 = vpow.pop %v3284
        %v3286 = vmul.f32 %v3275, 1.442695
        %v3287 = vpow.pop %v3286
        %v3288 = vmul.f32 %v3276, 1.442695
        %v3289 = vpow.pop %v3288
        %v3290 = vmul.f32 %v3277, 1.442695
        %v3291 = vpow.pop %v3290
        %v3292 = vmul.f32 %v3278, 1.442695
        %v3293 = vpow.pop %v3292
        %v3294 = vmul.f32 %v3279, 1.442695
        %v3295 = vpow.pop %v3294
        %v3296 = vsel %vm2879, %v3281, 0.0
        %3297 = vadd.xlane.f32.xlu0 %v3296
        %v3298 = vpop.xlane.xlu0 %3297
        %v3299 = vsel %vm2879, %v3283, 0.0
        %3300 = vadd.xlane.f32.xlu0 %v3299
        %v3301 = vpop.xlane.xlu0 %3300
        %v3302 = vsel %vm2879, %v3285, 0.0
        %3303 = vadd.xlane.f32.xlu0 %v3302
        %v3304 = vpop.xlane.xlu0 %3303
        %v3305 = vsel %vm2879, %v3287, 0.0
        %3306 = vadd.xlane.f32.xlu0 %v3305
        %v3307 = vpop.xlane.xlu0 %3306
        %v3308 = vsel %vm2879, %v3289, 0.0
        %3309 = vadd.xlane.f32.xlu0 %v3308
        %v3310 = vpop.xlane.xlu0 %3309
        %v3311 = vsel %vm2879, %v3291, 0.0
        %3312 = vadd.xlane.f32.xlu0 %v3311
        %v3313 = vpop.xlane.xlu0 %3312
        %v3314 = vsel %vm2879, %v3293, 0.0
        %3315 = vadd.xlane.f32.xlu0 %v3314
        %v3316 = vpop.xlane.xlu0 %3315
        %v3317 = vsel %vm2879, %v3295, 0.0
        %3318 = vadd.xlane.f32.xlu0 %v3317
        %v3319 = vpop.xlane.xlu0 %3318
        %v3320 = vrcp.pop %v3298
        %v3321 = vrcp.pop %v3301
        %v3322 = vrcp.pop %v3304
        %v3323 = vrcp.pop %v3307
        %v3324 = vrcp.pop %v3310
        %v3325 = vrcp.pop %v3313
        %v3326 = vrcp.pop %v3316
        %v3327 = vrcp.pop %v3319
        %v3328 = vmul.f32 %v3281, %v3320
        %v3329 = vmul.f32 %v3283, %v3321
        %v3330 = vmul.f32 %v3285, %v3322
        %v3331 = vmul.f32 %v3287, %v3323
        %v3332 = vmul.f32 %v3289, %v3324
        %v3333 = vmul.f32 %v3291, %v3325
        %v3334 = vmul.f32 %v3293, %v3326
        %v3335 = vmul.f32 %v3295, %v3327
        %v3336 = vpack.c.bf16 %v3328, %v3328
        %v3337 = vpack.c.bf16 %v3329, %v3329
        %v3338 = vpack.c.bf16 %v3330, %v3330
        %v3339 = vpack.c.bf16 %v3331, %v3331
        %v3340 = vpack.c.bf16 %v3332, %v3332
        %v3341 = vpack.c.bf16 %v3333, %v3333
        %v3342 = vpack.c.bf16 %v3334, %v3334
        %v3343 = vpack.c.bf16 %v3335, %v3335
        %v3345 = vsel %vm2879, %v3336, 0
        %vm3347 = vcmask 1043456
        %v3349 = vsel %vm3347, %v2857, 0
        %3351 = vmatprep.subr.bf16.mxu0 0
        %3352 = vmatpush1.bf16.msra.mxu0 %v3349
        %3353 = vmatprep.subr.bf16.mxu0 0
        %3354 = vmatpush1.bf16.msra.mxu0 0
        %3355 = vmatprep.subr.bf16.mxu0 0
        %3356 = vmatpush1.bf16.msra.mxu0 0
        %3357 = vmatprep.subr.bf16.mxu0 0
        %3358 = vmatpush1.bf16.msra.mxu0 0
        %3359 = vmatprep.subr.bf16.mxu0 0
        %3360 = vmatpush1.bf16.msra.mxu0 0
        %3361 = vmatprep.subr.bf16.mxu0 0
        %3362 = vmatpush1.bf16.msra.mxu0 0
        %3363 = vmatprep.subr.bf16.mxu0 0
        %3364 = vmatpush1.bf16.msra.mxu0 0
        %3365 = vmatprep.subr.bf16.mxu0 0
        %3366 = vmatpush1.bf16.msra.mxu0 0
        %3367 = vmatprep.subr.bf16.mxu0 0
        %3368 = vmatpush1.bf16.msra.mxu0 0
        %3369 = vmatprep.subr.bf16.mxu0 0
        %3370 = vmatpush1.bf16.msra.mxu0 0
        %3371 = vmatprep.subr.bf16.mxu0 0
        %3372 = vmatpush1.bf16.msra.mxu0 0
        %3373 = vmatprep.subr.bf16.mxu0 0
        %3374 = vmatpush1.bf16.msra.mxu0 0
        %3375 = vmatprep.subr.bf16.mxu0 0
        %3376 = vmatpush1.bf16.msra.mxu0 0
        %3377 = vmatprep.subr.bf16.mxu0 0
        %3378 = vmatpush1.bf16.msra.mxu0 0
        %3379 = vmatprep.subr.bf16.mxu0 0
        %3380 = vmatpush1.bf16.msra.mxu0 0
        %3381 = vmatprep.subr.bf16.mxu0 0
        %3382 = vmatpush1.bf16.msra.mxu0 0
        %3383 = vmatprep.mubr.bf16.mxu0 0
        %3384 = vmatmul.mubr.bf16.gmra.mrb[0].mxu0 %v3345
        %v3385 = vpop.f32.mrb[0].mxu0
        %v3386 = vadd.f32 0.0, %v3385
        %v3387 = vpop.f32.mrb[0].mxu0
        %v3388 = vpop.f32.mrb[0].mxu0
        %v3389 = vpop.f32.mrb[0].mxu0
        %3390 = vdwg.mxu0
        %v3392 = vsel %vm2879, %v3337, 0
        %v3395 = vsel %vm3347, %v2860, 0
        %3397 = vmatprep.subr.bf16.mxu0 0
        %3398 = vmatpush1.bf16.msra.mxu0 %v3395
        %3399 = vmatprep.subr.bf16.mxu0 0
        %3400 = vmatpush1.bf16.msra.mxu0 0
        %3401 = vmatprep.subr.bf16.mxu0 0
        %3402 = vmatpush1.bf16.msra.mxu0 0
        %3403 = vmatprep.subr.bf16.mxu0 0
        %3404 = vmatpush1.bf16.msra.mxu0 0
        %3405 = vmatprep.subr.bf16.mxu0 0
        %3406 = vmatpush1.bf16.msra.mxu0 0
        %3407 = vmatprep.subr.bf16.mxu0 0
        %3408 = vmatpush1.bf16.msra.mxu0 0
        %3409 = vmatprep.subr.bf16.mxu0 0
        %3410 = vmatpush1.bf16.msra.mxu0 0
        %3411 = vmatprep.subr.bf16.mxu0 0
        %3412 = vmatpush1.bf16.msra.mxu0 0
        %3413 = vmatprep.subr.bf16.mxu0 0
        %3414 = vmatpush1.bf16.msra.mxu0 0
        %3415 = vmatprep.subr.bf16.mxu0 0
        %3416 = vmatpush1.bf16.msra.mxu0 0
        %3417 = vmatprep.subr.bf16.mxu0 0
        %3418 = vmatpush1.bf16.msra.mxu0 0
        %3419 = vmatprep.subr.bf16.mxu0 0
        %3420 = vmatpush1.bf16.msra.mxu0 0
        %3421 = vmatprep.subr.bf16.mxu0 0
        %3422 = vmatpush1.bf16.msra.mxu0 0
        %3423 = vmatprep.subr.bf16.mxu0 0
        %3424 = vmatpush1.bf16.msra.mxu0 0
        %3425 = vmatprep.subr.bf16.mxu0 0
        %3426 = vmatpush1.bf16.msra.mxu0 0
        %3427 = vmatprep.subr.bf16.mxu0 0
        %3428 = vmatpush1.bf16.msra.mxu0 0
        %3429 = vmatprep.mubr.bf16.mxu0 0
        %3430 = vmatmul.mubr.bf16.gmra.mrb[0].mxu0 %v3392
        %v3431 = vpop.f32.mrb[0].mxu0
        %v3432 = vadd.f32 0.0, %v3431
        %v3433 = vpop.f32.mrb[0].mxu0
        %v3434 = vpop.f32.mrb[0].mxu0
        %v3435 = vpop.f32.mrb[0].mxu0
        %3436 = vdwg.mxu0
        %v3438 = vsel %vm2879, %v3338, 0
        %v3441 = vsel %vm3347, %v2863, 0
        %3443 = vmatprep.subr.bf16.mxu0 0
        %3444 = vmatpush1.bf16.msra.mxu0 %v3441
        %3445 = vmatprep.subr.bf16.mxu0 0
        %3446 = vmatpush1.bf16.msra.mxu0 0
        %3447 = vmatprep.subr.bf16.mxu0 0
        %3448 = vmatpush1.bf16.msra.mxu0 0
        %3449 = vmatprep.subr.bf16.mxu0 0
        %3450 = vmatpush1.bf16.msra.mxu0 0
        %3451 = vmatprep.subr.bf16.mxu0 0
        %3452 = vmatpush1.bf16.msra.mxu0 0
        %3453 = vmatprep.subr.bf16.mxu0 0
        %3454 = vmatpush1.bf16.msra.mxu0 0
        %3455 = vmatprep.subr.bf16.mxu0 0
        %3456 = vmatpush1.bf16.msra.mxu0 0
        %3457 = vmatprep.subr.bf16.mxu0 0
        %3458 = vmatpush1.bf16.msra.mxu0 0
        %3459 = vmatprep.subr.bf16.mxu0 0
        %3460 = vmatpush1.bf16.msra.mxu0 0
        %3461 = vmatprep.subr.bf16.mxu0 0
        %3462 = vmatpush1.bf16.msra.mxu0 0
        %3463 = vmatprep.subr.bf16.mxu0 0
        %3464 = vmatpush1.bf16.msra.mxu0 0
        %3465 = vmatprep.subr.bf16.mxu0 0
        %3466 = vmatpush1.bf16.msra.mxu0 0
        %3467 = vmatprep.subr.bf16.mxu0 0
        %3468 = vmatpush1.bf16.msra.mxu0 0
        %3469 = vmatprep.subr.bf16.mxu0 0
        %3470 = vmatpush1.bf16.msra.mxu0 0
        %3471 = vmatprep.subr.bf16.mxu0 0
        %3472 = vmatpush1.bf16.msra.mxu0 0
        %3473 = vmatprep.subr.bf16.mxu0 0
        %3474 = vmatpush1.bf16.msra.mxu0 0
        %3475 = vmatprep.mubr.bf16.mxu0 0
        %3476 = vmatmul.mubr.bf16.gmra.mrb[0].mxu0 %v3438
        %v3477 = vpop.f32.mrb[0].mxu0
        %v3478 = vadd.f32 0.0, %v3477
        %v3479 = vpop.f32.mrb[0].mxu0
        %v3480 = vpop.f32.mrb[0].mxu0
        %v3481 = vpop.f32.mrb[0].mxu0
        %3482 = vdwg.mxu0
        %v3484 = vsel %vm2879, %v3339, 0
        %v3487 = vsel %vm3347, %v2866, 0
        %3489 = vmatprep.subr.bf16.mxu0 0
        %3490 = vmatpush1.bf16.msra.mxu0 %v3487
        %3491 = vmatprep.subr.bf16.mxu0 0
        %3492 = vmatpush1.bf16.msra.mxu0 0
        %3493 = vmatprep.subr.bf16.mxu0 0
        %3494 = vmatpush1.bf16.msra.mxu0 0
        %3495 = vmatprep.subr.bf16.mxu0 0
        %3496 = vmatpush1.bf16.msra.mxu0 0
        %3497 = vmatprep.subr.bf16.mxu0 0
        %3498 = vmatpush1.bf16.msra.mxu0 0
        %3499 = vmatprep.subr.bf16.mxu0 0
        %3500 = vmatpush1.bf16.msra.mxu0 0
        %3501 = vmatprep.subr.bf16.mxu0 0
        %3502 = vmatpush1.bf16.msra.mxu0 0
        %3503 = vmatprep.subr.bf16.mxu0 0
        %3504 = vmatpush1.bf16.msra.mxu0 0
        %3505 = vmatprep.subr.bf16.mxu0 0
        %3506 = vmatpush1.bf16.msra.mxu0 0
        %3507 = vmatprep.subr.bf16.mxu0 0
        %3508 = vmatpush1.bf16.msra.mxu0 0
        %3509 = vmatprep.subr.bf16.mxu0 0
        %3510 = vmatpush1.bf16.msra.mxu0 0
        %3511 = vmatprep.subr.bf16.mxu0 0
        %3512 = vmatpush1.bf16.msra.mxu0 0
        %3513 = vmatprep.subr.bf16.mxu0 0
        %3514 = vmatpush1.bf16.msra.mxu0 0
        %3515 = vmatprep.subr.bf16.mxu0 0
        %3516 = vmatpush1.bf16.msra.mxu0 0
        %3517 = vmatprep.subr.bf16.mxu0 0
        %3518 = vmatpush1.bf16.msra.mxu0 0
        %3519 = vmatprep.subr.bf16.mxu0 0
        %3520 = vmatpush1.bf16.msra.mxu0 0
        %3521 = vmatprep.mubr.bf16.mxu0 0
        %3522 = vmatmul.mubr.bf16.gmra.mrb[0].mxu0 %v3484
        %v3523 = vpop.f32.mrb[0].mxu0
        %v3524 = vadd.f32 0.0, %v3523
        %v3525 = vpop.f32.mrb[0].mxu0
        %v3526 = vpop.f32.mrb[0].mxu0
        %v3527 = vpop.f32.mrb[0].mxu0
        %3528 = vdwg.mxu0
        %v3530 = vsel %vm2879, %v3340, 0
        %v3533 = vsel %vm3347, %v2869, 0
        %3535 = vmatprep.subr.bf16.mxu0 0
        %3536 = vmatpush1.bf16.msra.mxu0 %v3533
        %3537 = vmatprep.subr.bf16.mxu0 0
        %3538 = vmatpush1.bf16.msra.mxu0 0
        %3539 = vmatprep.subr.bf16.mxu0 0
        %3540 = vmatpush1.bf16.msra.mxu0 0
        %3541 = vmatprep.subr.bf16.mxu0 0
        %3542 = vmatpush1.bf16.msra.mxu0 0
        %3543 = vmatprep.subr.bf16.mxu0 0
        %3544 = vmatpush1.bf16.msra.mxu0 0
        %3545 = vmatprep.subr.bf16.mxu0 0
        %3546 = vmatpush1.bf16.msra.mxu0 0
        %3547 = vmatprep.subr.bf16.mxu0 0
        %3548 = vmatpush1.bf16.msra.mxu0 0
        %3549 = vmatprep.subr.bf16.mxu0 0
        %3550 = vmatpush1.bf16.msra.mxu0 0
        %3551 = vmatprep.subr.bf16.mxu0 0
        %3552 = vmatpush1.bf16.msra.mxu0 0
        %3553 = vmatprep.subr.bf16.mxu0 0
        %3554 = vmatpush1.bf16.msra.mxu0 0
        %3555 = vmatprep.subr.bf16.mxu0 0
        %3556 = vmatpush1.bf16.msra.mxu0 0
        %3557 = vmatprep.subr.bf16.mxu0 0
        %3558 = vmatpush1.bf16.msra.mxu0 0
        %3559 = vmatprep.subr.bf16.mxu0 0
        %3560 = vmatpush1.bf16.msra.mxu0 0
        %3561 = vmatprep.subr.bf16.mxu0 0
        %3562 = vmatpush1.bf16.msra.mxu0 0
        %3563 = vmatprep.subr.bf16.mxu0 0
        %3564 = vmatpush1.bf16.msra.mxu0 0
        %3565 = vmatprep.subr.bf16.mxu0 0
        %3566 = vmatpush1.bf16.msra.mxu0 0
        %3567 = vmatprep.mubr.bf16.mxu0 0
        %3568 = vmatmul.mubr.bf16.gmra.mrb[0].mxu0 %v3530
        %v3569 = vpop.f32.mrb[0].mxu0
        %v3570 = vadd.f32 0.0, %v3569
        %v3571 = vpop.f32.mrb[0].mxu0
        %v3572 = vpop.f32.mrb[0].mxu0
        %v3573 = vpop.f32.mrb[0].mxu0
        %3574 = vdwg.mxu0
        %v3576 = vsel %vm2879, %v3341, 0
        %v3579 = vsel %vm3347, %v2872, 0
        %3581 = vmatprep.subr.bf16.mxu0 0
        %3582 = vmatpush1.bf16.msra.mxu0 %v3579
        %3583 = vmatprep.subr.bf16.mxu0 0
        %3584 = vmatpush1.bf16.msra.mxu0 0
        %3585 = vmatprep.subr.bf16.mxu0 0
        %3586 = vmatpush1.bf16.msra.mxu0 0
        %3587 = vmatprep.subr.bf16.mxu0 0
        %3588 = vmatpush1.bf16.msra.mxu0 0
        %3589 = vmatprep.subr.bf16.mxu0 0
        %3590 = vmatpush1.bf16.msra.mxu0 0
        %3591 = vmatprep.subr.bf16.mxu0 0
        %3592 = vmatpush1.bf16.msra.mxu0 0
        %3593 = vmatprep.subr.bf16.mxu0 0
        %3594 = vmatpush1.bf16.msra.mxu0 0
        %3595 = vmatprep.subr.bf16.mxu0 0
        %3596 = vmatpush1.bf16.msra.mxu0 0
        %3597 = vmatprep.subr.bf16.mxu0 0
        %3598 = vmatpush1.bf16.msra.mxu0 0
        %3599 = vmatprep.subr.bf16.mxu0 0
        %3600 = vmatpush1.bf16.msra.mxu0 0
        %3601 = vmatprep.subr.bf16.mxu0 0
        %3602 = vmatpush1.bf16.msra.mxu0 0
        %3603 = vmatprep.subr.bf16.mxu0 0
        %3604 = vmatpush1.bf16.msra.mxu0 0
        %3605 = vmatprep.subr.bf16.mxu0 0
        %3606 = vmatpush1.bf16.msra.mxu0 0
        %3607 = vmatprep.subr.bf16.mxu0 0
        %3608 = vmatpush1.bf16.msra.mxu0 0
        %3609 = vmatprep.subr.bf16.mxu0 0
        %3610 = vmatpush1.bf16.msra.mxu0 0
        %3611 = vmatprep.subr.bf16.mxu0 0
        %3612 = vmatpush1.bf16.msra.mxu0 0
        %3613 = vmatprep.mubr.bf16.mxu0 0
        %3614 = vmatmul.mubr.bf16.gmra.mrb[0].mxu0 %v3576
        %v3615 = vpop.f32.mrb[0].mxu0
        %v3616 = vadd.f32 0.0, %v3615
        %v3617 = vpop.f32.mrb[0].mxu0
        %v3618 = vpop.f32.mrb[0].mxu0
        %v3619 = vpop.f32.mrb[0].mxu0
        %3620 = vdwg.mxu0
        %v3622 = vsel %vm2879, %v3342, 0
        %v3625 = vsel %vm3347, %v2875, 0
        %3627 = vmatprep.subr.bf16.mxu0 0
        %3628 = vmatpush1.bf16.msra.mxu0 %v3625
        %3629 = vmatprep.subr.bf16.mxu0 0
        %3630 = vmatpush1.bf16.msra.mxu0 0
        %3631 = vmatprep.subr.bf16.mxu0 0
        %3632 = vmatpush1.bf16.msra.mxu0 0
        %3633 = vmatprep.subr.bf16.mxu0 0
        %3634 = vmatpush1.bf16.msra.mxu0 0
        %3635 = vmatprep.subr.bf16.mxu0 0
        %3636 = vmatpush1.bf16.msra.mxu0 0
        %3637 = vmatprep.subr.bf16.mxu0 0
        %3638 = vmatpush1.bf16.msra.mxu0 0
        %3639 = vmatprep.subr.bf16.mxu0 0
        %3640 = vmatpush1.bf16.msra.mxu0 0
        %3641 = vmatprep.subr.bf16.mxu0 0
        %3642 = vmatpush1.bf16.msra.mxu0 0
        %3643 = vmatprep.subr.bf16.mxu0 0
        %3644 = vmatpush1.bf16.msra.mxu0 0
        %3645 = vmatprep.subr.bf16.mxu0 0
        %3646 = vmatpush1.bf16.msra.mxu0 0
        %3647 = vmatprep.subr.bf16.mxu0 0
        %3648 = vmatpush1.bf16.msra.mxu0 0
        %3649 = vmatprep.subr.bf16.mxu0 0
        %3650 = vmatpush1.bf16.msra.mxu0 0
        %3651 = vmatprep.subr.bf16.mxu0 0
        %3652 = vmatpush1.bf16.msra.mxu0 0
        %3653 = vmatprep.subr.bf16.mxu0 0
        %3654 = vmatpush1.bf16.msra.mxu0 0
        %3655 = vmatprep.subr.bf16.mxu0 0
        %3656 = vmatpush1.bf16.msra.mxu0 0
        %3657 = vmatprep.subr.bf16.mxu0 0
        %3658 = vmatpush1.bf16.msra.mxu0 0
        %3659 = vmatprep.mubr.bf16.mxu0 0
        %3660 = vmatmul.mubr.bf16.gmra.mrb[0].mxu0 %v3622
        %v3661 = vpop.f32.mrb[0].mxu0
        %v3662 = vadd.f32 0.0, %v3661
        %v3663 = vpop.f32.mrb[0].mxu0
        %v3664 = vpop.f32.mrb[0].mxu0
        %v3665 = vpop.f32.mrb[0].mxu0
        %3666 = vdwg.mxu0
        %v3668 = vsel %vm2879, %v3343, 0
        %v3671 = vsel %vm3347, %v2878, 0
        %3673 = vmatprep.subr.bf16.mxu0 0
        %3674 = vmatpush1.bf16.msra.mxu0 %v3671
        %3675 = vmatprep.subr.bf16.mxu0 0
        %3676 = vmatpush1.bf16.msra.mxu0 0
        %3677 = vmatprep.subr.bf16.mxu0 0
        %3678 = vmatpush1.bf16.msra.mxu0 0
        %3679 = vmatprep.subr.bf16.mxu0 0
        %3680 = vmatpush1.bf16.msra.mxu0 0
        %3681 = vmatprep.subr.bf16.mxu0 0
        %3682 = vmatpush1.bf16.msra.mxu0 0
        %3683 = vmatprep.subr.bf16.mxu0 0
        %3684 = vmatpush1.bf16.msra.mxu0 0
        %3685 = vmatprep.subr.bf16.mxu0 0
        %3686 = vmatpush1.bf16.msra.mxu0 0
        %3687 = vmatprep.subr.bf16.mxu0 0
        %3688 = vmatpush1.bf16.msra.mxu0 0
        %3689 = vmatprep.subr.bf16.mxu0 0
        %3690 = vmatpush1.bf16.msra.mxu0 0
        %3691 = vmatprep.subr.bf16.mxu0 0
        %3692 = vmatpush1.bf16.msra.mxu0 0
        %3693 = vmatprep.subr.bf16.mxu0 0
        %3694 = vmatpush1.bf16.msra.mxu0 0
        %3695 = vmatprep.subr.bf16.mxu0 0
        %3696 = vmatpush1.bf16.msra.mxu0 0
        %3697 = vmatprep.subr.bf16.mxu0 0
        %3698 = vmatpush1.bf16.msra.mxu0 0
        %3699 = vmatprep.subr.bf16.mxu0 0
        %3700 = vmatpush1.bf16.msra.mxu0 0
        %3701 = vmatprep.subr.bf16.mxu0 0
        %3702 = vmatpush1.bf16.msra.mxu0 0
        %3703 = vmatprep.subr.bf16.mxu0 0
        %3704 = vmatpush1.bf16.msra.mxu0 0
        %3705 = vmatprep.mubr.bf16.mxu0 0
        %3706 = vmatmul.mubr.bf16.gmra.mrb[0].mxu0 %v3668
        %v3707 = vpop.f32.mrb[0].mxu0
        %v3708 = vadd.f32 0.0, %v3707
        %v3709 = vpop.f32.mrb[0].mxu0
        %v3710 = vpop.f32.mrb[0].mxu0
        %v3711 = vpop.f32.mrb[0].mxu0
        %3712 = vdwg.mxu0
        %v3713 = vcombine.low %v3386, %v3478
        %v3714 = vcombine.high %v3386, %v3478
        %v3716 = vunpack.c.l.s4 1983009808
        %v3717 = vunpack.c.0.s8 %v3716
        %v3718 = vlaneseq
        %v3719 = vshrl.u32 %v3718, 7
        %v3720 = vsub.s32 %v3717, %v3719
        %v3721 = vrot.slane %v3713, %v3720
        %v3723 = vunpack.c.l.s4 1983009808
        %v3724 = vunpack.c.0.s8 %v3723
        %v3725 = vlaneseq
        %v3726 = vshrl.u32 %v3725, 7
        %v3727 = vsub.s32 %v3724, %v3726
        %v3728 = vrot.slane %v3714, %v3727
        %v3729 = vcombine.low %v3432, %v3524
        %v3730 = vcombine.high %v3432, %v3524
        %v3732 = vunpack.c.l.s4 1983009808
        %v3733 = vunpack.c.0.s8 %v3732
        %v3734 = vlaneseq
        %v3735 = vshrl.u32 %v3734, 7
        %v3736 = vsub.s32 %v3733, %v3735
        %v3737 = vrot.slane %v3729, %v3736
        %v3739 = vunpack.c.l.s4 1983009808
        %v3740 = vunpack.c.0.s8 %v3739
        %v3741 = vlaneseq
        %v3742 = vshrl.u32 %v3741, 7
        %v3743 = vsub.s32 %v3740, %v3742
        %v3744 = vrot.slane %v3730, %v3743
        %v3745 = vcombine.low %v3721, %v3737
        %v3746 = vcombine.high %v3721, %v3737
        %v3748 = vunpack.c.l.s4 1934713408
        %v3749 = vunpack.c.0.s8 %v3748
        %v3750 = vlaneseq
        %v3751 = vshrl.u32 %v3750, 7
        %v3752 = vsub.s32 %v3749, %v3751
        %v3753 = vrot.slane %v3745, %v3752
        %v3755 = vunpack.c.l.s4 1934713408
        %v3756 = vunpack.c.0.s8 %v3755
        %v3757 = vlaneseq
        %v3758 = vshrl.u32 %v3757, 7
        %v3759 = vsub.s32 %v3756, %v3758
        %v3760 = vrot.slane %v3746, %v3759
        %v3761 = vcombine.low %v3728, %v3744
        %v3762 = vcombine.high %v3728, %v3744
        %v3764 = vunpack.c.l.s4 1934713408
        %v3765 = vunpack.c.0.s8 %v3764
        %v3766 = vlaneseq
        %v3767 = vshrl.u32 %v3766, 7
        %v3768 = vsub.s32 %v3765, %v3767
        %v3769 = vrot.slane %v3761, %v3768
        %v3771 = vunpack.c.l.s4 1934713408
        %v3772 = vunpack.c.0.s8 %v3771
        %v3773 = vlaneseq
        %v3774 = vshrl.u32 %v3773, 7
        %v3775 = vsub.s32 %v3772, %v3774
        %v3776 = vrot.slane %v3762, %v3775
        %v3777 = vcombine.high %v3753, 0.0
        %v3778 = vcombine.high %v3760, 0.0
        %v3779 = vcombine.high %v3769, 0.0
        %v3780 = vcombine.high %v3776, 0.0
        %v3781 = vcombine.low %v3570, %v3662
        %v3782 = vcombine.high %v3570, %v3662
        %v3784 = vunpack.c.l.s4 1983009808
        %v3785 = vunpack.c.0.s8 %v3784
        %v3786 = vlaneseq
        %v3787 = vshrl.u32 %v3786, 7
        %v3788 = vsub.s32 %v3785, %v3787
        %v3789 = vrot.slane %v3781, %v3788
        %v3791 = vunpack.c.l.s4 1983009808
        %v3792 = vunpack.c.0.s8 %v3791
        %v3793 = vlaneseq
        %v3794 = vshrl.u32 %v3793, 7
        %v3795 = vsub.s32 %v3792, %v3794
        %v3796 = vrot.slane %v3782, %v3795
        %v3797 = vcombine.low %v3616, %v3708
        %v3798 = vcombine.high %v3616, %v3708
        %v3800 = vunpack.c.l.s4 1983009808
        %v3801 = vunpack.c.0.s8 %v3800
        %v3802 = vlaneseq
        %v3803 = vshrl.u32 %v3802, 7
        %v3804 = vsub.s32 %v3801, %v3803
        %v3805 = vrot.slane %v3797, %v3804
        %v3807 = vunpack.c.l.s4 1983009808
        %v3808 = vunpack.c.0.s8 %v3807
        %v3809 = vlaneseq
        %v3810 = vshrl.u32 %v3809, 7
        %v3811 = vsub.s32 %v3808, %v3810
        %v3812 = vrot.slane %v3798, %v3811
        %v3813 = vcombine.low %v3789, %v3805
        %v3814 = vcombine.high %v3789, %v3805
        %v3816 = vunpack.c.l.s4 1934713408
        %v3817 = vunpack.c.0.s8 %v3816
        %v3818 = vlaneseq
        %v3819 = vshrl.u32 %v3818, 7
        %v3820 = vsub.s32 %v3817, %v3819
        %v3821 = vrot.slane %v3813, %v3820
        %v3823 = vunpack.c.l.s4 1934713408
        %v3824 = vunpack.c.0.s8 %v3823
        %v3825 = vlaneseq
        %v3826 = vshrl.u32 %v3825, 7
        %v3827 = vsub.s32 %v3824, %v3826
        %v3828 = vrot.slane %v3814, %v3827
        %v3829 = vcombine.low %v3796, %v3812
        %v3830 = vcombine.high %v3796, %v3812
        %v3832 = vunpack.c.l.s4 1934713408
        %v3833 = vunpack.c.0.s8 %v3832
        %v3834 = vlaneseq
        %v3835 = vshrl.u32 %v3834, 7
        %v3836 = vsub.s32 %v3833, %v3835
        %v3837 = vrot.slane %v3829, %v3836
        %v3839 = vunpack.c.l.s4 1934713408
        %v3840 = vunpack.c.0.s8 %v3839
        %v3841 = vlaneseq
        %v3842 = vshrl.u32 %v3841, 7
        %v3843 = vsub.s32 %v3840, %v3842
        %v3844 = vrot.slane %v3830, %v3843
        %v3845 = vcombine.high %v3821, 0.0
        %v3846 = vcombine.high %v3828, 0.0
        %v3847 = vcombine.high %v3837, 0.0
        %v3848 = vcombine.high %v3844, 0.0
        %v3849 = vcombine.low %v3753, %v3760
        %v3851 = vunpack.c.l.s4 1983009808
        %v3852 = vunpack.c.0.s8 %v3851
        %v3853 = vlaneseq
        %v3854 = vshrl.u32 %v3853, 7
        %v3855 = vsub.s32 %v3852, %v3854
        %v3856 = vrot.slane %v3849, %v3855
        %v3857 = vcombine.low %v3777, %v3778
        %v3859 = vunpack.c.l.s4 1983009808
        %v3860 = vunpack.c.0.s8 %v3859
        %v3861 = vlaneseq
        %v3862 = vshrl.u32 %v3861, 7
        %v3863 = vsub.s32 %v3860, %v3862
        %v3864 = vrot.slane %v3857, %v3863
        %v3865 = vcombine.low %v3769, %v3776
        %v3867 = vunpack.c.l.s4 1983009808
        %v3868 = vunpack.c.0.s8 %v3867
        %v3869 = vlaneseq
        %v3870 = vshrl.u32 %v3869, 7
        %v3871 = vsub.s32 %v3868, %v3870
        %v3872 = vrot.slane %v3865, %v3871
        %v3873 = vcombine.low %v3779, %v3780
        %v3875 = vunpack.c.l.s4 1983009808
        %v3876 = vunpack.c.0.s8 %v3875
        %v3877 = vlaneseq
        %v3878 = vshrl.u32 %v3877, 7
        %v3879 = vsub.s32 %v3876, %v3878
        %v3880 = vrot.slane %v3873, %v3879
        %v3881 = vcombine.low %v3856, %v3864
        %v3882 = vcombine.high %v3856, %v3864
        %v3884 = vunpack.c.l.s4 1934713408
        %v3885 = vunpack.c.0.s8 %v3884
        %v3886 = vlaneseq
        %v3887 = vshrl.u32 %v3886, 7
        %v3888 = vsub.s32 %v3885, %v3887
        %v3889 = vrot.slane %v3881, %v3888
        %v3891 = vunpack.c.l.s4 1934713408
        %v3892 = vunpack.c.0.s8 %v3891
        %v3893 = vlaneseq
        %v3894 = vshrl.u32 %v3893, 7
        %v3895 = vsub.s32 %v3892, %v3894
        %v3896 = vrot.slane %v3882, %v3895
        %v3897 = vcombine.low %v3872, %v3880
        %v3898 = vcombine.high %v3872, %v3880
        %v3900 = vunpack.c.l.s4 1934713408
        %v3901 = vunpack.c.0.s8 %v3900
        %v3902 = vlaneseq
        %v3903 = vshrl.u32 %v3902, 7
        %v3904 = vsub.s32 %v3901, %v3903
        %v3905 = vrot.slane %v3897, %v3904
        %v3907 = vunpack.c.l.s4 1934713408
        %v3908 = vunpack.c.0.s8 %v3907
        %v3909 = vlaneseq
        %v3910 = vshrl.u32 %v3909, 7
        %v3911 = vsub.s32 %v3908, %v3910
        %v3912 = vrot.slane %v3898, %v3911
        %v3913 = vcombine.low %v3889, %v3905
        %v3914 = vcombine.high %v3889, %v3905
        %v3915 = vcombine.low %v3896, %v3912
        %v3916 = vcombine.high %v3896, %v3912
        %v3917 = vcombine.low %v3821, %v3828
        %v3919 = vunpack.c.l.s4 1983009808
        %v3920 = vunpack.c.0.s8 %v3919
        %v3921 = vlaneseq
        %v3922 = vshrl.u32 %v3921, 7
        %v3923 = vsub.s32 %v3920, %v3922
        %v3924 = vrot.slane %v3917, %v3923
        %v3925 = vcombine.low %v3845, %v3846
        %v3927 = vunpack.c.l.s4 1983009808
        %v3928 = vunpack.c.0.s8 %v3927
        %v3929 = vlaneseq
        %v3930 = vshrl.u32 %v3929, 7
        %v3931 = vsub.s32 %v3928, %v3930
        %v3932 = vrot.slane %v3925, %v3931
        %v3933 = vcombine.low %v3837, %v3844
        %v3935 = vunpack.c.l.s4 1983009808
        %v3936 = vunpack.c.0.s8 %v3935
        %v3937 = vlaneseq
        %v3938 = vshrl.u32 %v3937, 7
        %v3939 = vsub.s32 %v3936, %v3938
        %v3940 = vrot.slane %v3933, %v3939
        %v3941 = vcombine.low %v3847, %v3848
        %v3943 = vunpack.c.l.s4 1983009808
        %v3944 = vunpack.c.0.s8 %v3943
        %v3945 = vlaneseq
        %v3946 = vshrl.u32 %v3945, 7
        %v3947 = vsub.s32 %v3944, %v3946
        %v3948 = vrot.slane %v3941, %v3947
        %v3949 = vcombine.low %v3924, %v3932
        %v3950 = vcombine.high %v3924, %v3932
        %v3952 = vunpack.c.l.s4 1934713408
        %v3953 = vunpack.c.0.s8 %v3952
        %v3954 = vlaneseq
        %v3955 = vshrl.u32 %v3954, 7
        %v3956 = vsub.s32 %v3953, %v3955
        %v3957 = vrot.slane %v3949, %v3956
        %v3959 = vunpack.c.l.s4 1934713408
        %v3960 = vunpack.c.0.s8 %v3959
        %v3961 = vlaneseq
        %v3962 = vshrl.u32 %v3961, 7
        %v3963 = vsub.s32 %v3960, %v3962
        %v3964 = vrot.slane %v3950, %v3963
        %v3965 = vcombine.low %v3940, %v3948
        %v3966 = vcombine.high %v3940, %v3948
        %v3968 = vunpack.c.l.s4 1934713408
        %v3969 = vunpack.c.0.s8 %v3968
        %v3970 = vlaneseq
        %v3971 = vshrl.u32 %v3970, 7
        %v3972 = vsub.s32 %v3969, %v3971
        %v3973 = vrot.slane %v3965, %v3972
        %v3975 = vunpack.c.l.s4 1934713408
        %v3976 = vunpack.c.0.s8 %v3975
        %v3977 = vlaneseq
        %v3978 = vshrl.u32 %v3977, 7
        %v3979 = vsub.s32 %v3976, %v3978
        %v3980 = vrot.slane %v3966, %v3979
        %v3981 = vcombine.low %v3957, %v3973
        %v3982 = vcombine.high %v3957, %v3973
        %v3983 = vcombine.low %v3964, %v3980
        %v3984 = vcombine.high %v3964, %v3980
        %3987 = vrot.lane.b32.xlu0 %v3914, 8
        %v3988 = vpop.permute.xlu0 %3987
        %3989 = vrot.lane.b32.xlu0 %v3982, 8
        %v3990 = vpop.permute.xlu0 %3989
        %3995 = vrot.lane.b32.xlu0 %v3915, 16
        %v3996 = vpop.permute.xlu0 %3995
        %3997 = vrot.lane.b32.xlu0 %v3983, 16
        %v3998 = vpop.permute.xlu0 %3997
        %4003 = vrot.lane.b32.xlu0 %v3916, 24
        %v4004 = vpop.permute.xlu0 %4003
        %4005 = vrot.lane.b32.xlu0 %v3984, 24
        %v4006 = vpop.permute.xlu0 %4005
        %v4009 = vsel %vm2879, %v3913, %v3988
        %v4010 = vsel %vm2879, %v3981, %v3990
        %vm4011 = vcmask 130048
        %v4012 = vsel %vm4011, %v4009, %v3996
        %v4013 = vsel %vm4011, %v4010, %v3998
        %vm4014 = vcmask 195584
        %v4015 = vsel %vm4014, %v4012, %v4004
        %v4016 = vsel %vm4014, %v4013, %v4006
        %v4017 = vld [vmem:[%s1394] sm:$0xf]
        %v4018 = vld [vmem:[%s1394 + $0x4] sm:$0xf]
        %v4019 = vld [vmem:[%s1394 + $0x8] sm:$0xf]
        %v4020 = vld [vmem:[%s1394 + $0xc] sm:$0xf]
        %v4021 = vpack.c.bf16 %v4016, %v4015
        %v4022 = vld [vmem:[%s1397] sm:$0x1]
        %v4024 = vlaneseq
        %v4025 = vshrl.u32 %v4024, 7
        %v4026 = vsub.s32 0, %v4025
        %v4027 = vrot.slane %v4022, %v4026
        %v4033 = vunpack.c.l.b16 %v4017
        %v4034 = vunpack.c.l.b16 %v4018
        %v4035 = vunpack.c.l.b16 %v4019
        %v4036 = vunpack.c.l.b16 %v4020
        %v4037 = vpack.c.b16 %v4034, %v4033
        %v4038 = vpack.c.b16 %v4036, %v4035
        %v4042 = vsel %vm1858, %v4021, 0
        %4044 = vmatprep.subr.bf16.mxu0 0
        %4045 = vmatpush1.bf16.msra.mxu0 %v4037
        %4046 = vmatprep.subr.bf16.mxu0 0
        %4047 = vmatpush1.bf16.msra.mxu0 %v4038
        %4048 = vmatprep.subr.bf16.mxu0 0
        %4049 = vmatpush1.bf16.msra.mxu0 0
        %4050 = vmatprep.subr.bf16.mxu0 0
        %4051 = vmatpush1.bf16.msra.mxu0 0
        %4052 = vmatprep.subr.bf16.mxu0 0
        %4053 = vmatpush1.bf16.msra.mxu0 0
        %4054 = vmatprep.subr.bf16.mxu0 0
        %4055 = vmatpush1.bf16.msra.mxu0 0
        %4056 = vmatprep.subr.bf16.mxu0 0
        %4057 = vmatpush1.bf16.msra.mxu0 0
        %4058 = vmatprep.subr.bf16.mxu0 0
        %4059 = vmatpush1.bf16.msra.mxu0 0
        %4060 = vmatprep.subr.bf16.mxu0 0
        %4061 = vmatpush1.bf16.msra.mxu0 0
        %4062 = vmatprep.subr.bf16.mxu0 0
        %4063 = vmatpush1.bf16.msra.mxu0 0
        %4064 = vmatprep.subr.bf16.mxu0 0
        %4065 = vmatpush1.bf16.msra.mxu0 0
        %4066 = vmatprep.subr.bf16.mxu0 0
        %4067 = vmatpush1.bf16.msra.mxu0 0
        %4068 = vmatprep.subr.bf16.mxu0 0
        %4069 = vmatpush1.bf16.msra.mxu0 0
        %4070 = vmatprep.subr.bf16.mxu0 0
        %4071 = vmatpush1.bf16.msra.mxu0 0
        %4072 = vmatprep.subr.bf16.mxu0 0
        %4073 = vmatpush1.bf16.msra.mxu0 0
        %4074 = vmatprep.subr.bf16.mxu0 0
        %4075 = vmatpush1.bf16.msra.mxu0 0
        %4076 = vmatprep.mubr.bf16.mxu0 0
        %4077 = vmatmul.mubr.bf16.gmra.mrb[0].mxu0 %v4042
        %v4078 = vpop.f32.mrb[0].mxu0
        %v4079 = vadd.f32 %v4027, %v4078
        %v4080 = vpop.f32.mrb[0].mxu0
        %v4081 = vpop.f32.mrb[0].mxu0
        %v4082 = vadd.f32 %v4027, %v4081
        %v4083 = vpop.f32.mrb[0].mxu0
        %4084 = vdwg.mxu0
        %v4085 = vadd.f32 %v1832, %v4079
        %v4086 = vadd.f32 %v1833, %v4082
        %v4087 = vld [vmem:[%s1400] sm:$0x1]
        %v4088 = vld [vmem:[%s1403] sm:$0x1]
        %v4089 = vsel %vm1858, %v4085, 0.0
        %4090 = vadd.xlane.f32.xlu0 %v4089
        %v4091 = vpop.xlane.xlu0 %4090
        %v4092 = vsel %vm1858, %v4086, 0.0
        %4093 = vadd.xlane.f32.xlu0 %v4092
        %v4094 = vpop.xlane.xlu0 %4093
        %v4095 = vrcp.pop 32.0
        %v4096 = vmul.f32 %v4091, %v4095
        %v4097 = vmul.f32 %v4094, %v4095
        %v4098 = vsub.f32 %v4085, %v4096
        %v4099 = vsub.f32 %v4086, %v4097
        %v4100 = vmul.f32 %v4098, %v4098
        %v4101 = vmul.f32 %v4099, %v4099
        %v4102 = vsel %vm1858, %v4100, 0.0
        %4103 = vadd.xlane.f32.xlu0 %v4102
        %v4104 = vpop.xlane.xlu0 %4103
        %v4105 = vsel %vm1858, %v4101, 0.0
        %4106 = vadd.xlane.f32.xlu0 %v4105
        %v4107 = vpop.xlane.xlu0 %4106
        %v4108 = vmul.f32 %v4104, %v4095
        %v4109 = vmul.f32 %v4107, %v4095
        %v4110 = vadd.f32 %v4108, 1e-05
        %v4111 = vadd.f32 %v4109, 1e-05
        %v4112 = vrsqrt.pop %v4110
        %v4113 = vrsqrt.pop %v4111
        %v4114 = vmul.f32 %v4098, %v4112
        %v4115 = vmul.f32 %v4099, %v4113
        %v4117 = vlaneseq
        %v4118 = vshrl.u32 %v4117, 7
        %v4119 = vsub.s32 0, %v4118
        %v4120 = vrot.slane %v4087, %v4119
        %v4122 = vmul.f32 %v4114, %v4120
        %v4123 = vmul.f32 %v4115, %v4120
        %v4125 = vlaneseq
        %v4126 = vshrl.u32 %v4125, 7
        %v4127 = vsub.s32 0, %v4126
        %v4128 = vrot.slane %v4088, %v4127
        %v4130 = vadd.f32 %v4122, %v4128
        %v4131 = vadd.f32 %v4123, %v4128
        %v4132 = vpack.c.bf16 %v4131, %v4130
        %v4133 = vld [vmem:[%s1408] sm:$0xf]
        %v4134 = vld [vmem:[%s1408 + $0x4] sm:$0xf]
        %v4135 = vld [vmem:[%s1408 + $0x8] sm:$0xf]
        %v4136 = vld [vmem:[%s1408 + $0xc] sm:$0xf]
        %v4137 = vld [vmem:[%s1411] sm:$0x1]
        %v4139 = vlaneseq
        %v4140 = vshrl.u32 %v4139, 7
        %v4141 = vsub.s32 0, %v4140
        %v4142 = vrot.slane %v4137, %v4141
        %v4148 = vunpack.c.l.b16 %v4133
        %v4149 = vunpack.c.l.b16 %v4134
        %v4150 = vunpack.c.l.b16 %v4135
        %v4151 = vunpack.c.l.b16 %v4136
        %v4152 = vpack.c.b16 %v4149, %v4148
        %v4153 = vpack.c.b16 %v4151, %v4150
        %v4157 = vsel %vm1858, %v4132, 0
        %4159 = vmatprep.subr.bf16.mxu0 0
        %4160 = vmatpush1.bf16.msra.mxu0 %v4152
        %4161 = vmatprep.subr.bf16.mxu0 0
        %4162 = vmatpush1.bf16.msra.mxu0 %v4153
        %4163 = vmatprep.subr.bf16.mxu0 0
        %4164 = vmatpush1.bf16.msra.mxu0 0
        %4165 = vmatprep.subr.bf16.mxu0 0
        %4166 = vmatpush1.bf16.msra.mxu0 0
        %4167 = vmatprep.subr.bf16.mxu0 0
        %4168 = vmatpush1.bf16.msra.mxu0 0
        %4169 = vmatprep.subr.bf16.mxu0 0
        %4170 = vmatpush1.bf16.msra.mxu0 0
        %4171 = vmatprep.subr.bf16.mxu0 0
        %4172 = vmatpush1.bf16.msra.mxu0 0
        %4173 = vmatprep.subr.bf16.mxu0 0
        %4174 = vmatpush1.bf16.msra.mxu0 0
        %4175 = vmatprep.subr.bf16.mxu0 0
        %4176 = vmatpush1.bf16.msra.mxu0 0
        %4177 = vmatprep.subr.bf16.mxu0 0
        %4178 = vmatpush1.bf16.msra.mxu0 0
        %4179 = vmatprep.subr.bf16.mxu0 0
        %4180 = vmatpush1.bf16.msra.mxu0 0
        %4181 = vmatprep.subr.bf16.mxu0 0
        %4182 = vmatpush1.bf16.msra.mxu0 0
        %4183 = vmatprep.subr.bf16.mxu0 0
        %4184 = vmatpush1.bf16.msra.mxu0 0
        %4185 = vmatprep.subr.bf16.mxu0 0
        %4186 = vmatpush1.bf16.msra.mxu0 0
        %4187 = vmatprep.subr.bf16.mxu0 0
        %4188 = vmatpush1.bf16.msra.mxu0 0
        %4189 = vmatprep.subr.bf16.mxu0 0
        %4190 = vmatpush1.bf16.msra.mxu0 0
        %4191 = vmatprep.mubr.bf16.mxu0 0
        %4192 = vmatmul.mubr.bf16.gmra.mrb[0].mxu0 %v4157
        %v4193 = vpop.f32.mrb[0].mxu0
        %v4194 = vadd.f32 %v4142, %v4193
        %v4195 = vpop.f32.mrb[0].mxu0
        %v4196 = vpop.f32.mrb[0].mxu0
        %v4197 = vadd.f32 %v4142, %v4196
        %v4198 = vpop.f32.mrb[0].mxu0
        %4199 = vdwg.mxu0
        %v4200 = vmax.f32 %v4194, 0.0
        %v4201 = vmax.f32 %v4197, 0.0
        %v4202 = vld [vmem:[%s1416] sm:$0xf]
        %v4203 = vld [vmem:[%s1416 + $0x4] sm:$0xf]
        %v4204 = vld [vmem:[%s1416 + $0x8] sm:$0xf]
        %v4205 = vld [vmem:[%s1416 + $0xc] sm:$0xf]
        %v4206 = vld [vmem:[%s1416 + $0x10] sm:$0xf]
        %v4207 = vld [vmem:[%s1416 + $0x14] sm:$0xf]
        %v4208 = vld [vmem:[%s1416 + $0x18] sm:$0xf]
        %v4209 = vld [vmem:[%s1416 + $0x1c] sm:$0xf]
        %v4210 = vpack.c.bf16 %v4201, %v4200
        %v4219 = vunpack.c.l.b16 %v4202
        %v4220 = vunpack.c.l.b16 %v4203
        %v4221 = vunpack.c.l.b16 %v4204
        %v4222 = vunpack.c.l.b16 %v4205
        %v4223 = vunpack.c.l.b16 %v4206
        %v4224 = vunpack.c.l.b16 %v4207
        %v4225 = vunpack.c.l.b16 %v4208
        %v4226 = vunpack.c.l.b16 %v4209
        %v4227 = vpack.c.b16 %v4220, %v4219
        %v4228 = vpack.c.b16 %v4222, %v4221
        %v4229 = vpack.c.b16 %v4224, %v4223
        %v4230 = vpack.c.b16 %v4226, %v4225
        %vm4235 = vcmask 523264
        %v4237 = vsel %vm4235, %v4210, 0
        %4239 = vmatprep.subr.bf16.mxu0 0
        %4240 = vmatpush1.bf16.msra.mxu0 %v4227
        %4241 = vmatprep.subr.bf16.mxu0 0
        %4242 = vmatpush1.bf16.msra.mxu0 %v4228
        %4243 = vmatprep.subr.bf16.mxu0 0
        %4244 = vmatpush1.bf16.msra.mxu0 %v4229
        %4245 = vmatprep.subr.bf16.mxu0 0
        %4246 = vmatpush1.bf16.msra.mxu0 %v4230
        %4247 = vmatprep.subr.bf16.mxu0 0
        %4248 = vmatpush1.bf16.msra.mxu0 0
        %4249 = vmatprep.subr.bf16.mxu0 0
        %4250 = vmatpush1.bf16.msra.mxu0 0
        %4251 = vmatprep.subr.bf16.mxu0 0
        %4252 = vmatpush1.bf16.msra.mxu0 0
        %4253 = vmatprep.subr.bf16.mxu0 0
        %4254 = vmatpush1.bf16.msra.mxu0 0
        %4255 = vmatprep.subr.bf16.mxu0 0
        %4256 = vmatpush1.bf16.msra.mxu0 0
        %4257 = vmatprep.subr.bf16.mxu0 0
        %4258 = vmatpush1.bf16.msra.mxu0 0
        %4259 = vmatprep.subr.bf16.mxu0 0
        %4260 = vmatpush1.bf16.msra.mxu0 0
        %4261 = vmatprep.subr.bf16.mxu0 0
        %4262 = vmatpush1.bf16.msra.mxu0 0
        %4263 = vmatprep.subr.bf16.mxu0 0
        %4264 = vmatpush1.bf16.msra.mxu0 0
        %4265 = vmatprep.subr.bf16.mxu0 0
        %4266 = vmatpush1.bf16.msra.mxu0 0
        %4267 = vmatprep.subr.bf16.mxu0 0
        %4268 = vmatpush1.bf16.msra.mxu0 0
        %4269 = vmatprep.subr.bf16.mxu0 0
        %4270 = vmatpush1.bf16.msra.mxu0 0
        %4271 = vmatprep.mubr.bf16.mxu0 0
        %4272 = vmatmul.mubr.bf16.gmra.mrb[0].mxu0 %v4237
        %v4273 = vpop.f32.mrb[0].mxu0
        %v4274 = vadd.f32 0.0, %v4273
        %v4275 = vpop.f32.mrb[0].mxu0
        %v4276 = vpop.f32.mrb[0].mxu0
        %v4277 = vadd.f32 0.0, %v4276
        %v4278 = vpop.f32.mrb[0].mxu0
        %4279 = vdwg.mxu0
        %v4280 = vadd.f32 %v4130, %v4274
        %v4281 = vadd.f32 %v4131, %v4277
        %v4282 = vld [vmem:[%s1419] sm:$0x1]
        %v4284 = vlaneseq
        %v4285 = vshrl.u32 %v4284, 7
        %v4286 = vsub.s32 0, %v4285
        %v4287 = vrot.slane %v4282, %v4286
        %v4289 = vadd.f32 %v4280, %v4287
        %v4290 = vadd.f32 %v4281, %v4287
        %v4291 = vld [vmem:[%s1422] sm:$0x1]
        %v4292 = vld [vmem:[%s1425] sm:$0x1]
        %v4293 = vsel %vm1858, %v4289, 0.0
        %4294 = vadd.xlane.f32.xlu0 %v4293
        %v4295 = vpop.xlane.xlu0 %4294
        %v4296 = vsel %vm1858, %v4290, 0.0
        %4297 = vadd.xlane.f32.xlu0 %v4296
        %v4298 = vpop.xlane.xlu0 %4297
        %v4299 = vmul.f32 %v4295, %v4095
        %v4300 = vmul.f32 %v4298, %v4095
        %v4301 = vsub.f32 %v4289, %v4299
        %v4302 = vsub.f32 %v4290, %v4300
        %v4303 = vmul.f32 %v4301, %v4301
        %v4304 = vmul.f32 %v4302, %v4302
        %v4305 = vsel %vm1858, %v4303, 0.0
        %4306 = vadd.xlane.f32.xlu0 %v4305
        %v4307 = vpop.xlane.xlu0 %4306
        %v4308 = vsel %vm1858, %v4304, 0.0
        %4309 = vadd.xlane.f32.xlu0 %v4308
        %v4310 = vpop.xlane.xlu0 %4309
        %v4311 = vmul.f32 %v4307, %v4095
        %v4312 = vmul.f32 %v4310, %v4095
        %v4313 = vadd.f32 %v4311, 1e-05
        %v4314 = vadd.f32 %v4312, 1e-05
        %v4315 = vrsqrt.pop %v4313
        %v4316 = vrsqrt.pop %v4314
        %v4317 = vmul.f32 %v4301, %v4315
        %v4318 = vmul.f32 %v4302, %v4316
        %v4320 = vlaneseq
        %v4321 = vshrl.u32 %v4320, 7
        %v4322 = vsub.s32 0, %v4321
        %v4323 = vrot.slane %v4291, %v4322
        %v4325 = vmul.f32 %v4317, %v4323
        %v4326 = vmul.f32 %v4318, %v4323
        %v4328 = vlaneseq
        %v4329 = vshrl.u32 %v4328, 7
        %v4330 = vsub.s32 0, %v4329
        %v4331 = vrot.slane %v4292, %v4330
        %v4333 = vadd.f32 %v4325, %v4331
        %v4334 = vadd.f32 %v4326, %v4331
        %v4335 = vpack.c.bf16 %v4334, %v4333
        %v4336 = vld [vmem:[%s1430] sm:$0xf]
        %v4337 = vld [vmem:[%s1430 + $0x4] sm:$0xf]
        %v4338 = vld [vmem:[%s1430 + $0x8] sm:$0xf]
        %v4339 = vld [vmem:[%s1430 + $0xc] sm:$0xf]
        %v4340 = vld [vmem:[%s1433] sm:$0x1]
        %v4342 = vlaneseq
        %v4343 = vshrl.u32 %v4342, 7
        %v4344 = vsub.s32 0, %v4343
        %v4345 = vrot.slane %v4340, %v4344
        %v4351 = vunpack.c.l.b16 %v4336
        %v4352 = vunpack.c.l.b16 %v4337
        %v4353 = vunpack.c.l.b16 %v4338
        %v4354 = vunpack.c.l.b16 %v4339
        %v4355 = vpack.c.b16 %v4352, %v4351
        %v4356 = vpack.c.b16 %v4354, %v4353
        %v4360 = vsel %vm1858, %v4335, 0
        %4362 = vmatprep.subr.bf16.mxu0 0
        %4363 = vmatpush1.bf16.msra.mxu0 %v4355
        %4364 = vmatprep.subr.bf16.mxu0 0
        %4365 = vmatpush1.bf16.msra.mxu0 %v4356
        %4366 = vmatprep.subr.bf16.mxu0 0
        %4367 = vmatpush1.bf16.msra.mxu0 0
        %4368 = vmatprep.subr.bf16.mxu0 0
        %4369 = vmatpush1.bf16.msra.mxu0 0
        %4370 = vmatprep.subr.bf16.mxu0 0
        %4371 = vmatpush1.bf16.msra.mxu0 0
        %4372 = vmatprep.subr.bf16.mxu0 0
        %4373 = vmatpush1.bf16.msra.mxu0 0
        %4374 = vmatprep.subr.bf16.mxu0 0
        %4375 = vmatpush1.bf16.msra.mxu0 0
        %4376 = vmatprep.subr.bf16.mxu0 0
        %4377 = vmatpush1.bf16.msra.mxu0 0
        %4378 = vmatprep.subr.bf16.mxu0 0
        %4379 = vmatpush1.bf16.msra.mxu0 0
        %4380 = vmatprep.subr.bf16.mxu0 0
        %4381 = vmatpush1.bf16.msra.mxu0 0
        %4382 = vmatprep.subr.bf16.mxu0 0
        %4383 = vmatpush1.bf16.msra.mxu0 0
        %4384 = vmatprep.subr.bf16.mxu0 0
        %4385 = vmatpush1.bf16.msra.mxu0 0
        %4386 = vmatprep.subr.bf16.mxu0 0
        %4387 = vmatpush1.bf16.msra.mxu0 0
        %4388 = vmatprep.subr.bf16.mxu0 0
        %4389 = vmatpush1.bf16.msra.mxu0 0
        %4390 = vmatprep.subr.bf16.mxu0 0
        %4391 = vmatpush1.bf16.msra.mxu0 0
        %4392 = vmatprep.subr.bf16.mxu0 0
        %4393 = vmatpush1.bf16.msra.mxu0 0
        %4394 = vmatprep.mubr.bf16.mxu0 0
        %4395 = vmatmul.mubr.bf16.gmra.mrb[0].mxu0 %v4360
        %v4396 = vpop.f32.mrb[0].mxu0
        %v4397 = vadd.f32 %v4345, %v4396
        %v4398 = vpop.f32.mrb[0].mxu0
        %v4399 = vpop.f32.mrb[0].mxu0
        %v4400 = vadd.f32 %v4345, %v4399
        %v4401 = vpop.f32.mrb[0].mxu0
        %4402 = vdwg.mxu0
        %v4403 = vmax.f32 %v4397, 0.0
        %v4404 = vmax.f32 %v4400, 0.0
        %v4405 = vld [vmem:[%s1438] sm:$0xf]
        %v4406 = vld [vmem:[%s1438 + $0x4] sm:$0xf]
        %v4407 = vld [vmem:[%s1438 + $0x8] sm:$0xf]
        %v4408 = vld [vmem:[%s1438 + $0xc] sm:$0xf]
        %v4409 = vld [vmem:[%s1438 + $0x10] sm:$0xf]
        %v4410 = vld [vmem:[%s1438 + $0x14] sm:$0xf]
        %v4411 = vld [vmem:[%s1438 + $0x18] sm:$0xf]
        %v4412 = vld [vmem:[%s1438 + $0x1c] sm:$0xf]
        %v4413 = vpack.c.bf16 %v4404, %v4403
        %v4422 = vunpack.c.l.b16 %v4405
        %v4423 = vunpack.c.l.b16 %v4406
        %v4424 = vunpack.c.l.b16 %v4407
        %v4425 = vunpack.c.l.b16 %v4408
        %v4426 = vunpack.c.l.b16 %v4409
        %v4427 = vunpack.c.l.b16 %v4410
        %v4428 = vunpack.c.l.b16 %v4411
        %v4429 = vunpack.c.l.b16 %v4412
        %v4430 = vpack.c.b16 %v4423, %v4422
        %v4431 = vpack.c.b16 %v4425, %v4424
        %v4432 = vpack.c.b16 %v4427, %v4426
        %v4433 = vpack.c.b16 %v4429, %v4428
        %v4439 = vsel %vm4235, %v4413, 0
        %4441 = vmatprep.subr.bf16.mxu0 0
        %4442 = vmatpush1.bf16.msra.mxu0 %v4430
        %4443 = vmatprep.subr.bf16.mxu0 0
        %4444 = vmatpush1.bf16.msra.mxu0 %v4431
        %4445 = vmatprep.subr.bf16.mxu0 0
        %4446 = vmatpush1.bf16.msra.mxu0 %v4432
        %4447 = vmatprep.subr.bf16.mxu0 0
        %4448 = vmatpush1.bf16.msra.mxu0 %v4433
        %4449 = vmatprep.subr.bf16.mxu0 0
        %4450 = vmatpush1.bf16.msra.mxu0 0
        %4451 = vmatprep.subr.bf16.mxu0 0
        %4452 = vmatpush1.bf16.msra.mxu0 0
        %4453 = vmatprep.subr.bf16.mxu0 0
        %4454 = vmatpush1.bf16.msra.mxu0 0
        %4455 = vmatprep.subr.bf16.mxu0 0
        %4456 = vmatpush1.bf16.msra.mxu0 0
        %4457 = vmatprep.subr.bf16.mxu0 0
        %4458 = vmatpush1.bf16.msra.mxu0 0
        %4459 = vmatprep.subr.bf16.mxu0 0
        %4460 = vmatpush1.bf16.msra.mxu0 0
        %4461 = vmatprep.subr.bf16.mxu0 0
        %4462 = vmatpush1.bf16.msra.mxu0 0
        %4463 = vmatprep.subr.bf16.mxu0 0
        %4464 = vmatpush1.bf16.msra.mxu0 0
        %4465 = vmatprep.subr.bf16.mxu0 0
        %4466 = vmatpush1.bf16.msra.mxu0 0
        %4467 = vmatprep.subr.bf16.mxu0 0
        %4468 = vmatpush1.bf16.msra.mxu0 0
        %4469 = vmatprep.subr.bf16.mxu0 0
        %4470 = vmatpush1.bf16.msra.mxu0 0
        %4471 = vmatprep.subr.bf16.mxu0 0
        %4472 = vmatpush1.bf16.msra.mxu0 0
        %4473 = vmatprep.mubr.bf16.mxu0 0
        %4474 = vmatmul.mubr.bf16.gmra.mrb[0].mxu0 %v4439
        %v4475 = vpop.f32.mrb[0].mxu0
        %v4476 = vadd.f32 0.0, %v4475
        %v4477 = vpop.f32.mrb[0].mxu0
        %v4478 = vpop.f32.mrb[0].mxu0
        %v4479 = vadd.f32 0.0, %v4478
        %v4480 = vpop.f32.mrb[0].mxu0
        %4481 = vdwg.mxu0
        %v4482 = vadd.f32 %v4333, %v4476
        %v4483 = vadd.f32 %v4334, %v4479
        %v4484 = vld [vmem:[%s1441] sm:$0x1]
        %v4486 = vlaneseq
        %v4487 = vshrl.u32 %v4486, 7
        %v4488 = vsub.s32 0, %v4487
        %v4489 = vrot.slane %v4484, %v4488
        %v4491 = vadd.f32 %v4482, %v4489
        %v4492 = vadd.f32 %v4483, %v4489
        %v4493 = vld [vmem:[%s1444] sm:$0x1]
        %v4494 = vld [vmem:[%s1447] sm:$0x1]
        %v4495 = vsel %vm1858, %v4491, 0.0
        %4496 = vadd.xlane.f32.xlu0 %v4495
        %v4497 = vpop.xlane.xlu0 %4496
        %v4498 = vsel %vm1858, %v4492, 0.0
        %4499 = vadd.xlane.f32.xlu0 %v4498
        %v4500 = vpop.xlane.xlu0 %4499
        %v4501 = vmul.f32 %v4497, %v4095
        %v4502 = vmul.f32 %v4500, %v4095
        %v4503 = vsub.f32 %v4491, %v4501
        %v4504 = vsub.f32 %v4492, %v4502
        %v4505 = vmul.f32 %v4503, %v4503
        %v4506 = vmul.f32 %v4504, %v4504
        %v4507 = vsel %vm1858, %v4505, 0.0
        %4508 = vadd.xlane.f32.xlu0 %v4507
        %v4509 = vpop.xlane.xlu0 %4508
        %v4510 = vsel %vm1858, %v4506, 0.0
        %4511 = vadd.xlane.f32.xlu0 %v4510
        %v4512 = vpop.xlane.xlu0 %4511
        %v4513 = vmul.f32 %v4509, %v4095
        %v4514 = vmul.f32 %v4512, %v4095
        %v4515 = vadd.f32 %v4513, 1e-05
        %v4516 = vadd.f32 %v4514, 1e-05
        %v4517 = vrsqrt.pop %v4515
        %v4518 = vrsqrt.pop %v4516
        %v4519 = vmul.f32 %v4503, %v4517
        %v4520 = vmul.f32 %v4504, %v4518
        %v4522 = vlaneseq
        %v4523 = vshrl.u32 %v4522, 7
        %v4524 = vsub.s32 0, %v4523
        %v4525 = vrot.slane %v4493, %v4524
        %v4527 = vmul.f32 %v4519, %v4525
        %v4528 = vmul.f32 %v4520, %v4525
        %v4530 = vlaneseq
        %v4531 = vshrl.u32 %v4530, 7
        %v4532 = vsub.s32 0, %v4531
        %v4533 = vrot.slane %v4494, %v4532
        %v4535 = vadd.f32 %v4527, %v4533
        %v4536 = vadd.f32 %v4528, %v4533
        %4537 = vst.msk [vmem:[#allocation2] sm:$0xff] %vm1858, %v4535
        %4538 = vst.msk [vmem:[#allocation2 + $0x8] sm:$0xff] %vm1858, %v4536
        %p4539 = scmp.eq.s32.totalorder %s88, 1
        // Predicated region
        $region181: #{tpu_custom_call.1} parent=147 // pred_check
          %p4540 = pneg %p4539
        $region182: #{tpu_custom_call.1} parent=147 // pred_check_branch
          %4542 = sbr.rel (%p4540) target = $region184
        $region183: #{tpu_custom_call.1} parent=147 // pred_region
          %v4543 = vsel %vm1858, %v4535, 0.0
          %v4544 = vrot.slane %v4543, 4
          %v4545 = vadd.f32 %v4543, %v4544
          %v4546 = vrot.slane %v4545, 2
          %v4547 = vadd.f32 %v4545, %v4546
          %v4548 = vrot.slane %v4547, 1
          %v4549 = vadd.f32 %v4547, %v4548
          %v4550 = vsel %vm1858, %v4536, 0.0
          %v4551 = vrot.slane %v4550, 4
          %v4552 = vadd.f32 %v4550, %v4551
          %v4553 = vrot.slane %v4552, 2
          %v4554 = vadd.f32 %v4552, %v4553
          %v4555 = vrot.slane %v4554, 1
          %v4556 = vadd.f32 %v4554, %v4555
          %v4557 = vrcp.pop 8.0
          %v4558 = vmul.f32 %v4549, %v4557
          %v4559 = vmul.f32 %v4556, %v4557
          %v4560 = vld [vmem:[%s57] sm:$0xf]
          %v4561 = vld [vmem:[%s57 + $0x4] sm:$0xf]
          %v4562 = vld [vmem:[%s57 + $0x8] sm:$0xf]
          %v4563 = vld [vmem:[%s57 + $0xc] sm:$0xf]
          %v4564 = vpack.c.bf16 %v4558, %v4558
          %v4565 = vpack.c.bf16 %v4559, %v4559
          %v4566 = vld [vmem:[%s59] sm:$0x1]
          %v4568 = vlaneseq
          %v4569 = vshrl.u32 %v4568, 7
          %v4570 = vsub.s32 0, %v4569
          %v4571 = vrot.slane %v4566, %v4570
          %v4575 = vunpack.c.l.b16 %v4564
          %v4576 = vunpack.c.l.b16 %v4565
          %vm4577 = vcmask 1041409
          %v4578 = vsel %vm4577, %v4576, %v4575
          %v4579 = vpack.c.b16 %v4578, %v4578
          %v4584 = vunpack.c.l.b16 %v4560
          %v4585 = vunpack.c.l.b16 %v4561
          %v4586 = vunpack.c.l.b16 %v4562
          %v4587 = vunpack.c.l.b16 %v4563
          %v4588 = vpack.c.b16 %v4585, %v4584
          %v4589 = vpack.c.b16 %v4587, %v4586
          %v4593 = vsel %vm1858, %v4579, 0
          %4595 = vmatprep.subr.bf16.mxu0 0
          %4596 = vmatpush1.bf16.msra.mxu0 %v4588
          %4597 = vmatprep.subr.bf16.mxu0 0
          %4598 = vmatpush1.bf16.msra.mxu0 %v4589
          %4599 = vmatprep.subr.bf16.mxu0 0
          %4600 = vmatpush1.bf16.msra.mxu0 0
          %4601 = vmatprep.subr.bf16.mxu0 0
          %4602 = vmatpush1.bf16.msra.mxu0 0
          %4603 = vmatprep.subr.bf16.mxu0 0
          %4604 = vmatpush1.bf16.msra.mxu0 0
          %4605 = vmatprep.subr.bf16.mxu0 0
          %4606 = vmatpush1.bf16.msra.mxu0 0
          %4607 = vmatprep.subr.bf16.mxu0 0
          %4608 = vmatpush1.bf16.msra.mxu0 0
          %4609 = vmatprep.subr.bf16.mxu0 0
          %4610 = vmatpush1.bf16.msra.mxu0 0
          %4611 = vmatprep.subr.bf16.mxu0 0
          %4612 = vmatpush1.bf16.msra.mxu0 0
          %4613 = vmatprep.subr.bf16.mxu0 0
          %4614 = vmatpush1.bf16.msra.mxu0 0
          %4615 = vmatprep.subr.bf16.mxu0 0
          %4616 = vmatpush1.bf16.msra.mxu0 0
          %4617 = vmatprep.subr.bf16.mxu0 0
          %4618 = vmatpush1.bf16.msra.mxu0 0
          %4619 = vmatprep.subr.bf16.mxu0 0
          %4620 = vmatpush1.bf16.msra.mxu0 0
          %4621 = vmatprep.subr.bf16.mxu0 0
          %4622 = vmatpush1.bf16.msra.mxu0 0
          %4623 = vmatprep.subr.bf16.mxu0 0
          %4624 = vmatpush1.bf16.msra.mxu0 0
          %4625 = vmatprep.subr.bf16.mxu0 0
          %4626 = vmatpush1.bf16.msra.mxu0 0
          %4627 = vmatprep.mubr.bf16.mxu0 0
          %4628 = vmatmul.mubr.bf16.gmra.mrb[0].mxu0 %v4593
          %v4629 = vpop.f32.mrb[0].mxu0
          %v4630 = vadd.f32 %v4571, %v4629
          %v4631 = vpop.f32.mrb[0].mxu0
          %v4632 = vpop.f32.mrb[0].mxu0
          %v4633 = vpop.f32.mrb[0].mxu0
          %4634 = vdwg.mxu0
          %v4635 = vmax.f32 %v4630, 0.0
          %v4636 = vld [vmem:[%s61] sm:$0xf]
          %v4637 = vld [vmem:[%s61 + $0x4] sm:$0xf]
          %v4638 = vld [vmem:[%s61 + $0x8] sm:$0xf]
          %v4639 = vld [vmem:[%s61 + $0xc] sm:$0xf]
          %v4640 = vpack.c.bf16 %v4635, %v4635
          %v4641 = vld [vmem:[%s63] sm:$0x1]
          %v4643 = vlaneseq
          %v4644 = vshrl.u32 %v4643, 7
          %v4645 = vsub.s32 0, %v4644
          %v4646 = vrot.slane %v4641, %v4645
          %v4652 = vunpack.c.l.b16 %v4636
          %v4653 = vunpack.c.l.b16 %v4637
          %v4654 = vunpack.c.l.b16 %v4638
          %v4655 = vunpack.c.l.b16 %v4639
          %v4656 = vpack.c.b16 %v4653, %v4652
          %v4657 = vpack.c.b16 %v4655, %v4654
          %v4661 = vsel %vm1858, %v4640, 0
          %4663 = vmatprep.subr.bf16.mxu0 0
          %4664 = vmatpush1.bf16.msra.mxu0 %v4656
          %4665 = vmatprep.subr.bf16.mxu0 0
          %4666 = vmatpush1.bf16.msra.mxu0 %v4657
          %4667 = vmatprep.subr.bf16.mxu0 0
          %4668 = vmatpush1.bf16.msra.mxu0 0
          %4669 = vmatprep.subr.bf16.mxu0 0
          %4670 = vmatpush1.bf16.msra.mxu0 0
          %4671 = vmatprep.subr.bf16.mxu0 0
          %4672 = vmatpush1.bf16.msra.mxu0 0
          %4673 = vmatprep.subr.bf16.mxu0 0
          %4674 = vmatpush1.bf16.msra.mxu0 0
          %4675 = vmatprep.subr.bf16.mxu0 0
          %4676 = vmatpush1.bf16.msra.mxu0 0
          %4677 = vmatprep.subr.bf16.mxu0 0
          %4678 = vmatpush1.bf16.msra.mxu0 0
          %4679 = vmatprep.subr.bf16.mxu0 0
          %4680 = vmatpush1.bf16.msra.mxu0 0
          %4681 = vmatprep.subr.bf16.mxu0 0
          %4682 = vmatpush1.bf16.msra.mxu0 0
          %4683 = vmatprep.subr.bf16.mxu0 0
          %4684 = vmatpush1.bf16.msra.mxu0 0
          %4685 = vmatprep.subr.bf16.mxu0 0
          %4686 = vmatpush1.bf16.msra.mxu0 0
          %4687 = vmatprep.subr.bf16.mxu0 0
          %4688 = vmatpush1.bf16.msra.mxu0 0
          %4689 = vmatprep.subr.bf16.mxu0 0
          %4690 = vmatpush1.bf16.msra.mxu0 0
          %4691 = vmatprep.subr.bf16.mxu0 0
          %4692 = vmatpush1.bf16.msra.mxu0 0
          %4693 = vmatprep.subr.bf16.mxu0 0
          %4694 = vmatpush1.bf16.msra.mxu0 0
          %4695 = vmatprep.mubr.bf16.mxu0 0
          %4696 = vmatmul.mubr.bf16.gmra.mrb[0].mxu0 %v4661
          %v4697 = vpop.f32.mrb[0].mxu0
          %v4698 = vadd.f32 %v4646, %v4697
          %v4699 = vpop.f32.mrb[0].mxu0
          %v4700 = vpop.f32.mrb[0].mxu0
          %v4701 = vpop.f32.mrb[0].mxu0
          %4702 = vdwg.mxu0
          %vm4703 = vcmask 25600
          %4704 = vst.msk [vmem:[#allocation15] sm:$0x3] %vm4703, %v4698
        $region184: #{tpu_custom_call.1} parent=147 // pred_fallthru
          _
        // Predicated region
        $region185: #{tpu_custom_call.1} parent=147 // pred_check
          %p4705 = pneg %p900
        $region186: #{tpu_custom_call.1} parent=147 // pred_check_branch
          %4707 = sbr.rel (%p4705) target = $region188
        $region187: #{tpu_custom_call.1} parent=147 // pred_region
          %s4709 = ssub.s32 32, 32
          %4710 = vsyncadd [#allocation5], %s4709
          %s4711 = smul.addr %s87, 32
          %s4712 = scalar_lea.hbm %s65, %s4711
          %s4714 = sshll.u32 [#allocation15], 4
          %s4715 = int_to_ptr.vmem [resolvable:$true] %s4714
          %4717 = dma.vmem_to_hbm [thread:$0]  %s4715, 32, %s4712, [#allocation5]
        $region188: #{tpu_custom_call.1} parent=147 // pred_fallthru
          _
        // Predicated region
        $region189: #{tpu_custom_call.1} parent=147 // pred_check
          %p4718 = pneg %p900
        $region190: #{tpu_custom_call.1} parent=147 // pred_check_branch
          %4720 = sbr.rel (%p4718) target = $region192
        $region191: #{tpu_custom_call.1} parent=147 // pred_region
          %4721 = dma.done [#allocation5], 32
        $region192: #{tpu_custom_call.1} parent=147 // pred_fallthru
          _
      $region148: #{tpu_custom_call.1} parent=5 // pred_fallthru
        _
      %p4722 = scmp.le.s32.totalorder 2, %s78
      // Predicated region
      $region193: #{tpu_custom_call.1} parent=5 // pred_check
        %p4723 = pneg %p4722
      $region194: #{tpu_custom_call.1} parent=5 // pred_check_branch
        %4725 = sbr.rel (%p4723) target = $region196
      $region195: #{tpu_custom_call.1} parent=5 // pred_region
        %s4726 = ssub.s32 %s78, 2
      $region196: #{tpu_custom_call.1} parent=5 // pred_fallthru
        _
    $region6: #{tpu_custom_call.1} parent=1 // loop_footer
      %s82 = sadd.s32 1, %s78
    $region7: #{tpu_custom_call.1} parent=1 // loop_footer_branch
      %77 = sbr.rel target = $region3
    $region8: #{tpu_custom_call.1} parent=1 // loop_exit
      _
    %4727 = vsyncpa [#allocation4], 1
    %s4728 = scalar_lea.sflag [#allocation4], 1
    %4729 = vsyncpa %s4728, 1
    %4730 = vsyncpa [#allocation7], 1
    %4731 = vsyncpa [#allocation10], 1
    %4732 = vsyncpa [#allocation13], 1
    %s4733 = scalar_lea.sflag [#allocation13], 1
    %4734 = vsyncpa %s4733, 1
    %4735 = vsyncpa [#allocation5], 1
    %s4736 = scalar_lea.sflag [#allocation5], 1
    %4737 = vsyncpa %s4736, 1

</llo_original>
